<compile_context>
chip_gen: v5e
topology: v5e:2x2
jax: 0.10.0
libtpu: 0.0.40
codegen_flags: <defaults>
</compile_context>

<pallas_src>
import numpy as np
import jax
import jax.numpy as jnp
from jax import lax
from jax.experimental import pallas as pl
from jax.experimental.pallas import tpu as pltpu

K = 7          # conv kernel size (must be odd)
P = K // 2     # 'same' padding


def spatial_attention_kernel(x_ref, wt_ref, b_ref, o_ref, pooled_ref, im2col_ref):
    """Grid = (batch blocks, lane tiles); j (lane tile) is the inner axis.

    x_ref      : (Nb, C, D, HW)       f32  VMEM (full spatial extent, fetched once per n)
    wt_ref     : (K*2*HW, LW)         bf16 VMEM (Toeplitz columns of this lane tile only)
    b_ref      : (1,)                 f32  SMEM (conv bias)
    o_ref      : (Nb, C, D, LW)            VMEM (lane tile of the output)
    pooled_ref : (Nb, D + 2P, 2*HW)   bf16 VMEM scratch (depth-padded max|min maps)
    im2col_ref : (Nb*D, K*2*HW)       bf16 VMEM scratch (depth-tap im2col slab)
    """
    Nb, C, D, LW = o_ref.shape
    HW = x_ref.shape[-1]
    CH2 = 2 * HW

    j = pl.program_id(1)
    col0 = pl.multiple_of(j * LW, 128)           # lane offset of this output tile

    # ---- per-batch-block work: only at j == 0, carried in scratch across j ----
    @pl.when(j == 0)
    def _():
        x = x_ref[...]                           # (Nb, C, D, HW) f32
        mx = jnp.max(x, axis=1)                  # (Nb, D, HW) — conv in-channel 0
        mn = jnp.min(x, axis=1)                  # (Nb, D, HW) — conv in-channel 1

        # zero only the 2*P depth pad rows (interior is fully overwritten)
        pooled_ref[:, 0:P, :] = jnp.zeros((Nb, P, CH2), pooled_ref.dtype)
        pooled_ref[:, P + D:, :] = jnp.zeros((Nb, P, CH2), pooled_ref.dtype)
        # single bf16 cast; direct stores, no concatenate temporary
        pooled_ref[:, P:P + D, 0:HW] = mx.astype(pooled_ref.dtype)
        pooled_ref[:, P:P + D, HW:] = mn.astype(pooled_ref.dtype)

        # im2col over the K depth taps -> the whole 7x7x7 conv becomes a single
        # MXU contraction per lane tile.  Static Python loop: K is tiny and the
        # (non-8-aligned) depth shifts run once per batch block, not per tile.
        for kd in range(K):
            piece = pooled_ref[:, kd:kd + D, :]                     # (Nb, D, 2*HW)
            im2col_ref[:, kd * CH2:(kd + 1) * CH2] = piece.reshape(Nb * D, CH2)

    # ---- per lane tile: one matmul, sigmoid, gate, lane-dense store ----
    # (Nb*D, K*2*HW) @ (K*2*HW, LW) bf16 operands, f32 accumulation.
    acc = jnp.dot(im2col_ref[...], wt_ref[...],
                  preferred_element_type=jnp.float32)               # (Nb*D, LW)

    # sigmoid via EUP exp + approximate reciprocal (no VPU divide)
    z = acc + b_ref[0]
    att = pl.reciprocal(1.0 + jnp.exp(-z), approx=True)
    att = att.reshape(Nb, 1, D, LW)                                 # broadcast over C

    x_cols = x_ref[:, :, :, pl.ds(col0, LW)]                        # (Nb, C, D, LW)
    o_ref[...] = (x_cols * att).astype(o_ref.dtype)


def spatial_attention(x, weight, bias):
    """x: (N, C, D, H, W) f32; weight: (1, 2, K, K, K); bias: (1,)."""
    N, C, D, H, W = x.shape
    HW = H * W

    # Lane tile width: collapse the j axis entirely for small HW (fills the
    # 256-wide MXU on v6e/v7x and removes all per-tile redundancy); otherwise
    # tile by 256 (v6e/v7x MXU width) or 128 columns.
    if HW <= 512 or HW % 128 != 0:
        LW = HW
    elif HW % 256 == 0:
        LW = 256
    else:
        LW = 128
    num_j = HW // LW

    # Batch block: keep >= 2 grid steps along batch when possible (megacore),
    # cap the per-step input+output working set (~double-buffered) at ~8 MiB.
    Nb = 1
    if N >= 2:
        Nb = N // 2
        while Nb > 1 and (N % Nb != 0 or Nb * C * D * HW * 4 * 4 > 8 * 1024 * 1024):
            Nb -= 1

    # free, contiguous reshape — no padded HBM copy of x
    x2 = x.reshape(N, C, D, HW)

    # Host-side parameter re-layout (done once, like weight loading):
    # fused (kh, kw) Toeplitz per (kd, ci) with 'same' H/W zero padding baked in.
    #   wt[kd*2*HW + ci*HW + hi*W + wi, ho*W + wo] = weight[0, ci, kd, hi-ho+P, wi-wo+P]
    # (zero whenever the tap falls outside the 7x7 window / the image).
    w_np = np.asarray(jax.device_get(weight), dtype=np.float32)[0]   # (2, K, K, K)
    w2d = np.zeros((2, K, HW, HW), np.float32)
    ho = np.arange(H)
    wo = np.arange(W)
    for kh in range(K):
        hi = ho + kh - P
        mh = (hi >= 0) & (hi < H)
        for kw in range(K):
            wi = wo + kw - P
            mw = (wi >= 0) & (wi < W)
            rows = (hi[mh][:, None] * W + wi[mw][None, :]).ravel()
            cols = (ho[mh][:, None] * W + wo[mw][None, :]).ravel()
            w2d[:, :, rows, cols] = w_np[:, :, kh, kw][:, :, None]
    # (K*2*HW, HW), bf16 for the MXU (f32 accumulation in-kernel)
    wt = jnp.asarray(w2d.transpose(1, 0, 2, 3).reshape(K * 2 * HW, HW),
                     dtype=jnp.bfloat16)

    bias_f32 = jnp.asarray(bias, dtype=jnp.float32).reshape(1)

    out2 = pl.pallas_call(
        spatial_attention_kernel,
        out_shape=jax.ShapeDtypeStruct((N, C, D, HW), x.dtype),
        grid_spec=pltpu.PrefetchScalarGridSpec(
            num_scalar_prefetch=0,
            grid=(N // Nb, num_j),
            in_specs=[
                # full x per batch block; block index constant in j -> fetched once per n
                pl.BlockSpec((Nb, C, D, HW), lambda n, j: (n, 0, 0, 0)),
                # only this lane tile's Toeplitz columns are DMA'd / held in VMEM
                pl.BlockSpec((K * 2 * HW, LW), lambda n, j: (0, j)),
                pl.BlockSpec(memory_space=pltpu.MemorySpace.SMEM),   # bias scalar
            ],
            out_specs=pl.BlockSpec((Nb, C, D, LW), lambda n, j: (n, 0, 0, j)),
            scratch_shapes=[
                pltpu.VMEM((Nb, D + 2 * P, 2 * HW), jnp.bfloat16),   # padded pooled maps
                pltpu.VMEM((Nb * D, K * 2 * HW), jnp.bfloat16),      # im2col slab
            ],
        ),
        compiler_params=pltpu.CompilerParams(
            # batch axis parallel (megacore); j carries scratch -> arbitrary
            dimension_semantics=("parallel", "arbitrary"),
            vmem_limit_bytes=32 * 1024 * 1024,
        ),
    )(x2, wt, bias_f32)

    return out2.reshape(N, C, D, H, W)


def spatial_attention_ref(x, weight, bias):
    """Pure-JAX reference (mirrors the PyTorch forward), full f32 precision."""
    mx = jnp.max(x, axis=1, keepdims=True)
    mn = jnp.min(x, axis=1, keepdims=True)
    concat = jnp.concatenate([mx, mn], axis=1)                 # (N, 2, D, H, W)
    att = lax.conv_general_dilated(
        concat, weight, window_strides=(1, 1, 1),
        padding=[(P, P)] * 3,
        dimension_numbers=('NCDHW', 'OIDHW', 'NCDHW'),
        precision=lax.Precision.HIGHEST)
    att = 1.0 / (1.0 + jnp.exp(-(att + bias[0])))
    return x * att


if __name__ == "__main__":
    key = jax.random.PRNGKey(0)
    kx, kw_, kb = jax.random.split(key, 3)

    # small shapes consistent with the module: N=2, C=4, D=8, H=W=16
    N, C, D, H, W = 2, 4, 8, 16, 16
    x = jax.random.normal(kx, (N, C, D, H, W), dtype=jnp.float32)

    # deterministic synthetic Conv3d(2, 1, 7) parameters
    weight = 0.05 * jax.random.normal(kw_, (1, 2, K, K, K), dtype=jnp.float32)
    bias = 0.02 * jax.random.normal(kb, (1,), dtype=jnp.float32)

    out = jax.block_until_ready(spatial_attention(x, weight, bias))
    ref = jax.block_until_ready(spatial_attention_ref(x, weight, bias))

    # Tolerance covers bf16 MXU operands (f32 accumulation) and the
    # approximate reciprocal; all error is squashed through the sigmoid.
    np.testing.assert_allclose(np.asarray(out), np.asarray(ref),
                               rtol=2e-2, atol=2e-2)

    print("KERNEL_OK")
</pallas_src>

<mosaic_0001>
module attributes {stable_mosaic.version = 11 : i64} {
  func.func @spatial_attention_kernel(%arg0: i32, %arg1: i32, %arg2: memref<1x4x8x256xf32, #tpu.memory_space<vmem>>, %arg3: memref<3584x256xbf16, #tpu.memory_space<vmem>>, %arg4: memref<1xf32, #tpu.memory_space<smem>>, %arg5: memref<1x4x8x256xf32, #tpu.memory_space<vmem>>, %arg6: memref<1x14x512xbf16, #tpu.memory_space<vmem>>, %arg7: memref<8x3584xbf16, #tpu.memory_space<vmem>>) attributes {dimension_semantics = [#tpu.dimension_semantics<parallel>, #tpu.dimension_semantics<arbitrary>], iteration_bounds = array<i64: 2, 1>, scalar_prefetch = 0 : i64, scratch_operands = 2 : i64, tpu.core_type = #tpu.core_type<tc>, window_params = [{transform_indices = @transform_0, window_bounds = array<i64: 1, 4, 8, 256>}, {transform_indices = @transform_1, window_bounds = array<i64: 3584, 256>}, {transform_indices = @transform_2, window_bounds = array<i64: 1>}, {transform_indices = @transform_3, window_bounds = array<i64: 1, 4, 8, 256>}]} {
    %c256_i32 = arith.constant 256 : i32
    %0 = arith.muli %arg1, %c256_i32 : i32
    %1 = tpu.assume_multiple %0, 128 : i32
    %c0_i32 = arith.constant 0 : i32
    %2 = arith.cmpi eq, %arg1, %c0_i32 : i32
    %3 = arith.extui %2 : i1 to i32
    %c0_i32_0 = arith.constant 0 : i32
    %4 = arith.cmpi ne, %3, %c0_i32_0 : i32
    scf.if %4 {
      %c0_14 = arith.constant 0 : index
      %c0_15 = arith.constant 0 : index
      %c0_16 = arith.constant 0 : index
      %c0_17 = arith.constant 0 : index
      %23 = vector.load %arg2[%c0_14, %c0_15, %c0_16, %c0_17] : memref<1x4x8x256xf32, #tpu.memory_space<vmem>>, vector<1x4x8x256xf32>
      %cst_18 = arith.constant dense<0xFF800000> : vector<1x8x256xf32>
      %24 = vector.multi_reduction <maximumf>, %23, %cst_18 [1] : vector<1x4x8x256xf32> to vector<1x8x256xf32>
      %cst_19 = arith.constant dense<0x7F800000> : vector<1x8x256xf32>
      %25 = vector.multi_reduction <minimumf>, %23, %cst_19 [1] : vector<1x4x8x256xf32> to vector<1x8x256xf32>
      %cst_20 = arith.constant 0.000000e+00 : bf16
      %26 = vector.broadcast %cst_20 : bf16 to vector<1x3x512xbf16>
      %c0_21 = arith.constant 0 : index
      %c0_22 = arith.constant 0 : index
      %c0_23 = arith.constant 0 : index
      %27 = vector.load %arg6[%c0_21, %c0_22, %c0_23] : memref<1x14x512xbf16, #tpu.memory_space<vmem>>, vector<1x3x512xbf16>
      tpu.vector_store %arg6[%c0_21, %c0_22, %c0_23], %26 {strides = array<i32>} : memref<1x14x512xbf16, #tpu.memory_space<vmem>>, vector<1x3x512xbf16>,
      %cst_24 = arith.constant 0.000000e+00 : bf16
      %28 = vector.broadcast %cst_24 : bf16 to vector<1x3x512xbf16>
      %c0_25 = arith.constant 0 : index
      %c11 = arith.constant 11 : index
      %c0_26 = arith.constant 0 : index
      %29 = vector.load %arg6[%c0_25, %c11, %c0_26] : memref<1x14x512xbf16, #tpu.memory_space<vmem>>, vector<1x3x512xbf16>
      tpu.vector_store %arg6[%c0_25, %c11, %c0_26], %28 {strides = array<i32>} : memref<1x14x512xbf16, #tpu.memory_space<vmem>>, vector<1x3x512xbf16>,
      %30 = arith.truncf %24 : vector<1x8x256xf32> to vector<1x8x256xbf16>
      %c0_27 = arith.constant 0 : index
      %c3 = arith.constant 3 : index
      %c0_28 = arith.constant 0 : index
      %31 = vector.load %arg6[%c0_27, %c3, %c0_28] : memref<1x14x512xbf16, #tpu.memory_space<vmem>>, vector<1x8x256xbf16>
      tpu.vector_store %arg6[%c0_27, %c3, %c0_28], %30 {strides = array<i32>} : memref<1x14x512xbf16, #tpu.memory_space<vmem>>, vector<1x8x256xbf16>,
      %32 = arith.truncf %25 : vector<1x8x256xf32> to vector<1x8x256xbf16>
      %c0_29 = arith.constant 0 : index
      %c3_30 = arith.constant 3 : index
      %c256 = arith.constant 256 : index
      %33 = vector.load %arg6[%c0_29, %c3_30, %c256] : memref<1x14x512xbf16, #tpu.memory_space<vmem>>, vector<1x8x256xbf16>
      tpu.vector_store %arg6[%c0_29, %c3_30, %c256], %32 {strides = array<i32>} : memref<1x14x512xbf16, #tpu.memory_space<vmem>>, vector<1x8x256xbf16>,
      %c0_31 = arith.constant 0 : index
      %c0_32 = arith.constant 0 : index
      %c0_33 = arith.constant 0 : index
      %34 = vector.load %arg6[%c0_31, %c0_32, %c0_33] : memref<1x14x512xbf16, #tpu.memory_space<vmem>>, vector<1x8x512xbf16>
      %35 = vector.shape_cast %34 : vector<1x8x512xbf16> to vector<8x512xbf16>
      %c0_34 = arith.constant 0 : index
      %c0_35 = arith.constant 0 : index
      %36 = vector.load %arg7[%c0_34, %c0_35] : memref<8x3584xbf16, #tpu.memory_space<vmem>>, vector<8x512xbf16>
      tpu.vector_store %arg7[%c0_34, %c0_35], %35 {strides = array<i32>} : memref<8x3584xbf16, #tpu.memory_space<vmem>>, vector<8x512xbf16>,
      %c0_36 = arith.constant 0 : index
      %c1 = arith.constant 1 : index
      %c0_37 = arith.constant 0 : index
      %37 = vector.load %arg6[%c0_36, %c1, %c0_37] : memref<1x14x512xbf16, #tpu.memory_space<vmem>>, vector<1x8x512xbf16>
      %38 = vector.shape_cast %37 : vector<1x8x512xbf16> to vector<8x512xbf16>
      %c0_38 = arith.constant 0 : index
      %c512 = arith.constant 512 : index
      %39 = vector.load %arg7[%c0_38, %c512] : memref<8x3584xbf16, #tpu.memory_space<vmem>>, vector<8x512xbf16>
      tpu.vector_store %arg7[%c0_38, %c512], %38 {strides = array<i32>} : memref<8x3584xbf16, #tpu.memory_space<vmem>>, vector<8x512xbf16>,
      %c0_39 = arith.constant 0 : index
      %c2 = arith.constant 2 : index
      %c0_40 = arith.constant 0 : index
      %40 = vector.load %arg6[%c0_39, %c2, %c0_40] : memref<1x14x512xbf16, #tpu.memory_space<vmem>>, vector<1x8x512xbf16>
      %41 = vector.shape_cast %40 : vector<1x8x512xbf16> to vector<8x512xbf16>
      %c0_41 = arith.constant 0 : index
      %c1024 = arith.constant 1024 : index
      %42 = vector.load %arg7[%c0_41, %c1024] : memref<8x3584xbf16, #tpu.memory_space<vmem>>, vector<8x512xbf16>
      tpu.vector_store %arg7[%c0_41, %c1024], %41 {strides = array<i32>} : memref<8x3584xbf16, #tpu.memory_space<vmem>>, vector<8x512xbf16>,
      %c0_42 = arith.constant 0 : index
      %c3_43 = arith.constant 3 : index
      %c0_44 = arith.constant 0 : index
      %43 = vector.load %arg6[%c0_42, %c3_43, %c0_44] : memref<1x14x512xbf16, #tpu.memory_space<vmem>>, vector<1x8x512xbf16>
      %44 = vector.shape_cast %43 : vector<1x8x512xbf16> to vector<8x512xbf16>
      %c0_45 = arith.constant 0 : index
      %c1536 = arith.constant 1536 : index
      %45 = vector.load %arg7[%c0_45, %c1536] : memref<8x3584xbf16, #tpu.memory_space<vmem>>, vector<8x512xbf16>
      tpu.vector_store %arg7[%c0_45, %c1536], %44 {strides = array<i32>} : memref<8x3584xbf16, #tpu.memory_space<vmem>>, vector<8x512xbf16>,
      %c0_46 = arith.constant 0 : index
      %c4 = arith.constant 4 : index
      %c0_47 = arith.constant 0 : index
      %46 = vector.load %arg6[%c0_46, %c4, %c0_47] : memref<1x14x512xbf16, #tpu.memory_space<vmem>>, vector<1x8x512xbf16>
      %47 = vector.shape_cast %46 : vector<1x8x512xbf16> to vector<8x512xbf16>
      %c0_48 = arith.constant 0 : index
      %c2048 = arith.constant 2048 : index
      %48 = vector.load %arg7[%c0_48, %c2048] : memref<8x3584xbf16, #tpu.memory_space<vmem>>, vector<8x512xbf16>
      tpu.vector_store %arg7[%c0_48, %c2048], %47 {strides = array<i32>} : memref<8x3584xbf16, #tpu.memory_space<vmem>>, vector<8x512xbf16>,
      %c0_49 = arith.constant 0 : index
      %c5 = arith.constant 5 : index
      %c0_50 = arith.constant 0 : index
      %49 = vector.load %arg6[%c0_49, %c5, %c0_50] : memref<1x14x512xbf16, #tpu.memory_space<vmem>>, vector<1x8x512xbf16>
      %50 = vector.shape_cast %49 : vector<1x8x512xbf16> to vector<8x512xbf16>
      %c0_51 = arith.constant 0 : index
      %c2560 = arith.constant 2560 : index
      %51 = vector.load %arg7[%c0_51, %c2560] : memref<8x3584xbf16, #tpu.memory_space<vmem>>, vector<8x512xbf16>
      tpu.vector_store %arg7[%c0_51, %c2560], %50 {strides = array<i32>} : memref<8x3584xbf16, #tpu.memory_space<vmem>>, vector<8x512xbf16>,
      %c0_52 = arith.constant 0 : index
      %c6 = arith.constant 6 : index
      %c0_53 = arith.constant 0 : index
      %52 = vector.load %arg6[%c0_52, %c6, %c0_53] : memref<1x14x512xbf16, #tpu.memory_space<vmem>>, vector<1x8x512xbf16>
      %53 = vector.shape_cast %52 : vector<1x8x512xbf16> to vector<8x512xbf16>
      %c0_54 = arith.constant 0 : index
      %c3072 = arith.constant 3072 : index
      %54 = vector.load %arg7[%c0_54, %c3072] : memref<8x3584xbf16, #tpu.memory_space<vmem>>, vector<8x512xbf16>
      tpu.vector_store %arg7[%c0_54, %c3072], %53 {strides = array<i32>} : memref<8x3584xbf16, #tpu.memory_space<vmem>>, vector<8x512xbf16>,
    } else {
    }
    %c0 = arith.constant 0 : index
    %c0_1 = arith.constant 0 : index
    %5 = vector.load %arg7[%c0, %c0_1] : memref<8x3584xbf16, #tpu.memory_space<vmem>>, vector<8x3584xbf16>
    %c0_2 = arith.constant 0 : index
    %c0_3 = arith.constant 0 : index
    %6 = vector.load %arg3[%c0_2, %c0_3] : memref<3584x256xbf16, #tpu.memory_space<vmem>>, vector<3584x256xbf16>
    %cst = arith.constant dense<0.000000e+00> : vector<8x256xf32>
    %7 = tpu.matmul %5, %6, %cst {dimension_numbers = #tpu.dot_dimension_numbers<[1], [0], [0], [1], [0, 0, 1, 1], [], []>} : vector<8x3584xbf16>, vector<3584x256xbf16>, vector<8x256xf32> -> vector<8x256xf32>
    %c0_4 = arith.constant 0 : index
    %8 = memref.load %arg4[%c0_4] : memref<1xf32, #tpu.memory_space<smem>>
    %9 = vector.broadcast %8 : f32 to vector<8x256xf32>
    %10 = arith.addf %7, %9 : vector<8x256xf32>
    %cst_5 = arith.constant 0.000000e+00 : f32
    %11 = vector.broadcast %cst_5 : f32 to vector<8x256xf32>
    %12 = arith.subf %11, %10 : vector<8x256xf32>
    %13 = math.exp %12 : vector<8x256xf32>
    %cst_6 = arith.constant 1.000000e+00 : f32
    %14 = vector.broadcast %cst_6 : f32 to vector<8x256xf32>
    %15 = arith.addf %14, %13 : vector<8x256xf32>
    %16 = tpu.reciprocal %15 {approx = true} : vector<8x256xf32> -> vector<8x256xf32>
    %17 = vector.shape_cast %16 : vector<8x256xf32> to vector<1x1x8x256xf32>
    %c0_7 = arith.constant 0 : index
    %c0_8 = arith.constant 0 : index
    %c0_9 = arith.constant 0 : index
    %18 = arith.index_cast %1 : i32 to index
    %19 = vector.load %arg2[%c0_7, %c0_8, %c0_9, %18] : memref<1x4x8x256xf32, #tpu.memory_space<vmem>>, vector<1x4x8x256xf32>
    %20 = vector.broadcast %17 : vector<1x1x8x256xf32> to vector<1x4x8x256xf32>
    %21 = arith.mulf %19, %20 : vector<1x4x8x256xf32>
    %c0_10 = arith.constant 0 : index
    %c0_11 = arith.constant 0 : index
    %c0_12 = arith.constant 0 : index
    %c0_13 = arith.constant 0 : index
    %22 = vector.load %arg5[%c0_10, %c0_11, %c0_12, %c0_13] : memref<1x4x8x256xf32, #tpu.memory_space<vmem>>, vector<1x4x8x256xf32>
    tpu.vector_store %arg5[%c0_10, %c0_11, %c0_12, %c0_13], %21 {strides = array<i32>} : memref<1x4x8x256xf32, #tpu.memory_space<vmem>>, vector<1x4x8x256xf32>,
    return
  }
  func.func @transform_0(%arg0: i32, %arg1: i32) -> (i32, i32, i32, i32) {
    %c0_i32 = arith.constant 0 : i32
    %c0_i32_0 = arith.constant 0 : i32
    %c0_i32_1 = arith.constant 0 : i32
    %c0_i32_2 = arith.constant 0 : i32
    return %arg0, %c0_i32, %c0_i32_0, %c0_i32_1 : i32, i32, i32, i32
  }
  func.func @transform_1(%arg0: i32, %arg1: i32) -> (i32, i32) {
    %c0_i32 = arith.constant 0 : i32
    %c0_i32_0 = arith.constant 0 : i32
    return %c0_i32, %arg1 : i32, i32
  }
  func.func @transform_2(%arg0: i32, %arg1: i32) -> i32 {
    %c0_i32 = arith.constant 0 : i32
    %c0_i32_0 = arith.constant 0 : i32
    return %c0_i32 : i32
  }
  func.func @transform_3(%arg0: i32, %arg1: i32) -> (i32, i32, i32, i32) {
    %c0_i32 = arith.constant 0 : i32
    %c0_i32_0 = arith.constant 0 : i32
    %c0_i32_1 = arith.constant 0 : i32
    return %arg0, %c0_i32, %c0_i32_0, %arg1 : i32, i32, i32, i32
  }
}

</mosaic_0001>

<llo_original>
// kernel: tpu_custom_call.1
$region0: #{tpu_custom_call.1}
  #allocation0 [shape = 'u32[]', space=smem, size = 0x4, offset = 0x4, fixed_abs, tag = 'smem constant byte address 0x4 - core index']
  #allocation1 [shape = 'u32[72,128]{1,0:T(1,128)}', space=vmem, size = 0x9000, scoped, tag = 'internal scratch']
  #allocation2 [shape = 'bf16[1,14,512]{2,1,0:T(8,128)(2,1)}', space=vmem, size = 0x4000, scoped, tag = 'scratch operand']
  #allocation3 [shape = 'bf16[8,3584]{1,0:T(8,128)(2,1)}', space=vmem, size = 0xe000, scoped, tag = 'scratch operand']
  #allocation4 [shape = 'f32[1]{0:T(128)S(6)}', space=smem, size = 0x200, scoped, tag = 'scoped memory for tpu_custom_call.1']
  %s0 = inlined_call_operand.hbm [shape: f32[2,4,8,256], index: 0, kind: input, shape index: {}]
  %s1 = inlined_call_operand.hbm [shape: bf16[3584,256], index: 1, kind: input, shape index: {}]
  %s2 = inlined_call_operand.<no memory space> [shape: f32[1], index: 2, kind: input, shape index: {}]
  %s3 = inlined_call_operand.hbm [shape: f32[2,4,8,256], index: 3, kind: output, shape index: {}]
  %s4 = sld [smem:[#allocation0]]
  $region57: #{tpu_custom_call.1} parent=0
    _
  %s6 = ssub.s32 1, %s4
  %s7 = scalar_select 0, %s6, %s4
  %8 = sst [smem:[#allocation4]] %s2
  $region1: #{tpu_custom_call.1} parent=0
    #allocation5 [shape = 'u8[65536]{0}', space=vmem, size = 0x10000, scoped, tag = 'input window, operand 0']
    #allocation6 [shape = 's32[2]{0}', space=sflag, size = 0x8, scoped, tag = 'scoped memory for tpu_custom_call.1']
    #allocation7 [shape = 's32[2]{0}', space=sflag, size = 0x8, scoped, tag = 'scoped memory for tpu_custom_call.1']
    #allocation8 [shape = 'u8[1835008]{0}', space=vmem, size = 0x1c0000, scoped, tag = 'input window, operand 1, single buffered']
    #allocation9 [shape = 's32[1]{0}', space=sflag, size = 0x4, scoped, tag = 'scoped memory for tpu_custom_call.1']
    #allocation10 [shape = 'u8[65536]{0}', space=vmem, size = 0x10000, scoped, tag = 'output window, operand 0']
    %9 = vsyncpa [#allocation6], 0
    %s10 = scalar_lea.sflag [#allocation6], 1
    %11 = vsyncpa %s10, 0
    %12 = vsyncpa [#allocation9], 0
    %13 = vsyncpa [#allocation7], 0
    %s14 = scalar_lea.sflag [#allocation7], 1
    %15 = vsyncpa %s14, 0
    loop: start=0, step=1, limit=4
    $region2: #{tpu_custom_call.1} parent=1 // loop_pre_header
      _
    $region3: #{tpu_custom_call.1} parent=1 // loop_header
      %s17 = sphi 0, %s21
      %p18 = scmp.ge.s32.totalorder %s17, 4
      %s24 = sphi 0, %s36
      %s25 = sphi 0, %s32
      %s26 = sphi 0, %s24
      %s27 = sphi 0, %s25
      %s28 = sphi 0, %s26
      %s29 = sphi 0, %s27
      %s39 = sphi 0, %s41
      %s42 = sphi 0, %s39
      %s43 = sphi 0, %s42
      %s59 = sphi 0, %s43
      %s65 = sphi 0, %s67
      %s68 = sphi 0, %s65
      %s69 = sphi 0, %s68
      %s85 = sphi 0, %s69
      %s89 = sphi 0, %s89
      %s91 = sphi 0, %s89
      %s92 = sphi 0, %s91
      %s106 = sphi 0, %s92
      %s114 = sphi 0, %s116
      %s117 = sphi 0, %s114
      %s118 = sphi 0, %s117
      %s134 = sphi 0, %s118
    $region4: #{tpu_custom_call.1} parent=1 // loop_header_branch
      %20 = sbr.rel (%p18) target = $region8
    $region5: #{tpu_custom_call.1} parent=1 // loop_body
      %s22 = ssub.s32 %s17, 1
      %s23 = ssub.s32 %s17, 2
      %s30 = sadd.s32 1, %s25
      %p31 = scmp.ge.s32.totalorder %s30, 1
      %s32 = scalar_select %p31, 0, %s30
      %s33 = sadd.s32 1, %s24
      %s34 = scalar_select %p31, %s33, %s24
      %p35 = scmp.ge.s32.totalorder %s34, 2
      %s36 = scalar_select %p35, 0, %s34
      %s37 = ssub.s32 %s24, %s36
      %p38 = scmp.eq.s32.totalorder %s37, 0
      %s40 = sadd.s32 %s39, 1
      %s41 = scalar_select %p38, %s39, %s40
      %p44 = pneg %p38
      %p45 = scmp.eq.s32.totalorder %s17, 1
      %p46 = por %p44, %p45
      %p47 = scmp.ne.s32.totalorder %s39, %s42
      %p48 = scmp.eq.s32.totalorder %s17, 0
      %p49 = por %p47, %p48
      %p50 = scmp.ne.s32.totalorder %s39, %s42
      %p51 = scmp.eq.s32.totalorder %s22, 1
      %p52 = por %p50, %p51
      %p53 = scmp.ne.s32.totalorder %s42, %s43
      %p54 = scmp.eq.s32.totalorder %s22, 0
      %p55 = por %p53, %p54
      %p56 = scmp.ne.s32.totalorder %s42, %s43
      %p57 = scmp.eq.s32.totalorder %s23, 1
      %p58 = por %p56, %p57
      %p60 = scmp.ne.s32.totalorder %s43, %s59
      %p61 = scmp.eq.s32.totalorder %s23, 0
      %p62 = por %p60, %p61
      %s63 = ssub.s32 %s25, %s32
      %p64 = scmp.eq.s32.totalorder %s63, 0
      %s66 = sadd.s32 %s65, 1
      %s67 = scalar_select %p64, %s65, %s66
      %p70 = pneg %p64
      %p71 = scmp.eq.s32.totalorder %s17, 1
      %p72 = por %p70, %p71
      %p73 = scmp.ne.s32.totalorder %s65, %s68
      %p74 = scmp.eq.s32.totalorder %s17, 0
      %p75 = por %p73, %p74
      %p76 = scmp.ne.s32.totalorder %s65, %s68
      %p77 = scmp.eq.s32.totalorder %s22, 1
      %p78 = por %p76, %p77
      %p79 = scmp.ne.s32.totalorder %s68, %s69
      %p80 = scmp.eq.s32.totalorder %s22, 0
      %p81 = por %p79, %p80
      %p82 = scmp.ne.s32.totalorder %s68, %s69
      %p83 = scmp.eq.s32.totalorder %s23, 1
      %p84 = por %p82, %p83
      %p86 = scmp.ne.s32.totalorder %s69, %s85
      %p87 = scmp.eq.s32.totalorder %s23, 0
      %p88 = por %p86, %p87
      %s90 = sadd.s32 %s89, 1
      %p93 = scmp.eq.s32.totalorder %s17, 1
      %p94 = scmp.ne.s32.totalorder %s89, %s91
      %p95 = scmp.eq.s32.totalorder %s17, 0
      %p96 = por %p94, %p95
      %p97 = scmp.ne.s32.totalorder %s89, %s91
      %p98 = scmp.eq.s32.totalorder %s22, 1
      %p99 = por %p97, %p98
      %p100 = scmp.ne.s32.totalorder %s91, %s92
      %p101 = scmp.eq.s32.totalorder %s22, 0
      %p102 = por %p100, %p101
      %p103 = scmp.ne.s32.totalorder %s91, %s92
      %p104 = scmp.eq.s32.totalorder %s23, 1
      %p105 = por %p103, %p104
      %p107 = scmp.ne.s32.totalorder %s92, %s106
      %p108 = scmp.eq.s32.totalorder %s23, 0
      %p109 = por %p107, %p108
      %s110 = ssub.s32 %s24, %s36
      %s111 = ssub.s32 %s25, %s32
      %s112 = sor.u32 %s110, %s111
      %p113 = scmp.eq.s32.totalorder %s112, 0
      %s115 = sadd.s32 %s114, 1
      %s116 = scalar_select %p113, %s114, %s115
      %p119 = pneg %p113
      %p120 = scmp.eq.s32.totalorder %s17, 1
      %p121 = por %p119, %p120
      %p122 = scmp.ne.s32.totalorder %s114, %s117
      %p123 = scmp.eq.s32.totalorder %s17, 0
      %p124 = por %p122, %p123
      %p125 = scmp.ne.s32.totalorder %s114, %s117
      %p126 = scmp.eq.s32.totalorder %s22, 1
      %p127 = por %p125, %p126
      %p128 = scmp.ne.s32.totalorder %s117, %s118
      %p129 = scmp.eq.s32.totalorder %s22, 0
      %p130 = por %p128, %p129
      %p131 = scmp.ne.s32.totalorder %s117, %s118
      %p132 = scmp.eq.s32.totalorder %s23, 1
      %p133 = por %p131, %p132
      %p135 = scmp.ne.s32.totalorder %s118, %s134
      %p136 = scmp.eq.s32.totalorder %s23, 0
      %p137 = por %p135, %p136
      %p138 = scmp.le.s32.totalorder 1, %s17
      %p139 = scmp.lt.s32.totalorder %s17, 3
      %p140 = pnand %p138, %p139
      %p141 = pneg %p140
      // Predicated region
      $region9: #{tpu_custom_call.1} parent=5 // pred_check
        _
      $region10: #{tpu_custom_call.1} parent=5 // pred_check_branch
        %143 = sbr.rel (%p140) target = $region12
      $region11: #{tpu_custom_call.1} parent=5 // pred_region
        %s144 = ssub.s32 %s17, 1
        // Predicated region
        $region13: #{tpu_custom_call.1} parent=11 // pred_check
          %p145 = pneg %p81
        $region14: #{tpu_custom_call.1} parent=11 // pred_check_branch
          %147 = sbr.rel (%p145) target = $region16
        $region15: #{tpu_custom_call.1} parent=11 // pred_region
          %s148 = smul.u32 2, %s27
          %150 = vsyncadd [#allocation9], 0
          %s151 = smul.addr %s148, 4
          %s152 = scalar_lea.hbm %s1, %s151
          %s153 = sshll.u32 %s152, 4
          %s154 = int_to_ptr.hbm [resolvable:$true] %s153
          %s155 = sshll.u32 [#allocation8], 4
          %s156 = int_to_ptr.vmem [resolvable:$true] %s155
          %161 = dma.hbm_to_vmem [thread:$0]  %s154, 57344, %s156, [#allocation9], 128, 128, 8
        $region16: #{tpu_custom_call.1} parent=11 // pred_fallthru
          _
        // Predicated region
        $region17: #{tpu_custom_call.1} parent=11 // pred_check
          %p162 = pneg %p102
        $region18: #{tpu_custom_call.1} parent=11 // pred_check_branch
          %164 = sbr.rel (%p162) target = $region20
        $region19: #{tpu_custom_call.1} parent=11 // pred_region
          _
        $region20: #{tpu_custom_call.1} parent=11 // pred_fallthru
          _
      $region12: #{tpu_custom_call.1} parent=5 // pred_fallthru
        _
      %p165 = scmp.lt.s32.totalorder %s17, 2
      // Predicated region
      $region21: #{tpu_custom_call.1} parent=5 // pred_check
        %p166 = pneg %p165
      $region22: #{tpu_custom_call.1} parent=5 // pred_check_branch
        %168 = sbr.rel (%p166) target = $region24
      $region23: #{tpu_custom_call.1} parent=5 // pred_region
        // Predicated region
        $region25: #{tpu_custom_call.1} parent=23 // pred_check
          %p169 = pneg %p49
        $region26: #{tpu_custom_call.1} parent=23 // pred_check_branch
          %171 = sbr.rel (%p169) target = $region28
        $region27: #{tpu_custom_call.1} parent=23 // pred_region
          %s172 = sand.u32 %s39, 1
          %s173 = scalar_lea.sflag [#allocation6], %s172
          %s174 = sand.u32 %s39, 1
          %s175 = smul.addr %s174, 64
          %s176 = scalar_lea.vmem [#allocation5], %s175
          %178 = vsyncadd %s173, 0
          %s179 = smul.addr %s24, 8
          %s180 = smul.addr %s179, 8
          %s181 = scalar_lea.hbm %s0, %s180
          %s182 = sshll.u32 %s181, 4
          %s183 = int_to_ptr.hbm [resolvable:$true] %s182
          %s184 = sshll.u32 %s176, 4
          %s185 = int_to_ptr.vmem [resolvable:$true] %s184
          %190 = dma.hbm_to_vmem [thread:$0]  %s183, 1024, %s185, %s173, 256, 256, 16
        $region28: #{tpu_custom_call.1} parent=23 // pred_fallthru
          _
      $region24: #{tpu_custom_call.1} parent=5 // pred_fallthru
        _
      %p191 = scmp.le.s32.totalorder 1, %s17
      %p192 = scmp.lt.s32.totalorder %s17, 3
      %p193 = pnand %p191, %p192
      %p194 = pneg %p193
      // Predicated region
      $region29: #{tpu_custom_call.1} parent=5 // pred_check
        _
      $region30: #{tpu_custom_call.1} parent=5 // pred_check_branch
        %196 = sbr.rel (%p193) target = $region32
      $region31: #{tpu_custom_call.1} parent=5 // pred_region
        %s197 = ssub.s32 %s17, 1
        %s198 = sand.u32 %s42, 1
        %s199 = scalar_lea.sflag [#allocation6], %s198
        %s200 = sand.u32 %s42, 1
        %s201 = smul.addr %s200, 64
        %s202 = scalar_lea.vmem [#allocation5], %s201
        // Predicated region
        $region33: #{tpu_custom_call.1} parent=31 // pred_check
          %p203 = pneg %p55
        $region34: #{tpu_custom_call.1} parent=31 // pred_check_branch
          %205 = sbr.rel (%p203) target = $region36
        $region35: #{tpu_custom_call.1} parent=31 // pred_region
          %207 = dma.done %s199, 1024
        $region36: #{tpu_custom_call.1} parent=31 // pred_fallthru
          _
        // Predicated region
        $region37: #{tpu_custom_call.1} parent=31 // pred_check
          %p208 = pneg %p81
        $region38: #{tpu_custom_call.1} parent=31 // pred_check_branch
          %210 = sbr.rel (%p208) target = $region40
        $region39: #{tpu_custom_call.1} parent=31 // pred_region
          %212 = dma.done [#allocation9], 57344
        $region40: #{tpu_custom_call.1} parent=31 // pred_fallthru
          _
        %s213 = sand.u32 %s42, 1
        %s214 = scalar_lea.sflag [#allocation6], %s213
        %s215 = sand.u32 %s42, 1
        %s216 = smul.addr %s215, 64
        %s217 = scalar_lea.vmem [#allocation5], %s216
        %p218 = pneg %p55
        %p219 = pneg %p52
        %p220 = pneg %p81
        %p221 = pneg %p78
        %p222 = pneg %p102
        %p223 = pneg %p99
        %p224 = pneg %p130
        %p225 = pneg %p127
        %s226 = sand.u32 %s117, 1
        %s227 = scalar_lea.sflag [#allocation7], %s226
        %s228 = sand.u32 %s117, 1
        %s229 = smul.addr %s228, 64
        %s230 = scalar_lea.vmem [#allocation10], %s229
        %s231 = smul.u32 2, %s27
        %s232 = smul.u32 2, %s27
        %s234 = smul.u32 %s27, 256
        %p235 = scmp.eq.s32.totalorder %s27, 0
        // Predicated region
        $region41: #{tpu_custom_call.1} parent=31 // pred_check
          %p236 = pneg %p235
        $region42: #{tpu_custom_call.1} parent=31 // pred_check_branch
          %238 = sbr.rel (%p236) target = $region44
        $region43: #{tpu_custom_call.1} parent=31 // pred_region
          %v239 = vld [vmem:[%s202] sm:$0xff]
          %v240 = vld [vmem:[%s202 + $0x8] sm:$0xff]
          %v241 = vld [vmem:[%s202 + $0x10] sm:$0xff]
          %v242 = vld [vmem:[%s202 + $0x18] sm:$0xff]
          %v243 = vld [vmem:[%s202 + $0x20] sm:$0xff]
          %v244 = vld [vmem:[%s202 + $0x28] sm:$0xff]
          %v245 = vld [vmem:[%s202 + $0x30] sm:$0xff]
          %v246 = vld [vmem:[%s202 + $0x38] sm:$0xff]
          %v247 = vmax.f32 %v239, %v243
          %v248 = vmax.f32 %v241, %v245
          %v249 = vmax.f32 %v247, %v248
          %v250 = vmax.f32 %v240, %v244
          %v251 = vmax.f32 %v242, %v246
          %v252 = vmax.f32 %v250, %v251
          %v253 = vmin.f32 %v239, %v243
          %v254 = vmin.f32 %v241, %v245
          %v255 = vmin.f32 %v253, %v254
          %v256 = vmin.f32 %v240, %v244
          %v257 = vmin.f32 %v242, %v246
          %v258 = vmin.f32 %v256, %v257
          %vm259 = vcmask 1041408
          %vm260 = vsmask.f32 1280
          %vm261 = vmand %vm259, %vm260
          %vm262 = vcmask 1045508
          %vm263 = vsmask.f32 5376
          %vm264 = vmand %vm262, %vm263
          %vm265 = vmor %vm264, %vm261
          %v266 = vld [vmem:[#allocation2] sm:$0x33]
          %v267 = vsel %vm265, 0, %v266
          %268 = vst [vmem:[#allocation2] sm:$0x33] %v267
          %v269 = vld [vmem:[#allocation2 + $0x8] sm:$0x33]
          %v270 = vsel %vm265, 0, %v269
          %271 = vst [vmem:[#allocation2 + $0x8] sm:$0x33] %v270
          %vm272 = vcmask 1042433
          %vm273 = vsmask.f32 7942
          %vm274 = vmand %vm272, %vm273
          %vm275 = vcmask 1046533
          %vm276 = vsmask.f32 7958
          %vm277 = vmand %vm275, %vm276
          %vm278 = vmor %vm277, %vm274
          %v279 = vld [vmem:[#allocation2 + $0x10] sm:$0x66]
          %v280 = vsel %vm278, 0, %v279
          %281 = vst [vmem:[#allocation2 + $0x10] sm:$0x66] %v280
          %v282 = vld [vmem:[#allocation2 + $0x18] sm:$0x66]
          %v283 = vsel %vm278, 0, %v282
          %284 = vst [vmem:[#allocation2 + $0x18] sm:$0x66] %v283
          %v285 = vpack.c.bf16 %v252, %v249
          %v287 = vshrl.u32 %v285, 16
          %v289 = vrot.slane %v287, 6
          %v290 = vshll.u32 %v285, 16
          %v292 = vrot.slane %v290, 7
          %v293 = vor.u32 %v289, %v292
          %v294 = vrot.slane %v293, 4
          %vm297 = vcmask 1043457
          %vm298 = vmand %vm297, %vm273
          %vm299 = vcmask 1047557
          %vm300 = vmand %vm299, %vm276
          %vm301 = vmor %vm300, %vm298
          %v302 = vld [vmem:[#allocation2] sm:$0xee]
          %v303 = vsel %vm301, %v293, %v302
          %304 = vst [vmem:[#allocation2] sm:$0xee] %v303
          %v305 = vld [vmem:[#allocation2 + $0x10] sm:$0x33]
          %v306 = vsel %vm265, %v294, %v305
          %307 = vst [vmem:[#allocation2 + $0x10] sm:$0x33] %v306
          %v308 = vpack.c.bf16 %v258, %v255
          %v310 = vshrl.u32 %v308, 16
          %v312 = vrot.slane %v310, 6
          %v313 = vshll.u32 %v308, 16
          %v315 = vrot.slane %v313, 7
          %v316 = vor.u32 %v312, %v315
          %v317 = vrot.slane %v316, 4
          %v320 = vld [vmem:[#allocation2 + $0x8] sm:$0xee]
          %v321 = vsel %vm301, %v316, %v320
          %322 = vst [vmem:[#allocation2 + $0x8] sm:$0xee] %v321
          %v323 = vld [vmem:[#allocation2 + $0x18] sm:$0x33]
          %v324 = vsel %vm265, %v317, %v323
          %325 = vst [vmem:[#allocation2 + $0x18] sm:$0x33] %v324
          %v326 = vld [vmem:[#allocation2] sm:$0xff]
          %v327 = vld [vmem:[#allocation2 + $0x8] sm:$0xff]
          %328 = vst [vmem:[#allocation3] sm:$0xff] %v326
          %329 = vst [vmem:[#allocation3 + $0x8] sm:$0xff] %v327
          %v330 = vld [vmem:[#allocation2] sm:$0xff]
          %v331 = vld [vmem:[#allocation2 + $0x8] sm:$0xff]
          %v332 = vld [vmem:[#allocation2 + $0x10] sm:$0x11]
          %v333 = vld [vmem:[#allocation2 + $0x18] sm:$0x11]
          %vm334 = vsmask.f32 3328
          %vm335 = vsmask.f32 7440
          %vm336 = vmor %vm334, %vm335
          %v338 = vshrl.u32 %v330, 16
          %v340 = vrot.slane %v338, 4
          %v341 = vshll.u32 %v330, 16
          %v343 = vrot.slane %v341, 5
          %v344 = vor.u32 %v340, %v343
          %v345 = vrot.slane %v344, 4
          %v347 = vshll.u32 %v332, 16
          %v349 = vrot.slane %v347, 5
          %v350 = vsel %vm336, %v345, %v349
          %v352 = vshrl.u32 %v331, 16
          %v354 = vrot.slane %v352, 4
          %v355 = vshll.u32 %v331, 16
          %v357 = vrot.slane %v355, 5
          %v358 = vor.u32 %v354, %v357
          %v359 = vrot.slane %v358, 4
          %v361 = vshll.u32 %v333, 16
          %v363 = vrot.slane %v361, 5
          %v364 = vsel %vm336, %v359, %v363
          %367 = vst [vmem:[#allocation3 + $0x10] sm:$0xff] %v350
          %368 = vst [vmem:[#allocation3 + $0x18] sm:$0xff] %v364
          %v369 = vld [vmem:[#allocation2] sm:$0xee]
          %v370 = vld [vmem:[#allocation2 + $0x8] sm:$0xee]
          %v371 = vld [vmem:[#allocation2 + $0x10] sm:$0x11]
          %v372 = vld [vmem:[#allocation2 + $0x18] sm:$0x11]
          %vm377 = vcmask 1042432
          %vm378 = vcmask 1046532
          %vm379 = vmor %vm377, %vm378
          %v380 = vrot.slane %v369, 5
          %v381 = vrot.slane %v380, 4
          %v382 = vrot.slane %v371, 5
          %v383 = vsel %vm379, %v381, %v382
          %v384 = vrot.slane %v370, 5
          %v385 = vrot.slane %v384, 4
          %v386 = vrot.slane %v372, 5
          %v387 = vsel %vm379, %v385, %v386
          %390 = vst [vmem:[#allocation3 + $0x20] sm:$0xff] %v383
          %391 = vst [vmem:[#allocation3 + $0x28] sm:$0xff] %v387
          %v392 = vld [vmem:[#allocation2] sm:$0xee]
          %v393 = vld [vmem:[#allocation2 + $0x8] sm:$0xee]
          %v394 = vld [vmem:[#allocation2 + $0x10] sm:$0x33]
          %v395 = vld [vmem:[#allocation2 + $0x18] sm:$0x33]
          %vm396 = vsmask.f32 2304
          %vm397 = vsmask.f32 6416
          %vm398 = vmor %vm396, %vm397
          %v400 = vshrl.u32 %v392, 16
          %v402 = vrot.slane %v400, 5
          %v403 = vshll.u32 %v392, 16
          %v405 = vrot.slane %v403, 6
          %v406 = vor.u32 %v402, %v405
          %v407 = vrot.slane %v406, 4
          %v409 = vshrl.u32 %v394, 16
          %v411 = vrot.slane %v409, 5
          %v412 = vshll.u32 %v394, 16
          %v414 = vrot.slane %v412, 6
          %v415 = vor.u32 %v411, %v414
          %v416 = vsel %vm398, %v407, %v415
          %v418 = vshrl.u32 %v393, 16
          %v420 = vrot.slane %v418, 5
          %v421 = vshll.u32 %v393, 16
          %v423 = vrot.slane %v421, 6
          %v424 = vor.u32 %v420, %v423
          %v425 = vrot.slane %v424, 4
          %v427 = vshrl.u32 %v395, 16
          %v429 = vrot.slane %v427, 5
          %v430 = vshll.u32 %v395, 16
          %v432 = vrot.slane %v430, 6
          %v433 = vor.u32 %v429, %v432
          %v434 = vsel %vm398, %v425, %v433
          %437 = vst [vmem:[#allocation3 + $0x30] sm:$0xff] %v416
          %438 = vst [vmem:[#allocation3 + $0x38] sm:$0xff] %v434
          %v439 = vld [vmem:[#allocation2] sm:$0xcc]
          %v440 = vld [vmem:[#allocation2 + $0x8] sm:$0xcc]
          %v441 = vld [vmem:[#allocation2 + $0x10] sm:$0x33]
          %v442 = vld [vmem:[#allocation2 + $0x18] sm:$0x33]
          %vm447 = vmor %vm259, %vm262
          %v448 = vrot.slane %v439, 6
          %v449 = vrot.slane %v448, 4
          %v450 = vrot.slane %v441, 6
          %v451 = vsel %vm447, %v449, %v450
          %v452 = vrot.slane %v440, 6
          %v453 = vrot.slane %v452, 4
          %v454 = vrot.slane %v442, 6
          %v455 = vsel %vm447, %v453, %v454
          %458 = vst [vmem:[#allocation3 + $0x40] sm:$0xff] %v451
          %459 = vst [vmem:[#allocation3 + $0x48] sm:$0xff] %v455
          %v460 = vld [vmem:[#allocation2] sm:$0xcc]
          %v461 = vld [vmem:[#allocation2 + $0x8] sm:$0xcc]
          %v462 = vld [vmem:[#allocation2 + $0x10] sm:$0x77]
          %v463 = vld [vmem:[#allocation2 + $0x18] sm:$0x77]
          %vm464 = vsmask.f32 5392
          %vm465 = vmor %vm260, %vm464
          %v467 = vshrl.u32 %v460, 16
          %v469 = vrot.slane %v467, 6
          %v470 = vshll.u32 %v460, 16
          %v472 = vrot.slane %v470, 7
          %v473 = vor.u32 %v469, %v472
          %v474 = vrot.slane %v473, 4
          %v476 = vshrl.u32 %v462, 16
          %v478 = vrot.slane %v476, 6
          %v479 = vshll.u32 %v462, 16
          %v481 = vrot.slane %v479, 7
          %v482 = vor.u32 %v478, %v481
          %v483 = vsel %vm465, %v474, %v482
          %v485 = vshrl.u32 %v461, 16
          %v487 = vrot.slane %v485, 6
          %v488 = vshll.u32 %v461, 16
          %v490 = vrot.slane %v488, 7
          %v491 = vor.u32 %v487, %v490
          %v492 = vrot.slane %v491, 4
          %v494 = vshrl.u32 %v463, 16
          %v496 = vrot.slane %v494, 6
          %v497 = vshll.u32 %v463, 16
          %v499 = vrot.slane %v497, 7
          %v500 = vor.u32 %v496, %v499
          %v501 = vsel %vm465, %v492, %v500
          %504 = vst [vmem:[#allocation3 + $0x50] sm:$0xff] %v483
          %505 = vst [vmem:[#allocation3 + $0x58] sm:$0xff] %v501
          %v506 = vld [vmem:[#allocation2] sm:$0x88]
          %v507 = vld [vmem:[#allocation2 + $0x8] sm:$0x88]
          %v508 = vld [vmem:[#allocation2 + $0x10] sm:$0x77]
          %v509 = vld [vmem:[#allocation2 + $0x18] sm:$0x77]
          %vm514 = vcmask 1040384
          %vm515 = vcmask 1044484
          %vm516 = vmor %vm514, %vm515
          %v517 = vrot.slane %v506, 7
          %v518 = vrot.slane %v517, 4
          %v519 = vrot.slane %v508, 7
          %v520 = vsel %vm516, %v518, %v519
          %v521 = vrot.slane %v507, 7
          %v522 = vrot.slane %v521, 4
          %v523 = vrot.slane %v509, 7
          %v524 = vsel %vm516, %v522, %v523
          %527 = vst [vmem:[#allocation3 + $0x60] sm:$0xff] %v520
          %528 = vst [vmem:[#allocation3 + $0x68] sm:$0xff] %v524
        $region44: #{tpu_custom_call.1} parent=31 // pred_fallthru
          _
        %v529 = vld [vmem:[#allocation3] sm:$0xff]
        %v530 = vld [vmem:[#allocation3 + $0x8] sm:$0xff]
        %v531 = vld [vmem:[#allocation3 + $0x10] sm:$0xff]
        %v532 = vld [vmem:[#allocation3 + $0x18] sm:$0xff]
        %v533 = vld [vmem:[#allocation3 + $0x20] sm:$0xff]
        %v534 = vld [vmem:[#allocation3 + $0x28] sm:$0xff]
        %v535 = vld [vmem:[#allocation3 + $0x30] sm:$0xff]
        %v536 = vld [vmem:[#allocation3 + $0x38] sm:$0xff]
        %v537 = vld [vmem:[#allocation3 + $0x40] sm:$0xff]
        %v538 = vld [vmem:[#allocation3 + $0x48] sm:$0xff]
        %v539 = vld [vmem:[#allocation3 + $0x50] sm:$0xff]
        %v540 = vld [vmem:[#allocation3 + $0x58] sm:$0xff]
        %v541 = vld [vmem:[#allocation3 + $0x60] sm:$0xff]
        %v542 = vld [vmem:[#allocation3 + $0x68] sm:$0xff]
        %v543 = vld [vmem:[#allocation8] sm:$0xff]
        %v544 = vld [vmem:[#allocation8 + $0x8] sm:$0xff]
        %v545 = vld [vmem:[#allocation8 + $0x10] sm:$0xff]
        %v546 = vld [vmem:[#allocation8 + $0x18] sm:$0xff]
        %v547 = vld [vmem:[#allocation8 + $0x20] sm:$0xff]
        %v548 = vld [vmem:[#allocation8 + $0x28] sm:$0xff]
        %v549 = vld [vmem:[#allocation8 + $0x30] sm:$0xff]
        %v550 = vld [vmem:[#allocation8 + $0x38] sm:$0xff]
        %v551 = vld [vmem:[#allocation8 + $0x40] sm:$0xff]
        %v552 = vld [vmem:[#allocation8 + $0x48] sm:$0xff]
        %v553 = vld [vmem:[#allocation8 + $0x50] sm:$0xff]
        %v554 = vld [vmem:[#allocation8 + $0x58] sm:$0xff]
        %v555 = vld [vmem:[#allocation8 + $0x60] sm:$0xff]
        %v556 = vld [vmem:[#allocation8 + $0x68] sm:$0xff]
        %v557 = vld [vmem:[#allocation8 + $0x70] sm:$0xff]
        %v558 = vld [vmem:[#allocation8 + $0x78] sm:$0xff]
        %v559 = vld [vmem:[#allocation8 + $0x80] sm:$0xff]
        %v560 = vld [vmem:[#allocation8 + $0x88] sm:$0xff]
        %v561 = vld [vmem:[#allocation8 + $0x90] sm:$0xff]
        %v562 = vld [vmem:[#allocation8 + $0x98] sm:$0xff]
        %v563 = vld [vmem:[#allocation8 + $0xa0] sm:$0xff]
        %v564 = vld [vmem:[#allocation8 + $0xa8] sm:$0xff]
        %v565 = vld [vmem:[#allocation8 + $0xb0] sm:$0xff]
        %v566 = vld [vmem:[#allocation8 + $0xb8] sm:$0xff]
        %v567 = vld [vmem:[#allocation8 + $0xc0] sm:$0xff]
        %v568 = vld [vmem:[#allocation8 + $0xc8] sm:$0xff]
        %v569 = vld [vmem:[#allocation8 + $0xd0] sm:$0xff]
        %v570 = vld [vmem:[#allocation8 + $0xd8] sm:$0xff]
        %v571 = vld [vmem:[#allocation8 + $0xe0] sm:$0xff]
        %v572 = vld [vmem:[#allocation8 + $0xe8] sm:$0xff]
        %v573 = vld [vmem:[#allocation8 + $0xf0] sm:$0xff]
        %v574 = vld [vmem:[#allocation8 + $0xf8] sm:$0xff]
        %v575 = vld [vmem:[#allocation8 + $0x100] sm:$0xff]
        %v576 = vld [vmem:[#allocation8 + $0x108] sm:$0xff]
        %v577 = vld [vmem:[#allocation8 + $0x110] sm:$0xff]
        %v578 = vld [vmem:[#allocation8 + $0x118] sm:$0xff]
        %v579 = vld [vmem:[#allocation8 + $0x120] sm:$0xff]
        %v580 = vld [vmem:[#allocation8 + $0x128] sm:$0xff]
        %v581 = vld [vmem:[#allocation8 + $0x130] sm:$0xff]
        %v582 = vld [vmem:[#allocation8 + $0x138] sm:$0xff]
        %v583 = vld [vmem:[#allocation8 + $0x140] sm:$0xff]
        %v584 = vld [vmem:[#allocation8 + $0x148] sm:$0xff]
        %v585 = vld [vmem:[#allocation8 + $0x150] sm:$0xff]
        %v586 = vld [vmem:[#allocation8 + $0x158] sm:$0xff]
        %v587 = vld [vmem:[#allocation8 + $0x160] sm:$0xff]
        %v588 = vld [vmem:[#allocation8 + $0x168] sm:$0xff]
        %v589 = vld [vmem:[#allocation8 + $0x170] sm:$0xff]
        %v590 = vld [vmem:[#allocation8 + $0x178] sm:$0xff]
        %v591 = vld [vmem:[#allocation8 + $0x180] sm:$0xff]
        %v592 = vld [vmem:[#allocation8 + $0x188] sm:$0xff]
        %v593 = vld [vmem:[#allocation8 + $0x190] sm:$0xff]
        %v594 = vld [vmem:[#allocation8 + $0x198] sm:$0xff]
        %v595 = vld [vmem:[#allocation8 + $0x1a0] sm:$0xff]
        %v596 = vld [vmem:[#allocation8 + $0x1a8] sm:$0xff]
        %v597 = vld [vmem:[#allocation8 + $0x1b0] sm:$0xff]
        %v598 = vld [vmem:[#allocation8 + $0x1b8] sm:$0xff]
        %v599 = vld [vmem:[#allocation8 + $0x1c0] sm:$0xff]
        %v600 = vld [vmem:[#allocation8 + $0x1c8] sm:$0xff]
        %v601 = vld [vmem:[#allocation8 + $0x1d0] sm:$0xff]
        %v602 = vld [vmem:[#allocation8 + $0x1d8] sm:$0xff]
        %v603 = vld [vmem:[#allocation8 + $0x1e0] sm:$0xff]
        %v604 = vld [vmem:[#allocation8 + $0x1e8] sm:$0xff]
        %v605 = vld [vmem:[#allocation8 + $0x1f0] sm:$0xff]
        %v606 = vld [vmem:[#allocation8 + $0x1f8] sm:$0xff]
        %v607 = vld [vmem:[#allocation8 + $0x200] sm:$0xff]
        %v608 = vld [vmem:[#allocation8 + $0x208] sm:$0xff]
        %v609 = vld [vmem:[#allocation8 + $0x210] sm:$0xff]
        %v610 = vld [vmem:[#allocation8 + $0x218] sm:$0xff]
        %v611 = vld [vmem:[#allocation8 + $0x220] sm:$0xff]
        %v612 = vld [vmem:[#allocation8 + $0x228] sm:$0xff]
        %v613 = vld [vmem:[#allocation8 + $0x230] sm:$0xff]
        %v614 = vld [vmem:[#allocation8 + $0x238] sm:$0xff]
        %v615 = vld [vmem:[#allocation8 + $0x240] sm:$0xff]
        %v616 = vld [vmem:[#allocation8 + $0x248] sm:$0xff]
        %v617 = vld [vmem:[#allocation8 + $0x250] sm:$0xff]
        %v618 = vld [vmem:[#allocation8 + $0x258] sm:$0xff]
        %v619 = vld [vmem:[#allocation8 + $0x260] sm:$0xff]
        %v620 = vld [vmem:[#allocation8 + $0x268] sm:$0xff]
        %v621 = vld [vmem:[#allocation8 + $0x270] sm:$0xff]
        %v622 = vld [vmem:[#allocation8 + $0x278] sm:$0xff]
        %v623 = vld [vmem:[#allocation8 + $0x280] sm:$0xff]
        %v624 = vld [vmem:[#allocation8 + $0x288] sm:$0xff]
        %v625 = vld [vmem:[#allocation8 + $0x290] sm:$0xff]
        %v626 = vld [vmem:[#allocation8 + $0x298] sm:$0xff]
        %v627 = vld [vmem:[#allocation8 + $0x2a0] sm:$0xff]
        %v628 = vld [vmem:[#allocation8 + $0x2a8] sm:$0xff]
        %v629 = vld [vmem:[#allocation8 + $0x2b0] sm:$0xff]
        %v630 = vld [vmem:[#allocation8 + $0x2b8] sm:$0xff]
        %v631 = vld [vmem:[#allocation8 + $0x2c0] sm:$0xff]
        %v632 = vld [vmem:[#allocation8 + $0x2c8] sm:$0xff]
        %v633 = vld [vmem:[#allocation8 + $0x2d0] sm:$0xff]
        %v634 = vld [vmem:[#allocation8 + $0x2d8] sm:$0xff]
        %v635 = vld [vmem:[#allocation8 + $0x2e0] sm:$0xff]
        %v636 = vld [vmem:[#allocation8 + $0x2e8] sm:$0xff]
        %v637 = vld [vmem:[#allocation8 + $0x2f0] sm:$0xff]
        %v638 = vld [vmem:[#allocation8 + $0x2f8] sm:$0xff]
        %v639 = vld [vmem:[#allocation8 + $0x300] sm:$0xff]
        %v640 = vld [vmem:[#allocation8 + $0x308] sm:$0xff]
        %v641 = vld [vmem:[#allocation8 + $0x310] sm:$0xff]
        %v642 = vld [vmem:[#allocation8 + $0x318] sm:$0xff]
        %v643 = vld [vmem:[#allocation8 + $0x320] sm:$0xff]
        %v644 = vld [vmem:[#allocation8 + $0x328] sm:$0xff]
        %v645 = vld [vmem:[#allocation8 + $0x330] sm:$0xff]
        %v646 = vld [vmem:[#allocation8 + $0x338] sm:$0xff]
        %v647 = vld [vmem:[#allocation8 + $0x340] sm:$0xff]
        %v648 = vld [vmem:[#allocation8 + $0x348] sm:$0xff]
        %v649 = vld [vmem:[#allocation8 + $0x350] sm:$0xff]
        %v650 = vld [vmem:[#allocation8 + $0x358] sm:$0xff]
        %v651 = vld [vmem:[#allocation8 + $0x360] sm:$0xff]
        %v652 = vld [vmem:[#allocation8 + $0x368] sm:$0xff]
        %v653 = vld [vmem:[#allocation8 + $0x370] sm:$0xff]
        %v654 = vld [vmem:[#allocation8 + $0x378] sm:$0xff]
        %v655 = vld [vmem:[#allocation8 + $0x380] sm:$0xff]
        %v656 = vld [vmem:[#allocation8 + $0x388] sm:$0xff]
        %v657 = vld [vmem:[#allocation8 + $0x390] sm:$0xff]
        %v658 = vld [vmem:[#allocation8 + $0x398] sm:$0xff]
        %v659 = vld [vmem:[#allocation8 + $0x3a0] sm:$0xff]
        %v660 = vld [vmem:[#allocation8 + $0x3a8] sm:$0xff]
        %v661 = vld [vmem:[#allocation8 + $0x3b0] sm:$0xff]
        %v662 = vld [vmem:[#allocation8 + $0x3b8] sm:$0xff]
        %v663 = vld [vmem:[#allocation8 + $0x3c0] sm:$0xff]
        %v664 = vld [vmem:[#allocation8 + $0x3c8] sm:$0xff]
        %v665 = vld [vmem:[#allocation8 + $0x3d0] sm:$0xff]
        %v666 = vld [vmem:[#allocation8 + $0x3d8] sm:$0xff]
        %v667 = vld [vmem:[#allocation8 + $0x3e0] sm:$0xff]
        %v668 = vld [vmem:[#allocation8 + $0x3e8] sm:$0xff]
        %v669 = vld [vmem:[#allocation8 + $0x3f0] sm:$0xff]
        %v670 = vld [vmem:[#allocation8 + $0x3f8] sm:$0xff]
        %v671 = vld [vmem:[#allocation8 + $0x400] sm:$0xff]
        %v672 = vld [vmem:[#allocation8 + $0x408] sm:$0xff]
        %v673 = vld [vmem:[#allocation8 + $0x410] sm:$0xff]
        %v674 = vld [vmem:[#allocation8 + $0x418] sm:$0xff]
        %v675 = vld [vmem:[#allocation8 + $0x420] sm:$0xff]
        %v676 = vld [vmem:[#allocation8 + $0x428] sm:$0xff]
        %v677 = vld [vmem:[#allocation8 + $0x430] sm:$0xff]
        %v678 = vld [vmem:[#allocation8 + $0x438] sm:$0xff]
        %v679 = vld [vmem:[#allocation8 + $0x440] sm:$0xff]
        %v680 = vld [vmem:[#allocation8 + $0x448] sm:$0xff]
        %v681 = vld [vmem:[#allocation8 + $0x450] sm:$0xff]
        %v682 = vld [vmem:[#allocation8 + $0x458] sm:$0xff]
        %v683 = vld [vmem:[#allocation8 + $0x460] sm:$0xff]
        %v684 = vld [vmem:[#allocation8 + $0x468] sm:$0xff]
        %v685 = vld [vmem:[#allocation8 + $0x470] sm:$0xff]
        %v686 = vld [vmem:[#allocation8 + $0x478] sm:$0xff]
        %v687 = vld [vmem:[#allocation8 + $0x480] sm:$0xff]
        %v688 = vld [vmem:[#allocation8 + $0x488] sm:$0xff]
        %v689 = vld [vmem:[#allocation8 + $0x490] sm:$0xff]
        %v690 = vld [vmem:[#allocation8 + $0x498] sm:$0xff]
        %v691 = vld [vmem:[#allocation8 + $0x4a0] sm:$0xff]
        %v692 = vld [vmem:[#allocation8 + $0x4a8] sm:$0xff]
        %v693 = vld [vmem:[#allocation8 + $0x4b0] sm:$0xff]
        %v694 = vld [vmem:[#allocation8 + $0x4b8] sm:$0xff]
        %v695 = vld [vmem:[#allocation8 + $0x4c0] sm:$0xff]
        %v696 = vld [vmem:[#allocation8 + $0x4c8] sm:$0xff]
        %v697 = vld [vmem:[#allocation8 + $0x4d0] sm:$0xff]
        %v698 = vld [vmem:[#allocation8 + $0x4d8] sm:$0xff]
        %v699 = vld [vmem:[#allocation8 + $0x4e0] sm:$0xff]
        %v700 = vld [vmem:[#allocation8 + $0x4e8] sm:$0xff]
        %v701 = vld [vmem:[#allocation8 + $0x4f0] sm:$0xff]
        %v702 = vld [vmem:[#allocation8 + $0x4f8] sm:$0xff]
        %v703 = vld [vmem:[#allocation8 + $0x500] sm:$0xff]
        %v704 = vld [vmem:[#allocation8 + $0x508] sm:$0xff]
        %v705 = vld [vmem:[#allocation8 + $0x510] sm:$0xff]
        %v706 = vld [vmem:[#allocation8 + $0x518] sm:$0xff]
        %v707 = vld [vmem:[#allocation8 + $0x520] sm:$0xff]
        %v708 = vld [vmem:[#allocation8 + $0x528] sm:$0xff]
        %v709 = vld [vmem:[#allocation8 + $0x530] sm:$0xff]
        %v710 = vld [vmem:[#allocation8 + $0x538] sm:$0xff]
        %v711 = vld [vmem:[#allocation8 + $0x540] sm:$0xff]
        %v712 = vld [vmem:[#allocation8 + $0x548] sm:$0xff]
        %v713 = vld [vmem:[#allocation8 + $0x550] sm:$0xff]
        %v714 = vld [vmem:[#allocation8 + $0x558] sm:$0xff]
        %v715 = vld [vmem:[#allocation8 + $0x560] sm:$0xff]
        %v716 = vld [vmem:[#allocation8 + $0x568] sm:$0xff]
        %v717 = vld [vmem:[#allocation8 + $0x570] sm:$0xff]
        %v718 = vld [vmem:[#allocation8 + $0x578] sm:$0xff]
        %v719 = vld [vmem:[#allocation8 + $0x580] sm:$0xff]
        %v720 = vld [vmem:[#allocation8 + $0x588] sm:$0xff]
        %v721 = vld [vmem:[#allocation8 + $0x590] sm:$0xff]
        %v722 = vld [vmem:[#allocation8 + $0x598] sm:$0xff]
        %v723 = vld [vmem:[#allocation8 + $0x5a0] sm:$0xff]
        %v724 = vld [vmem:[#allocation8 + $0x5a8] sm:$0xff]
        %v725 = vld [vmem:[#allocation8 + $0x5b0] sm:$0xff]
        %v726 = vld [vmem:[#allocation8 + $0x5b8] sm:$0xff]
        %v727 = vld [vmem:[#allocation8 + $0x5c0] sm:$0xff]
        %v728 = vld [vmem:[#allocation8 + $0x5c8] sm:$0xff]
        %v729 = vld [vmem:[#allocation8 + $0x5d0] sm:$0xff]
        %v730 = vld [vmem:[#allocation8 + $0x5d8] sm:$0xff]
        %v731 = vld [vmem:[#allocation8 + $0x5e0] sm:$0xff]
        %v732 = vld [vmem:[#allocation8 + $0x5e8] sm:$0xff]
        %v733 = vld [vmem:[#allocation8 + $0x5f0] sm:$0xff]
        %v734 = vld [vmem:[#allocation8 + $0x5f8] sm:$0xff]
        %v735 = vld [vmem:[#allocation8 + $0x600] sm:$0xff]
        %v736 = vld [vmem:[#allocation8 + $0x608] sm:$0xff]
        %v737 = vld [vmem:[#allocation8 + $0x610] sm:$0xff]
        %v738 = vld [vmem:[#allocation8 + $0x618] sm:$0xff]
        %v739 = vld [vmem:[#allocation8 + $0x620] sm:$0xff]
        %v740 = vld [vmem:[#allocation8 + $0x628] sm:$0xff]
        %v741 = vld [vmem:[#allocation8 + $0x630] sm:$0xff]
        %v742 = vld [vmem:[#allocation8 + $0x638] sm:$0xff]
        %v743 = vld [vmem:[#allocation8 + $0x640] sm:$0xff]
        %v744 = vld [vmem:[#allocation8 + $0x648] sm:$0xff]
        %v745 = vld [vmem:[#allocation8 + $0x650] sm:$0xff]
        %v746 = vld [vmem:[#allocation8 + $0x658] sm:$0xff]
        %v747 = vld [vmem:[#allocation8 + $0x660] sm:$0xff]
        %v748 = vld [vmem:[#allocation8 + $0x668] sm:$0xff]
        %v749 = vld [vmem:[#allocation8 + $0x670] sm:$0xff]
        %v750 = vld [vmem:[#allocation8 + $0x678] sm:$0xff]
        %v751 = vld [vmem:[#allocation8 + $0x680] sm:$0xff]
        %v752 = vld [vmem:[#allocation8 + $0x688] sm:$0xff]
        %v753 = vld [vmem:[#allocation8 + $0x690] sm:$0xff]
        %v754 = vld [vmem:[#allocation8 + $0x698] sm:$0xff]
        %v755 = vld [vmem:[#allocation8 + $0x6a0] sm:$0xff]
        %v756 = vld [vmem:[#allocation8 + $0x6a8] sm:$0xff]
        %v757 = vld [vmem:[#allocation8 + $0x6b0] sm:$0xff]
        %v758 = vld [vmem:[#allocation8 + $0x6b8] sm:$0xff]
        %v759 = vld [vmem:[#allocation8 + $0x6c0] sm:$0xff]
        %v760 = vld [vmem:[#allocation8 + $0x6c8] sm:$0xff]
        %v761 = vld [vmem:[#allocation8 + $0x6d0] sm:$0xff]
        %v762 = vld [vmem:[#allocation8 + $0x6d8] sm:$0xff]
        %v763 = vld [vmem:[#allocation8 + $0x6e0] sm:$0xff]
        %v764 = vld [vmem:[#allocation8 + $0x6e8] sm:$0xff]
        %v765 = vld [vmem:[#allocation8 + $0x6f0] sm:$0xff]
        %v766 = vld [vmem:[#allocation8 + $0x6f8] sm:$0xff]
        %v767 = vld [vmem:[#allocation8 + $0x700] sm:$0xff]
        %v768 = vld [vmem:[#allocation8 + $0x708] sm:$0xff]
        %v769 = vld [vmem:[#allocation8 + $0x710] sm:$0xff]
        %v770 = vld [vmem:[#allocation8 + $0x718] sm:$0xff]
        %v771 = vld [vmem:[#allocation8 + $0x720] sm:$0xff]
        %v772 = vld [vmem:[#allocation8 + $0x728] sm:$0xff]
        %v773 = vld [vmem:[#allocation8 + $0x730] sm:$0xff]
        %v774 = vld [vmem:[#allocation8 + $0x738] sm:$0xff]
        %v775 = vld [vmem:[#allocation8 + $0x740] sm:$0xff]
        %v776 = vld [vmem:[#allocation8 + $0x748] sm:$0xff]
        %v777 = vld [vmem:[#allocation8 + $0x750] sm:$0xff]
        %v778 = vld [vmem:[#allocation8 + $0x758] sm:$0xff]
        %v779 = vld [vmem:[#allocation8 + $0x760] sm:$0xff]
        %v780 = vld [vmem:[#allocation8 + $0x768] sm:$0xff]
        %v781 = vld [vmem:[#allocation8 + $0x770] sm:$0xff]
        %v782 = vld [vmem:[#allocation8 + $0x778] sm:$0xff]
        %v783 = vld [vmem:[#allocation8 + $0x780] sm:$0xff]
        %v784 = vld [vmem:[#allocation8 + $0x788] sm:$0xff]
        %v785 = vld [vmem:[#allocation8 + $0x790] sm:$0xff]
        %v786 = vld [vmem:[#allocation8 + $0x798] sm:$0xff]
        %v787 = vld [vmem:[#allocation8 + $0x7a0] sm:$0xff]
        %v788 = vld [vmem:[#allocation8 + $0x7a8] sm:$0xff]
        %v789 = vld [vmem:[#allocation8 + $0x7b0] sm:$0xff]
        %v790 = vld [vmem:[#allocation8 + $0x7b8] sm:$0xff]
        %v791 = vld [vmem:[#allocation8 + $0x7c0] sm:$0xff]
        %v792 = vld [vmem:[#allocation8 + $0x7c8] sm:$0xff]
        %v793 = vld [vmem:[#allocation8 + $0x7d0] sm:$0xff]
        %v794 = vld [vmem:[#allocation8 + $0x7d8] sm:$0xff]
        %v795 = vld [vmem:[#allocation8 + $0x7e0] sm:$0xff]
        %v796 = vld [vmem:[#allocation8 + $0x7e8] sm:$0xff]
        %v797 = vld [vmem:[#allocation8 + $0x7f0] sm:$0xff]
        %v798 = vld [vmem:[#allocation8 + $0x7f8] sm:$0xff]
        %v799 = vld [vmem:[#allocation8 + $0x800] sm:$0xff]
        %v800 = vld [vmem:[#allocation8 + $0x808] sm:$0xff]
        %v801 = vld [vmem:[#allocation8 + $0x810] sm:$0xff]
        %v802 = vld [vmem:[#allocation8 + $0x818] sm:$0xff]
        %v803 = vld [vmem:[#allocation8 + $0x820] sm:$0xff]
        %v804 = vld [vmem:[#allocation8 + $0x828] sm:$0xff]
        %v805 = vld [vmem:[#allocation8 + $0x830] sm:$0xff]
        %v806 = vld [vmem:[#allocation8 + $0x838] sm:$0xff]
        %v807 = vld [vmem:[#allocation8 + $0x840] sm:$0xff]
        %v808 = vld [vmem:[#allocation8 + $0x848] sm:$0xff]
        %v809 = vld [vmem:[#allocation8 + $0x850] sm:$0xff]
        %v810 = vld [vmem:[#allocation8 + $0x858] sm:$0xff]
        %v811 = vld [vmem:[#allocation8 + $0x860] sm:$0xff]
        %v812 = vld [vmem:[#allocation8 + $0x868] sm:$0xff]
        %v813 = vld [vmem:[#allocation8 + $0x870] sm:$0xff]
        %v814 = vld [vmem:[#allocation8 + $0x878] sm:$0xff]
        %v815 = vld [vmem:[#allocation8 + $0x880] sm:$0xff]
        %v816 = vld [vmem:[#allocation8 + $0x888] sm:$0xff]
        %v817 = vld [vmem:[#allocation8 + $0x890] sm:$0xff]
        %v818 = vld [vmem:[#allocation8 + $0x898] sm:$0xff]
        %v819 = vld [vmem:[#allocation8 + $0x8a0] sm:$0xff]
        %v820 = vld [vmem:[#allocation8 + $0x8a8] sm:$0xff]
        %v821 = vld [vmem:[#allocation8 + $0x8b0] sm:$0xff]
        %v822 = vld [vmem:[#allocation8 + $0x8b8] sm:$0xff]
        %v823 = vld [vmem:[#allocation8 + $0x8c0] sm:$0xff]
        %v824 = vld [vmem:[#allocation8 + $0x8c8] sm:$0xff]
        %v825 = vld [vmem:[#allocation8 + $0x8d0] sm:$0xff]
        %v826 = vld [vmem:[#allocation8 + $0x8d8] sm:$0xff]
        %v827 = vld [vmem:[#allocation8 + $0x8e0] sm:$0xff]
        %v828 = vld [vmem:[#allocation8 + $0x8e8] sm:$0xff]
        %v829 = vld [vmem:[#allocation8 + $0x8f0] sm:$0xff]
        %v830 = vld [vmem:[#allocation8 + $0x8f8] sm:$0xff]
        %v831 = vld [vmem:[#allocation8 + $0x900] sm:$0xff]
        %v832 = vld [vmem:[#allocation8 + $0x908] sm:$0xff]
        %v833 = vld [vmem:[#allocation8 + $0x910] sm:$0xff]
        %v834 = vld [vmem:[#allocation8 + $0x918] sm:$0xff]
        %v835 = vld [vmem:[#allocation8 + $0x920] sm:$0xff]
        %v836 = vld [vmem:[#allocation8 + $0x928] sm:$0xff]
        %v837 = vld [vmem:[#allocation8 + $0x930] sm:$0xff]
        %v838 = vld [vmem:[#allocation8 + $0x938] sm:$0xff]
        %v839 = vld [vmem:[#allocation8 + $0x940] sm:$0xff]
        %v840 = vld [vmem:[#allocation8 + $0x948] sm:$0xff]
        %v841 = vld [vmem:[#allocation8 + $0x950] sm:$0xff]
        %v842 = vld [vmem:[#allocation8 + $0x958] sm:$0xff]
        %v843 = vld [vmem:[#allocation8 + $0x960] sm:$0xff]
        %v844 = vld [vmem:[#allocation8 + $0x968] sm:$0xff]
        %v845 = vld [vmem:[#allocation8 + $0x970] sm:$0xff]
        %v846 = vld [vmem:[#allocation8 + $0x978] sm:$0xff]
        %v847 = vld [vmem:[#allocation8 + $0x980] sm:$0xff]
        %v848 = vld [vmem:[#allocation8 + $0x988] sm:$0xff]
        %v849 = vld [vmem:[#allocation8 + $0x990] sm:$0xff]
        %v850 = vld [vmem:[#allocation8 + $0x998] sm:$0xff]
        %v851 = vld [vmem:[#allocation8 + $0x9a0] sm:$0xff]
        %v852 = vld [vmem:[#allocation8 + $0x9a8] sm:$0xff]
        %v853 = vld [vmem:[#allocation8 + $0x9b0] sm:$0xff]
        %v854 = vld [vmem:[#allocation8 + $0x9b8] sm:$0xff]
        %v855 = vld [vmem:[#allocation8 + $0x9c0] sm:$0xff]
        %v856 = vld [vmem:[#allocation8 + $0x9c8] sm:$0xff]
        %v857 = vld [vmem:[#allocation8 + $0x9d0] sm:$0xff]
        %v858 = vld [vmem:[#allocation8 + $0x9d8] sm:$0xff]
        %v859 = vld [vmem:[#allocation8 + $0x9e0] sm:$0xff]
        %v860 = vld [vmem:[#allocation8 + $0x9e8] sm:$0xff]
        %v861 = vld [vmem:[#allocation8 + $0x9f0] sm:$0xff]
        %v862 = vld [vmem:[#allocation8 + $0x9f8] sm:$0xff]
        %v863 = vld [vmem:[#allocation8 + $0xa00] sm:$0xff]
        %v864 = vld [vmem:[#allocation8 + $0xa08] sm:$0xff]
        %v865 = vld [vmem:[#allocation8 + $0xa10] sm:$0xff]
        %v866 = vld [vmem:[#allocation8 + $0xa18] sm:$0xff]
        %v867 = vld [vmem:[#allocation8 + $0xa20] sm:$0xff]
        %v868 = vld [vmem:[#allocation8 + $0xa28] sm:$0xff]
        %v869 = vld [vmem:[#allocation8 + $0xa30] sm:$0xff]
        %v870 = vld [vmem:[#allocation8 + $0xa38] sm:$0xff]
        %v871 = vld [vmem:[#allocation8 + $0xa40] sm:$0xff]
        %v872 = vld [vmem:[#allocation8 + $0xa48] sm:$0xff]
        %v873 = vld [vmem:[#allocation8 + $0xa50] sm:$0xff]
        %v874 = vld [vmem:[#allocation8 + $0xa58] sm:$0xff]
        %v875 = vld [vmem:[#allocation8 + $0xa60] sm:$0xff]
        %v876 = vld [vmem:[#allocation8 + $0xa68] sm:$0xff]
        %v877 = vld [vmem:[#allocation8 + $0xa70] sm:$0xff]
        %v878 = vld [vmem:[#allocation8 + $0xa78] sm:$0xff]
        %v879 = vld [vmem:[#allocation8 + $0xa80] sm:$0xff]
        %v880 = vld [vmem:[#allocation8 + $0xa88] sm:$0xff]
        %v881 = vld [vmem:[#allocation8 + $0xa90] sm:$0xff]
        %v882 = vld [vmem:[#allocation8 + $0xa98] sm:$0xff]
        %v883 = vld [vmem:[#allocation8 + $0xaa0] sm:$0xff]
        %v884 = vld [vmem:[#allocation8 + $0xaa8] sm:$0xff]
        %v885 = vld [vmem:[#allocation8 + $0xab0] sm:$0xff]
        %v886 = vld [vmem:[#allocation8 + $0xab8] sm:$0xff]
        %v887 = vld [vmem:[#allocation8 + $0xac0] sm:$0xff]
        %v888 = vld [vmem:[#allocation8 + $0xac8] sm:$0xff]
        %v889 = vld [vmem:[#allocation8 + $0xad0] sm:$0xff]
        %v890 = vld [vmem:[#allocation8 + $0xad8] sm:$0xff]
        %v891 = vld [vmem:[#allocation8 + $0xae0] sm:$0xff]
        %v892 = vld [vmem:[#allocation8 + $0xae8] sm:$0xff]
        %v893 = vld [vmem:[#allocation8 + $0xaf0] sm:$0xff]
        %v894 = vld [vmem:[#allocation8 + $0xaf8] sm:$0xff]
        %v895 = vld [vmem:[#allocation8 + $0xb00] sm:$0xff]
        %v896 = vld [vmem:[#allocation8 + $0xb08] sm:$0xff]
        %v897 = vld [vmem:[#allocation8 + $0xb10] sm:$0xff]
        %v898 = vld [vmem:[#allocation8 + $0xb18] sm:$0xff]
        %v899 = vld [vmem:[#allocation8 + $0xb20] sm:$0xff]
        %v900 = vld [vmem:[#allocation8 + $0xb28] sm:$0xff]
        %v901 = vld [vmem:[#allocation8 + $0xb30] sm:$0xff]
        %v902 = vld [vmem:[#allocation8 + $0xb38] sm:$0xff]
        %v903 = vld [vmem:[#allocation8 + $0xb40] sm:$0xff]
        %v904 = vld [vmem:[#allocation8 + $0xb48] sm:$0xff]
        %v905 = vld [vmem:[#allocation8 + $0xb50] sm:$0xff]
        %v906 = vld [vmem:[#allocation8 + $0xb58] sm:$0xff]
        %v907 = vld [vmem:[#allocation8 + $0xb60] sm:$0xff]
        %v908 = vld [vmem:[#allocation8 + $0xb68] sm:$0xff]
        %v909 = vld [vmem:[#allocation8 + $0xb70] sm:$0xff]
        %v910 = vld [vmem:[#allocation8 + $0xb78] sm:$0xff]
        %v911 = vld [vmem:[#allocation8 + $0xb80] sm:$0xff]
        %v912 = vld [vmem:[#allocation8 + $0xb88] sm:$0xff]
        %v913 = vld [vmem:[#allocation8 + $0xb90] sm:$0xff]
        %v914 = vld [vmem:[#allocation8 + $0xb98] sm:$0xff]
        %v915 = vld [vmem:[#allocation8 + $0xba0] sm:$0xff]
        %v916 = vld [vmem:[#allocation8 + $0xba8] sm:$0xff]
        %v917 = vld [vmem:[#allocation8 + $0xbb0] sm:$0xff]
        %v918 = vld [vmem:[#allocation8 + $0xbb8] sm:$0xff]
        %v919 = vld [vmem:[#allocation8 + $0xbc0] sm:$0xff]
        %v920 = vld [vmem:[#allocation8 + $0xbc8] sm:$0xff]
        %v921 = vld [vmem:[#allocation8 + $0xbd0] sm:$0xff]
        %v922 = vld [vmem:[#allocation8 + $0xbd8] sm:$0xff]
        %v923 = vld [vmem:[#allocation8 + $0xbe0] sm:$0xff]
        %v924 = vld [vmem:[#allocation8 + $0xbe8] sm:$0xff]
        %v925 = vld [vmem:[#allocation8 + $0xbf0] sm:$0xff]
        %v926 = vld [vmem:[#allocation8 + $0xbf8] sm:$0xff]
        %v927 = vld [vmem:[#allocation8 + $0xc00] sm:$0xff]
        %v928 = vld [vmem:[#allocation8 + $0xc08] sm:$0xff]
        %v929 = vld [vmem:[#allocation8 + $0xc10] sm:$0xff]
        %v930 = vld [vmem:[#allocation8 + $0xc18] sm:$0xff]
        %v931 = vld [vmem:[#allocation8 + $0xc20] sm:$0xff]
        %v932 = vld [vmem:[#allocation8 + $0xc28] sm:$0xff]
        %v933 = vld [vmem:[#allocation8 + $0xc30] sm:$0xff]
        %v934 = vld [vmem:[#allocation8 + $0xc38] sm:$0xff]
        %v935 = vld [vmem:[#allocation8 + $0xc40] sm:$0xff]
        %v936 = vld [vmem:[#allocation8 + $0xc48] sm:$0xff]
        %v937 = vld [vmem:[#allocation8 + $0xc50] sm:$0xff]
        %v938 = vld [vmem:[#allocation8 + $0xc58] sm:$0xff]
        %v939 = vld [vmem:[#allocation8 + $0xc60] sm:$0xff]
        %v940 = vld [vmem:[#allocation8 + $0xc68] sm:$0xff]
        %v941 = vld [vmem:[#allocation8 + $0xc70] sm:$0xff]
        %v942 = vld [vmem:[#allocation8 + $0xc78] sm:$0xff]
        %v943 = vld [vmem:[#allocation8 + $0xc80] sm:$0xff]
        %v944 = vld [vmem:[#allocation8 + $0xc88] sm:$0xff]
        %v945 = vld [vmem:[#allocation8 + $0xc90] sm:$0xff]
        %v946 = vld [vmem:[#allocation8 + $0xc98] sm:$0xff]
        %v947 = vld [vmem:[#allocation8 + $0xca0] sm:$0xff]
        %v948 = vld [vmem:[#allocation8 + $0xca8] sm:$0xff]
        %v949 = vld [vmem:[#allocation8 + $0xcb0] sm:$0xff]
        %v950 = vld [vmem:[#allocation8 + $0xcb8] sm:$0xff]
        %v951 = vld [vmem:[#allocation8 + $0xcc0] sm:$0xff]
        %v952 = vld [vmem:[#allocation8 + $0xcc8] sm:$0xff]
        %v953 = vld [vmem:[#allocation8 + $0xcd0] sm:$0xff]
        %v954 = vld [vmem:[#allocation8 + $0xcd8] sm:$0xff]
        %v955 = vld [vmem:[#allocation8 + $0xce0] sm:$0xff]
        %v956 = vld [vmem:[#allocation8 + $0xce8] sm:$0xff]
        %v957 = vld [vmem:[#allocation8 + $0xcf0] sm:$0xff]
        %v958 = vld [vmem:[#allocation8 + $0xcf8] sm:$0xff]
        %v959 = vld [vmem:[#allocation8 + $0xd00] sm:$0xff]
        %v960 = vld [vmem:[#allocation8 + $0xd08] sm:$0xff]
        %v961 = vld [vmem:[#allocation8 + $0xd10] sm:$0xff]
        %v962 = vld [vmem:[#allocation8 + $0xd18] sm:$0xff]
        %v963 = vld [vmem:[#allocation8 + $0xd20] sm:$0xff]
        %v964 = vld [vmem:[#allocation8 + $0xd28] sm:$0xff]
        %v965 = vld [vmem:[#allocation8 + $0xd30] sm:$0xff]
        %v966 = vld [vmem:[#allocation8 + $0xd38] sm:$0xff]
        %v967 = vld [vmem:[#allocation8 + $0xd40] sm:$0xff]
        %v968 = vld [vmem:[#allocation8 + $0xd48] sm:$0xff]
        %v969 = vld [vmem:[#allocation8 + $0xd50] sm:$0xff]
        %v970 = vld [vmem:[#allocation8 + $0xd58] sm:$0xff]
        %v971 = vld [vmem:[#allocation8 + $0xd60] sm:$0xff]
        %v972 = vld [vmem:[#allocation8 + $0xd68] sm:$0xff]
        %v973 = vld [vmem:[#allocation8 + $0xd70] sm:$0xff]
        %v974 = vld [vmem:[#allocation8 + $0xd78] sm:$0xff]
        %v975 = vld [vmem:[#allocation8 + $0xd80] sm:$0xff]
        %v976 = vld [vmem:[#allocation8 + $0xd88] sm:$0xff]
        %v977 = vld [vmem:[#allocation8 + $0xd90] sm:$0xff]
        %v978 = vld [vmem:[#allocation8 + $0xd98] sm:$0xff]
        %v979 = vld [vmem:[#allocation8 + $0xda0] sm:$0xff]
        %v980 = vld [vmem:[#allocation8 + $0xda8] sm:$0xff]
        %v981 = vld [vmem:[#allocation8 + $0xdb0] sm:$0xff]
        %v982 = vld [vmem:[#allocation8 + $0xdb8] sm:$0xff]
        %v983 = vld [vmem:[#allocation8 + $0xdc0] sm:$0xff]
        %v984 = vld [vmem:[#allocation8 + $0xdc8] sm:$0xff]
        %v985 = vld [vmem:[#allocation8 + $0xdd0] sm:$0xff]
        %v986 = vld [vmem:[#allocation8 + $0xdd8] sm:$0xff]
        %v987 = vld [vmem:[#allocation8 + $0xde0] sm:$0xff]
        %v988 = vld [vmem:[#allocation8 + $0xde8] sm:$0xff]
        %v989 = vld [vmem:[#allocation8 + $0xdf0] sm:$0xff]
        %v990 = vld [vmem:[#allocation8 + $0xdf8] sm:$0xff]
        %s991 = sld [smem:[#allocation4]]
        %v992 = vstv %s991
        %v1007 = vunpack.c.l.b16 %v529
        %v1008 = vunpack.c.h.b16 %v529
        %v1009 = vunpack.c.l.b16 %v530
        %v1010 = vunpack.c.h.b16 %v530
        %v1011 = vunpack.c.l.b16 %v531
        %v1012 = vunpack.c.h.b16 %v531
        %v1013 = vunpack.c.l.b16 %v532
        %v1014 = vunpack.c.h.b16 %v532
        %v1015 = vunpack.c.l.b16 %v533
        %v1016 = vunpack.c.h.b16 %v533
        %v1017 = vunpack.c.l.b16 %v534
        %v1018 = vunpack.c.h.b16 %v534
        %v1019 = vunpack.c.l.b16 %v535
        %v1020 = vunpack.c.h.b16 %v535
        %v1021 = vunpack.c.l.b16 %v536
        %v1022 = vunpack.c.h.b16 %v536
        %v1023 = vunpack.c.l.b16 %v537
        %v1024 = vunpack.c.h.b16 %v537
        %v1025 = vunpack.c.l.b16 %v538
        %v1026 = vunpack.c.h.b16 %v538
        %v1027 = vunpack.c.l.b16 %v539
        %v1028 = vunpack.c.h.b16 %v539
        %v1029 = vunpack.c.l.b16 %v540
        %v1030 = vunpack.c.h.b16 %v540
        %v1031 = vunpack.c.l.b16 %v541
        %v1032 = vunpack.c.h.b16 %v541
        %v1033 = vunpack.c.l.b16 %v542
        %v1034 = vunpack.c.h.b16 %v542
        %v1035 = vpack.c.b16 %v1007, %v1007
        %v1036 = vpack.c.b16 %v1008, %v1008
        %v1037 = vpack.c.b16 %v1009, %v1009
        %v1038 = vpack.c.b16 %v1010, %v1010
        %v1039 = vpack.c.b16 %v1011, %v1011
        %v1040 = vpack.c.b16 %v1012, %v1012
        %v1041 = vpack.c.b16 %v1013, %v1013
        %v1042 = vpack.c.b16 %v1014, %v1014
        %v1043 = vpack.c.b16 %v1015, %v1015
        %v1044 = vpack.c.b16 %v1016, %v1016
        %v1045 = vpack.c.b16 %v1017, %v1017
        %v1046 = vpack.c.b16 %v1018, %v1018
        %v1047 = vpack.c.b16 %v1019, %v1019
        %v1048 = vpack.c.b16 %v1020, %v1020
        %v1049 = vpack.c.b16 %v1021, %v1021
        %v1050 = vpack.c.b16 %v1022, %v1022
        %v1051 = vpack.c.b16 %v1023, %v1023
        %v1052 = vpack.c.b16 %v1024, %v1024
        %v1053 = vpack.c.b16 %v1025, %v1025
        %v1054 = vpack.c.b16 %v1026, %v1026
        %v1055 = vpack.c.b16 %v1027, %v1027
        %v1056 = vpack.c.b16 %v1028, %v1028
        %v1057 = vpack.c.b16 %v1029, %v1029
        %v1058 = vpack.c.b16 %v1030, %v1030
        %v1059 = vpack.c.b16 %v1031, %v1031
        %v1060 = vpack.c.b16 %v1032, %v1032
        %v1061 = vpack.c.b16 %v1033, %v1033
        %v1062 = vpack.c.b16 %v1034, %v1034
        %v1539 = vunpack.c.l.b16 %v543
        %v1540 = vunpack.c.h.b16 %v543
        %v1541 = vunpack.c.l.b16 %v544
        %v1542 = vunpack.c.h.b16 %v544
        %v1543 = vunpack.c.l.b16 %v545
        %v1544 = vunpack.c.h.b16 %v545
        %v1545 = vunpack.c.l.b16 %v546
        %v1546 = vunpack.c.h.b16 %v546
        %v1547 = vunpack.c.l.b16 %v547
        %v1548 = vunpack.c.h.b16 %v547
        %v1549 = vunpack.c.l.b16 %v548
        %v1550 = vunpack.c.h.b16 %v548
        %v1551 = vunpack.c.l.b16 %v549
        %v1552 = vunpack.c.h.b16 %v549
        %v1553 = vunpack.c.l.b16 %v550
        %v1554 = vunpack.c.h.b16 %v550
        %v1555 = vunpack.c.l.b16 %v551
        %v1556 = vunpack.c.h.b16 %v551
        %v1557 = vunpack.c.l.b16 %v552
        %v1558 = vunpack.c.h.b16 %v552
        %v1559 = vunpack.c.l.b16 %v553
        %v1560 = vunpack.c.h.b16 %v553
        %v1561 = vunpack.c.l.b16 %v554
        %v1562 = vunpack.c.h.b16 %v554
        %v1563 = vunpack.c.l.b16 %v555
        %v1564 = vunpack.c.h.b16 %v555
        %v1565 = vunpack.c.l.b16 %v556
        %v1566 = vunpack.c.h.b16 %v556
        %v1567 = vunpack.c.l.b16 %v557
        %v1568 = vunpack.c.h.b16 %v557
        %v1569 = vunpack.c.l.b16 %v558
        %v1570 = vunpack.c.h.b16 %v558
        %v1571 = vunpack.c.l.b16 %v559
        %v1572 = vunpack.c.h.b16 %v559
        %v1573 = vunpack.c.l.b16 %v560
        %v1574 = vunpack.c.h.b16 %v560
        %v1575 = vunpack.c.l.b16 %v561
        %v1576 = vunpack.c.h.b16 %v561
        %v1577 = vunpack.c.l.b16 %v562
        %v1578 = vunpack.c.h.b16 %v562
        %v1579 = vunpack.c.l.b16 %v563
        %v1580 = vunpack.c.h.b16 %v563
        %v1581 = vunpack.c.l.b16 %v564
        %v1582 = vunpack.c.h.b16 %v564
        %v1583 = vunpack.c.l.b16 %v565
        %v1584 = vunpack.c.h.b16 %v565
        %v1585 = vunpack.c.l.b16 %v566
        %v1586 = vunpack.c.h.b16 %v566
        %v1587 = vunpack.c.l.b16 %v567
        %v1588 = vunpack.c.h.b16 %v567
        %v1589 = vunpack.c.l.b16 %v568
        %v1590 = vunpack.c.h.b16 %v568
        %v1591 = vunpack.c.l.b16 %v569
        %v1592 = vunpack.c.h.b16 %v569
        %v1593 = vunpack.c.l.b16 %v570
        %v1594 = vunpack.c.h.b16 %v570
        %v1595 = vunpack.c.l.b16 %v571
        %v1596 = vunpack.c.h.b16 %v571
        %v1597 = vunpack.c.l.b16 %v572
        %v1598 = vunpack.c.h.b16 %v572
        %v1599 = vunpack.c.l.b16 %v573
        %v1600 = vunpack.c.h.b16 %v573
        %v1601 = vunpack.c.l.b16 %v574
        %v1602 = vunpack.c.h.b16 %v574
        %v1603 = vunpack.c.l.b16 %v575
        %v1604 = vunpack.c.h.b16 %v575
        %v1605 = vunpack.c.l.b16 %v576
        %v1606 = vunpack.c.h.b16 %v576
        %v1607 = vunpack.c.l.b16 %v577
        %v1608 = vunpack.c.h.b16 %v577
        %v1609 = vunpack.c.l.b16 %v578
        %v1610 = vunpack.c.h.b16 %v578
        %v1611 = vunpack.c.l.b16 %v579
        %v1612 = vunpack.c.h.b16 %v579
        %v1613 = vunpack.c.l.b16 %v580
        %v1614 = vunpack.c.h.b16 %v580
        %v1615 = vunpack.c.l.b16 %v581
        %v1616 = vunpack.c.h.b16 %v581
        %v1617 = vunpack.c.l.b16 %v582
        %v1618 = vunpack.c.h.b16 %v582
        %v1619 = vunpack.c.l.b16 %v583
        %v1620 = vunpack.c.h.b16 %v583
        %v1621 = vunpack.c.l.b16 %v584
        %v1622 = vunpack.c.h.b16 %v584
        %v1623 = vunpack.c.l.b16 %v585
        %v1624 = vunpack.c.h.b16 %v585
        %v1625 = vunpack.c.l.b16 %v586
        %v1626 = vunpack.c.h.b16 %v586
        %v1627 = vunpack.c.l.b16 %v587
        %v1628 = vunpack.c.h.b16 %v587
        %v1629 = vunpack.c.l.b16 %v588
        %v1630 = vunpack.c.h.b16 %v588
        %v1631 = vunpack.c.l.b16 %v589
        %v1632 = vunpack.c.h.b16 %v589
        %v1633 = vunpack.c.l.b16 %v590
        %v1634 = vunpack.c.h.b16 %v590
        %v1635 = vunpack.c.l.b16 %v591
        %v1636 = vunpack.c.h.b16 %v591
        %v1637 = vunpack.c.l.b16 %v592
        %v1638 = vunpack.c.h.b16 %v592
        %v1639 = vunpack.c.l.b16 %v593
        %v1640 = vunpack.c.h.b16 %v593
        %v1641 = vunpack.c.l.b16 %v594
        %v1642 = vunpack.c.h.b16 %v594
        %v1643 = vunpack.c.l.b16 %v595
        %v1644 = vunpack.c.h.b16 %v595
        %v1645 = vunpack.c.l.b16 %v596
        %v1646 = vunpack.c.h.b16 %v596
        %v1647 = vunpack.c.l.b16 %v597
        %v1648 = vunpack.c.h.b16 %v597
        %v1649 = vunpack.c.l.b16 %v598
        %v1650 = vunpack.c.h.b16 %v598
        %v1651 = vunpack.c.l.b16 %v599
        %v1652 = vunpack.c.h.b16 %v599
        %v1653 = vunpack.c.l.b16 %v600
        %v1654 = vunpack.c.h.b16 %v600
        %v1655 = vunpack.c.l.b16 %v601
        %v1656 = vunpack.c.h.b16 %v601
        %v1657 = vunpack.c.l.b16 %v602
        %v1658 = vunpack.c.h.b16 %v602
        %v1659 = vunpack.c.l.b16 %v603
        %v1660 = vunpack.c.h.b16 %v603
        %v1661 = vunpack.c.l.b16 %v604
        %v1662 = vunpack.c.h.b16 %v604
        %v1663 = vunpack.c.l.b16 %v605
        %v1664 = vunpack.c.h.b16 %v605
        %v1665 = vunpack.c.l.b16 %v606
        %v1666 = vunpack.c.h.b16 %v606
        %v1667 = vunpack.c.l.b16 %v607
        %v1668 = vunpack.c.h.b16 %v607
        %v1669 = vunpack.c.l.b16 %v608
        %v1670 = vunpack.c.h.b16 %v608
        %v1671 = vunpack.c.l.b16 %v609
        %v1672 = vunpack.c.h.b16 %v609
        %v1673 = vunpack.c.l.b16 %v610
        %v1674 = vunpack.c.h.b16 %v610
        %v1675 = vunpack.c.l.b16 %v611
        %v1676 = vunpack.c.h.b16 %v611
        %v1677 = vunpack.c.l.b16 %v612
        %v1678 = vunpack.c.h.b16 %v612
        %v1679 = vunpack.c.l.b16 %v613
        %v1680 = vunpack.c.h.b16 %v613
        %v1681 = vunpack.c.l.b16 %v614
        %v1682 = vunpack.c.h.b16 %v614
        %v1683 = vunpack.c.l.b16 %v615
        %v1684 = vunpack.c.h.b16 %v615
        %v1685 = vunpack.c.l.b16 %v616
        %v1686 = vunpack.c.h.b16 %v616
        %v1687 = vunpack.c.l.b16 %v617
        %v1688 = vunpack.c.h.b16 %v617
        %v1689 = vunpack.c.l.b16 %v618
        %v1690 = vunpack.c.h.b16 %v618
        %v1691 = vunpack.c.l.b16 %v619
        %v1692 = vunpack.c.h.b16 %v619
        %v1693 = vunpack.c.l.b16 %v620
        %v1694 = vunpack.c.h.b16 %v620
        %v1695 = vunpack.c.l.b16 %v621
        %v1696 = vunpack.c.h.b16 %v621
        %v1697 = vunpack.c.l.b16 %v622
        %v1698 = vunpack.c.h.b16 %v622
        %v1699 = vunpack.c.l.b16 %v623
        %v1700 = vunpack.c.h.b16 %v623
        %v1701 = vunpack.c.l.b16 %v624
        %v1702 = vunpack.c.h.b16 %v624
        %v1703 = vunpack.c.l.b16 %v625
        %v1704 = vunpack.c.h.b16 %v625
        %v1705 = vunpack.c.l.b16 %v626
        %v1706 = vunpack.c.h.b16 %v626
        %v1707 = vunpack.c.l.b16 %v627
        %v1708 = vunpack.c.h.b16 %v627
        %v1709 = vunpack.c.l.b16 %v628
        %v1710 = vunpack.c.h.b16 %v628
        %v1711 = vunpack.c.l.b16 %v629
        %v1712 = vunpack.c.h.b16 %v629
        %v1713 = vunpack.c.l.b16 %v630
        %v1714 = vunpack.c.h.b16 %v630
        %v1715 = vunpack.c.l.b16 %v631
        %v1716 = vunpack.c.h.b16 %v631
        %v1717 = vunpack.c.l.b16 %v632
        %v1718 = vunpack.c.h.b16 %v632
        %v1719 = vunpack.c.l.b16 %v633
        %v1720 = vunpack.c.h.b16 %v633
        %v1721 = vunpack.c.l.b16 %v634
        %v1722 = vunpack.c.h.b16 %v634
        %v1723 = vunpack.c.l.b16 %v635
        %v1724 = vunpack.c.h.b16 %v635
        %v1725 = vunpack.c.l.b16 %v636
        %v1726 = vunpack.c.h.b16 %v636
        %v1727 = vunpack.c.l.b16 %v637
        %v1728 = vunpack.c.h.b16 %v637
        %v1729 = vunpack.c.l.b16 %v638
        %v1730 = vunpack.c.h.b16 %v638
        %v1731 = vunpack.c.l.b16 %v639
        %v1732 = vunpack.c.h.b16 %v639
        %v1733 = vunpack.c.l.b16 %v640
        %v1734 = vunpack.c.h.b16 %v640
        %v1735 = vunpack.c.l.b16 %v641
        %v1736 = vunpack.c.h.b16 %v641
        %v1737 = vunpack.c.l.b16 %v642
        %v1738 = vunpack.c.h.b16 %v642
        %v1739 = vunpack.c.l.b16 %v643
        %v1740 = vunpack.c.h.b16 %v643
        %v1741 = vunpack.c.l.b16 %v644
        %v1742 = vunpack.c.h.b16 %v644
        %v1743 = vunpack.c.l.b16 %v645
        %v1744 = vunpack.c.h.b16 %v645
        %v1745 = vunpack.c.l.b16 %v646
        %v1746 = vunpack.c.h.b16 %v646
        %v1747 = vunpack.c.l.b16 %v647
        %v1748 = vunpack.c.h.b16 %v647
        %v1749 = vunpack.c.l.b16 %v648
        %v1750 = vunpack.c.h.b16 %v648
        %v1751 = vunpack.c.l.b16 %v649
        %v1752 = vunpack.c.h.b16 %v649
        %v1753 = vunpack.c.l.b16 %v650
        %v1754 = vunpack.c.h.b16 %v650
        %v1755 = vunpack.c.l.b16 %v651
        %v1756 = vunpack.c.h.b16 %v651
        %v1757 = vunpack.c.l.b16 %v652
        %v1758 = vunpack.c.h.b16 %v652
        %v1759 = vunpack.c.l.b16 %v653
        %v1760 = vunpack.c.h.b16 %v653
        %v1761 = vunpack.c.l.b16 %v654
        %v1762 = vunpack.c.h.b16 %v654
        %v1763 = vunpack.c.l.b16 %v655
        %v1764 = vunpack.c.h.b16 %v655
        %v1765 = vunpack.c.l.b16 %v656
        %v1766 = vunpack.c.h.b16 %v656
        %v1767 = vunpack.c.l.b16 %v657
        %v1768 = vunpack.c.h.b16 %v657
        %v1769 = vunpack.c.l.b16 %v658
        %v1770 = vunpack.c.h.b16 %v658
        %v1771 = vunpack.c.l.b16 %v659
        %v1772 = vunpack.c.h.b16 %v659
        %v1773 = vunpack.c.l.b16 %v660
        %v1774 = vunpack.c.h.b16 %v660
        %v1775 = vunpack.c.l.b16 %v661
        %v1776 = vunpack.c.h.b16 %v661
        %v1777 = vunpack.c.l.b16 %v662
        %v1778 = vunpack.c.h.b16 %v662
        %v1779 = vunpack.c.l.b16 %v663
        %v1780 = vunpack.c.h.b16 %v663
        %v1781 = vunpack.c.l.b16 %v664
        %v1782 = vunpack.c.h.b16 %v664
        %v1783 = vunpack.c.l.b16 %v665
        %v1784 = vunpack.c.h.b16 %v665
        %v1785 = vunpack.c.l.b16 %v666
        %v1786 = vunpack.c.h.b16 %v666
        %v1787 = vunpack.c.l.b16 %v667
        %v1788 = vunpack.c.h.b16 %v667
        %v1789 = vunpack.c.l.b16 %v668
        %v1790 = vunpack.c.h.b16 %v668
        %v1791 = vunpack.c.l.b16 %v669
        %v1792 = vunpack.c.h.b16 %v669
        %v1793 = vunpack.c.l.b16 %v670
        %v1794 = vunpack.c.h.b16 %v670
        %v1795 = vunpack.c.l.b16 %v671
        %v1796 = vunpack.c.h.b16 %v671
        %v1797 = vunpack.c.l.b16 %v672
        %v1798 = vunpack.c.h.b16 %v672
        %v1799 = vunpack.c.l.b16 %v673
        %v1800 = vunpack.c.h.b16 %v673
        %v1801 = vunpack.c.l.b16 %v674
        %v1802 = vunpack.c.h.b16 %v674
        %v1803 = vunpack.c.l.b16 %v675
        %v1804 = vunpack.c.h.b16 %v675
        %v1805 = vunpack.c.l.b16 %v676
        %v1806 = vunpack.c.h.b16 %v676
        %v1807 = vunpack.c.l.b16 %v677
        %v1808 = vunpack.c.h.b16 %v677
        %v1809 = vunpack.c.l.b16 %v678
        %v1810 = vunpack.c.h.b16 %v678
        %v1811 = vunpack.c.l.b16 %v679
        %v1812 = vunpack.c.h.b16 %v679
        %v1813 = vunpack.c.l.b16 %v680
        %v1814 = vunpack.c.h.b16 %v680
        %v1815 = vunpack.c.l.b16 %v681
        %v1816 = vunpack.c.h.b16 %v681
        %v1817 = vunpack.c.l.b16 %v682
        %v1818 = vunpack.c.h.b16 %v682
        %v1819 = vunpack.c.l.b16 %v683
        %v1820 = vunpack.c.h.b16 %v683
        %v1821 = vunpack.c.l.b16 %v684
        %v1822 = vunpack.c.h.b16 %v684
        %v1823 = vunpack.c.l.b16 %v685
        %v1824 = vunpack.c.h.b16 %v685
        %v1825 = vunpack.c.l.b16 %v686
        %v1826 = vunpack.c.h.b16 %v686
        %v1827 = vunpack.c.l.b16 %v687
        %v1828 = vunpack.c.h.b16 %v687
        %v1829 = vunpack.c.l.b16 %v688
        %v1830 = vunpack.c.h.b16 %v688
        %v1831 = vunpack.c.l.b16 %v689
        %v1832 = vunpack.c.h.b16 %v689
        %v1833 = vunpack.c.l.b16 %v690
        %v1834 = vunpack.c.h.b16 %v690
        %v1835 = vunpack.c.l.b16 %v691
        %v1836 = vunpack.c.h.b16 %v691
        %v1837 = vunpack.c.l.b16 %v692
        %v1838 = vunpack.c.h.b16 %v692
        %v1839 = vunpack.c.l.b16 %v693
        %v1840 = vunpack.c.h.b16 %v693
        %v1841 = vunpack.c.l.b16 %v694
        %v1842 = vunpack.c.h.b16 %v694
        %v1843 = vunpack.c.l.b16 %v695
        %v1844 = vunpack.c.h.b16 %v695
        %v1845 = vunpack.c.l.b16 %v696
        %v1846 = vunpack.c.h.b16 %v696
        %v1847 = vunpack.c.l.b16 %v697
        %v1848 = vunpack.c.h.b16 %v697
        %v1849 = vunpack.c.l.b16 %v698
        %v1850 = vunpack.c.h.b16 %v698
        %v1851 = vunpack.c.l.b16 %v699
        %v1852 = vunpack.c.h.b16 %v699
        %v1853 = vunpack.c.l.b16 %v700
        %v1854 = vunpack.c.h.b16 %v700
        %v1855 = vunpack.c.l.b16 %v701
        %v1856 = vunpack.c.h.b16 %v701
        %v1857 = vunpack.c.l.b16 %v702
        %v1858 = vunpack.c.h.b16 %v702
        %v1859 = vunpack.c.l.b16 %v703
        %v1860 = vunpack.c.h.b16 %v703
        %v1861 = vunpack.c.l.b16 %v704
        %v1862 = vunpack.c.h.b16 %v704
        %v1863 = vunpack.c.l.b16 %v705
        %v1864 = vunpack.c.h.b16 %v705
        %v1865 = vunpack.c.l.b16 %v706
        %v1866 = vunpack.c.h.b16 %v706
        %v1867 = vunpack.c.l.b16 %v707
        %v1868 = vunpack.c.h.b16 %v707
        %v1869 = vunpack.c.l.b16 %v708
        %v1870 = vunpack.c.h.b16 %v708
        %v1871 = vunpack.c.l.b16 %v709
        %v1872 = vunpack.c.h.b16 %v709
        %v1873 = vunpack.c.l.b16 %v710
        %v1874 = vunpack.c.h.b16 %v710
        %v1875 = vunpack.c.l.b16 %v711
        %v1876 = vunpack.c.h.b16 %v711
        %v1877 = vunpack.c.l.b16 %v712
        %v1878 = vunpack.c.h.b16 %v712
        %v1879 = vunpack.c.l.b16 %v713
        %v1880 = vunpack.c.h.b16 %v713
        %v1881 = vunpack.c.l.b16 %v714
        %v1882 = vunpack.c.h.b16 %v714
        %v1883 = vunpack.c.l.b16 %v715
        %v1884 = vunpack.c.h.b16 %v715
        %v1885 = vunpack.c.l.b16 %v716
        %v1886 = vunpack.c.h.b16 %v716
        %v1887 = vunpack.c.l.b16 %v717
        %v1888 = vunpack.c.h.b16 %v717
        %v1889 = vunpack.c.l.b16 %v718
        %v1890 = vunpack.c.h.b16 %v718
        %v1891 = vunpack.c.l.b16 %v719
        %v1892 = vunpack.c.h.b16 %v719
        %v1893 = vunpack.c.l.b16 %v720
        %v1894 = vunpack.c.h.b16 %v720
        %v1895 = vunpack.c.l.b16 %v721
        %v1896 = vunpack.c.h.b16 %v721
        %v1897 = vunpack.c.l.b16 %v722
        %v1898 = vunpack.c.h.b16 %v722
        %v1899 = vunpack.c.l.b16 %v723
        %v1900 = vunpack.c.h.b16 %v723
        %v1901 = vunpack.c.l.b16 %v724
        %v1902 = vunpack.c.h.b16 %v724
        %v1903 = vunpack.c.l.b16 %v725
        %v1904 = vunpack.c.h.b16 %v725
        %v1905 = vunpack.c.l.b16 %v726
        %v1906 = vunpack.c.h.b16 %v726
        %v1907 = vunpack.c.l.b16 %v727
        %v1908 = vunpack.c.h.b16 %v727
        %v1909 = vunpack.c.l.b16 %v728
        %v1910 = vunpack.c.h.b16 %v728
        %v1911 = vunpack.c.l.b16 %v729
        %v1912 = vunpack.c.h.b16 %v729
        %v1913 = vunpack.c.l.b16 %v730
        %v1914 = vunpack.c.h.b16 %v730
        %v1915 = vunpack.c.l.b16 %v731
        %v1916 = vunpack.c.h.b16 %v731
        %v1917 = vunpack.c.l.b16 %v732
        %v1918 = vunpack.c.h.b16 %v732
        %v1919 = vunpack.c.l.b16 %v733
        %v1920 = vunpack.c.h.b16 %v733
        %v1921 = vunpack.c.l.b16 %v734
        %v1922 = vunpack.c.h.b16 %v734
        %v1923 = vunpack.c.l.b16 %v735
        %v1924 = vunpack.c.h.b16 %v735
        %v1925 = vunpack.c.l.b16 %v736
        %v1926 = vunpack.c.h.b16 %v736
        %v1927 = vunpack.c.l.b16 %v737
        %v1928 = vunpack.c.h.b16 %v737
        %v1929 = vunpack.c.l.b16 %v738
        %v1930 = vunpack.c.h.b16 %v738
        %v1931 = vunpack.c.l.b16 %v739
        %v1932 = vunpack.c.h.b16 %v739
        %v1933 = vunpack.c.l.b16 %v740
        %v1934 = vunpack.c.h.b16 %v740
        %v1935 = vunpack.c.l.b16 %v741
        %v1936 = vunpack.c.h.b16 %v741
        %v1937 = vunpack.c.l.b16 %v742
        %v1938 = vunpack.c.h.b16 %v742
        %v1939 = vunpack.c.l.b16 %v743
        %v1940 = vunpack.c.h.b16 %v743
        %v1941 = vunpack.c.l.b16 %v744
        %v1942 = vunpack.c.h.b16 %v744
        %v1943 = vunpack.c.l.b16 %v745
        %v1944 = vunpack.c.h.b16 %v745
        %v1945 = vunpack.c.l.b16 %v746
        %v1946 = vunpack.c.h.b16 %v746
        %v1947 = vunpack.c.l.b16 %v747
        %v1948 = vunpack.c.h.b16 %v747
        %v1949 = vunpack.c.l.b16 %v748
        %v1950 = vunpack.c.h.b16 %v748
        %v1951 = vunpack.c.l.b16 %v749
        %v1952 = vunpack.c.h.b16 %v749
        %v1953 = vunpack.c.l.b16 %v750
        %v1954 = vunpack.c.h.b16 %v750
        %v1955 = vunpack.c.l.b16 %v751
        %v1956 = vunpack.c.h.b16 %v751
        %v1957 = vunpack.c.l.b16 %v752
        %v1958 = vunpack.c.h.b16 %v752
        %v1959 = vunpack.c.l.b16 %v753
        %v1960 = vunpack.c.h.b16 %v753
        %v1961 = vunpack.c.l.b16 %v754
        %v1962 = vunpack.c.h.b16 %v754
        %v1963 = vunpack.c.l.b16 %v755
        %v1964 = vunpack.c.h.b16 %v755
        %v1965 = vunpack.c.l.b16 %v756
        %v1966 = vunpack.c.h.b16 %v756
        %v1967 = vunpack.c.l.b16 %v757
        %v1968 = vunpack.c.h.b16 %v757
        %v1969 = vunpack.c.l.b16 %v758
        %v1970 = vunpack.c.h.b16 %v758
        %v1971 = vunpack.c.l.b16 %v759
        %v1972 = vunpack.c.h.b16 %v759
        %v1973 = vunpack.c.l.b16 %v760
        %v1974 = vunpack.c.h.b16 %v760
        %v1975 = vunpack.c.l.b16 %v761
        %v1976 = vunpack.c.h.b16 %v761
        %v1977 = vunpack.c.l.b16 %v762
        %v1978 = vunpack.c.h.b16 %v762
        %v1979 = vunpack.c.l.b16 %v763
        %v1980 = vunpack.c.h.b16 %v763
        %v1981 = vunpack.c.l.b16 %v764
        %v1982 = vunpack.c.h.b16 %v764
        %v1983 = vunpack.c.l.b16 %v765
        %v1984 = vunpack.c.h.b16 %v765
        %v1985 = vunpack.c.l.b16 %v766
        %v1986 = vunpack.c.h.b16 %v766
        %v1987 = vunpack.c.l.b16 %v767
        %v1988 = vunpack.c.h.b16 %v767
        %v1989 = vunpack.c.l.b16 %v768
        %v1990 = vunpack.c.h.b16 %v768
        %v1991 = vunpack.c.l.b16 %v769
        %v1992 = vunpack.c.h.b16 %v769
        %v1993 = vunpack.c.l.b16 %v770
        %v1994 = vunpack.c.h.b16 %v770
        %v1995 = vunpack.c.l.b16 %v771
        %v1996 = vunpack.c.h.b16 %v771
        %v1997 = vunpack.c.l.b16 %v772
        %v1998 = vunpack.c.h.b16 %v772
        %v1999 = vunpack.c.l.b16 %v773
        %v2000 = vunpack.c.h.b16 %v773
        %v2001 = vunpack.c.l.b16 %v774
        %v2002 = vunpack.c.h.b16 %v774
        %v2003 = vunpack.c.l.b16 %v775
        %v2004 = vunpack.c.h.b16 %v775
        %v2005 = vunpack.c.l.b16 %v776
        %v2006 = vunpack.c.h.b16 %v776
        %v2007 = vunpack.c.l.b16 %v777
        %v2008 = vunpack.c.h.b16 %v777
        %v2009 = vunpack.c.l.b16 %v778
        %v2010 = vunpack.c.h.b16 %v778
        %v2011 = vunpack.c.l.b16 %v779
        %v2012 = vunpack.c.h.b16 %v779
        %v2013 = vunpack.c.l.b16 %v780
        %v2014 = vunpack.c.h.b16 %v780
        %v2015 = vunpack.c.l.b16 %v781
        %v2016 = vunpack.c.h.b16 %v781
        %v2017 = vunpack.c.l.b16 %v782
        %v2018 = vunpack.c.h.b16 %v782
        %v2019 = vunpack.c.l.b16 %v783
        %v2020 = vunpack.c.h.b16 %v783
        %v2021 = vunpack.c.l.b16 %v784
        %v2022 = vunpack.c.h.b16 %v784
        %v2023 = vunpack.c.l.b16 %v785
        %v2024 = vunpack.c.h.b16 %v785
        %v2025 = vunpack.c.l.b16 %v786
        %v2026 = vunpack.c.h.b16 %v786
        %v2027 = vunpack.c.l.b16 %v787
        %v2028 = vunpack.c.h.b16 %v787
        %v2029 = vunpack.c.l.b16 %v788
        %v2030 = vunpack.c.h.b16 %v788
        %v2031 = vunpack.c.l.b16 %v789
        %v2032 = vunpack.c.h.b16 %v789
        %v2033 = vunpack.c.l.b16 %v790
        %v2034 = vunpack.c.h.b16 %v790
        %v2035 = vunpack.c.l.b16 %v791
        %v2036 = vunpack.c.h.b16 %v791
        %v2037 = vunpack.c.l.b16 %v792
        %v2038 = vunpack.c.h.b16 %v792
        %v2039 = vunpack.c.l.b16 %v793
        %v2040 = vunpack.c.h.b16 %v793
        %v2041 = vunpack.c.l.b16 %v794
        %v2042 = vunpack.c.h.b16 %v794
        %v2043 = vunpack.c.l.b16 %v795
        %v2044 = vunpack.c.h.b16 %v795
        %v2045 = vunpack.c.l.b16 %v796
        %v2046 = vunpack.c.h.b16 %v796
        %v2047 = vunpack.c.l.b16 %v797
        %v2048 = vunpack.c.h.b16 %v797
        %v2049 = vunpack.c.l.b16 %v798
        %v2050 = vunpack.c.h.b16 %v798
        %v2051 = vunpack.c.l.b16 %v799
        %v2052 = vunpack.c.h.b16 %v799
        %v2053 = vunpack.c.l.b16 %v800
        %v2054 = vunpack.c.h.b16 %v800
        %v2055 = vunpack.c.l.b16 %v801
        %v2056 = vunpack.c.h.b16 %v801
        %v2057 = vunpack.c.l.b16 %v802
        %v2058 = vunpack.c.h.b16 %v802
        %v2059 = vunpack.c.l.b16 %v803
        %v2060 = vunpack.c.h.b16 %v803
        %v2061 = vunpack.c.l.b16 %v804
        %v2062 = vunpack.c.h.b16 %v804
        %v2063 = vunpack.c.l.b16 %v805
        %v2064 = vunpack.c.h.b16 %v805
        %v2065 = vunpack.c.l.b16 %v806
        %v2066 = vunpack.c.h.b16 %v806
        %v2067 = vunpack.c.l.b16 %v807
        %v2068 = vunpack.c.h.b16 %v807
        %v2069 = vunpack.c.l.b16 %v808
        %v2070 = vunpack.c.h.b16 %v808
        %v2071 = vunpack.c.l.b16 %v809
        %v2072 = vunpack.c.h.b16 %v809
        %v2073 = vunpack.c.l.b16 %v810
        %v2074 = vunpack.c.h.b16 %v810
        %v2075 = vunpack.c.l.b16 %v811
        %v2076 = vunpack.c.h.b16 %v811
        %v2077 = vunpack.c.l.b16 %v812
        %v2078 = vunpack.c.h.b16 %v812
        %v2079 = vunpack.c.l.b16 %v813
        %v2080 = vunpack.c.h.b16 %v813
        %v2081 = vunpack.c.l.b16 %v814
        %v2082 = vunpack.c.h.b16 %v814
        %v2083 = vunpack.c.l.b16 %v815
        %v2084 = vunpack.c.h.b16 %v815
        %v2085 = vunpack.c.l.b16 %v816
        %v2086 = vunpack.c.h.b16 %v816
        %v2087 = vunpack.c.l.b16 %v817
        %v2088 = vunpack.c.h.b16 %v817
        %v2089 = vunpack.c.l.b16 %v818
        %v2090 = vunpack.c.h.b16 %v818
        %v2091 = vunpack.c.l.b16 %v819
        %v2092 = vunpack.c.h.b16 %v819
        %v2093 = vunpack.c.l.b16 %v820
        %v2094 = vunpack.c.h.b16 %v820
        %v2095 = vunpack.c.l.b16 %v821
        %v2096 = vunpack.c.h.b16 %v821
        %v2097 = vunpack.c.l.b16 %v822
        %v2098 = vunpack.c.h.b16 %v822
        %v2099 = vunpack.c.l.b16 %v823
        %v2100 = vunpack.c.h.b16 %v823
        %v2101 = vunpack.c.l.b16 %v824
        %v2102 = vunpack.c.h.b16 %v824
        %v2103 = vunpack.c.l.b16 %v825
        %v2104 = vunpack.c.h.b16 %v825
        %v2105 = vunpack.c.l.b16 %v826
        %v2106 = vunpack.c.h.b16 %v826
        %v2107 = vunpack.c.l.b16 %v827
        %v2108 = vunpack.c.h.b16 %v827
        %v2109 = vunpack.c.l.b16 %v828
        %v2110 = vunpack.c.h.b16 %v828
        %v2111 = vunpack.c.l.b16 %v829
        %v2112 = vunpack.c.h.b16 %v829
        %v2113 = vunpack.c.l.b16 %v830
        %v2114 = vunpack.c.h.b16 %v830
        %v2115 = vunpack.c.l.b16 %v831
        %v2116 = vunpack.c.h.b16 %v831
        %v2117 = vunpack.c.l.b16 %v832
        %v2118 = vunpack.c.h.b16 %v832
        %v2119 = vunpack.c.l.b16 %v833
        %v2120 = vunpack.c.h.b16 %v833
        %v2121 = vunpack.c.l.b16 %v834
        %v2122 = vunpack.c.h.b16 %v834
        %v2123 = vunpack.c.l.b16 %v835
        %v2124 = vunpack.c.h.b16 %v835
        %v2125 = vunpack.c.l.b16 %v836
        %v2126 = vunpack.c.h.b16 %v836
        %v2127 = vunpack.c.l.b16 %v837
        %v2128 = vunpack.c.h.b16 %v837
        %v2129 = vunpack.c.l.b16 %v838
        %v2130 = vunpack.c.h.b16 %v838
        %v2131 = vunpack.c.l.b16 %v839
        %v2132 = vunpack.c.h.b16 %v839
        %v2133 = vunpack.c.l.b16 %v840
        %v2134 = vunpack.c.h.b16 %v840
        %v2135 = vunpack.c.l.b16 %v841
        %v2136 = vunpack.c.h.b16 %v841
        %v2137 = vunpack.c.l.b16 %v842
        %v2138 = vunpack.c.h.b16 %v842
        %v2139 = vunpack.c.l.b16 %v843
        %v2140 = vunpack.c.h.b16 %v843
        %v2141 = vunpack.c.l.b16 %v844
        %v2142 = vunpack.c.h.b16 %v844
        %v2143 = vunpack.c.l.b16 %v845
        %v2144 = vunpack.c.h.b16 %v845
        %v2145 = vunpack.c.l.b16 %v846
        %v2146 = vunpack.c.h.b16 %v846
        %v2147 = vunpack.c.l.b16 %v847
        %v2148 = vunpack.c.h.b16 %v847
        %v2149 = vunpack.c.l.b16 %v848
        %v2150 = vunpack.c.h.b16 %v848
        %v2151 = vunpack.c.l.b16 %v849
        %v2152 = vunpack.c.h.b16 %v849
        %v2153 = vunpack.c.l.b16 %v850
        %v2154 = vunpack.c.h.b16 %v850
        %v2155 = vunpack.c.l.b16 %v851
        %v2156 = vunpack.c.h.b16 %v851
        %v2157 = vunpack.c.l.b16 %v852
        %v2158 = vunpack.c.h.b16 %v852
        %v2159 = vunpack.c.l.b16 %v853
        %v2160 = vunpack.c.h.b16 %v853
        %v2161 = vunpack.c.l.b16 %v854
        %v2162 = vunpack.c.h.b16 %v854
        %v2163 = vunpack.c.l.b16 %v855
        %v2164 = vunpack.c.h.b16 %v855
        %v2165 = vunpack.c.l.b16 %v856
        %v2166 = vunpack.c.h.b16 %v856
        %v2167 = vunpack.c.l.b16 %v857
        %v2168 = vunpack.c.h.b16 %v857
        %v2169 = vunpack.c.l.b16 %v858
        %v2170 = vunpack.c.h.b16 %v858
        %v2171 = vunpack.c.l.b16 %v859
        %v2172 = vunpack.c.h.b16 %v859
        %v2173 = vunpack.c.l.b16 %v860
        %v2174 = vunpack.c.h.b16 %v860
        %v2175 = vunpack.c.l.b16 %v861
        %v2176 = vunpack.c.h.b16 %v861
        %v2177 = vunpack.c.l.b16 %v862
        %v2178 = vunpack.c.h.b16 %v862
        %v2179 = vunpack.c.l.b16 %v863
        %v2180 = vunpack.c.h.b16 %v863
        %v2181 = vunpack.c.l.b16 %v864
        %v2182 = vunpack.c.h.b16 %v864
        %v2183 = vunpack.c.l.b16 %v865
        %v2184 = vunpack.c.h.b16 %v865
        %v2185 = vunpack.c.l.b16 %v866
        %v2186 = vunpack.c.h.b16 %v866
        %v2187 = vunpack.c.l.b16 %v867
        %v2188 = vunpack.c.h.b16 %v867
        %v2189 = vunpack.c.l.b16 %v868
        %v2190 = vunpack.c.h.b16 %v868
        %v2191 = vunpack.c.l.b16 %v869
        %v2192 = vunpack.c.h.b16 %v869
        %v2193 = vunpack.c.l.b16 %v870
        %v2194 = vunpack.c.h.b16 %v870
        %v2195 = vunpack.c.l.b16 %v871
        %v2196 = vunpack.c.h.b16 %v871
        %v2197 = vunpack.c.l.b16 %v872
        %v2198 = vunpack.c.h.b16 %v872
        %v2199 = vunpack.c.l.b16 %v873
        %v2200 = vunpack.c.h.b16 %v873
        %v2201 = vunpack.c.l.b16 %v874
        %v2202 = vunpack.c.h.b16 %v874
        %v2203 = vunpack.c.l.b16 %v875
        %v2204 = vunpack.c.h.b16 %v875
        %v2205 = vunpack.c.l.b16 %v876
        %v2206 = vunpack.c.h.b16 %v876
        %v2207 = vunpack.c.l.b16 %v877
        %v2208 = vunpack.c.h.b16 %v877
        %v2209 = vunpack.c.l.b16 %v878
        %v2210 = vunpack.c.h.b16 %v878
        %v2211 = vunpack.c.l.b16 %v879
        %v2212 = vunpack.c.h.b16 %v879
        %v2213 = vunpack.c.l.b16 %v880
        %v2214 = vunpack.c.h.b16 %v880
        %v2215 = vunpack.c.l.b16 %v881
        %v2216 = vunpack.c.h.b16 %v881
        %v2217 = vunpack.c.l.b16 %v882
        %v2218 = vunpack.c.h.b16 %v882
        %v2219 = vunpack.c.l.b16 %v883
        %v2220 = vunpack.c.h.b16 %v883
        %v2221 = vunpack.c.l.b16 %v884
        %v2222 = vunpack.c.h.b16 %v884
        %v2223 = vunpack.c.l.b16 %v885
        %v2224 = vunpack.c.h.b16 %v885
        %v2225 = vunpack.c.l.b16 %v886
        %v2226 = vunpack.c.h.b16 %v886
        %v2227 = vunpack.c.l.b16 %v887
        %v2228 = vunpack.c.h.b16 %v887
        %v2229 = vunpack.c.l.b16 %v888
        %v2230 = vunpack.c.h.b16 %v888
        %v2231 = vunpack.c.l.b16 %v889
        %v2232 = vunpack.c.h.b16 %v889
        %v2233 = vunpack.c.l.b16 %v890
        %v2234 = vunpack.c.h.b16 %v890
        %v2235 = vunpack.c.l.b16 %v891
        %v2236 = vunpack.c.h.b16 %v891
        %v2237 = vunpack.c.l.b16 %v892
        %v2238 = vunpack.c.h.b16 %v892
        %v2239 = vunpack.c.l.b16 %v893
        %v2240 = vunpack.c.h.b16 %v893
        %v2241 = vunpack.c.l.b16 %v894
        %v2242 = vunpack.c.h.b16 %v894
        %v2243 = vunpack.c.l.b16 %v895
        %v2244 = vunpack.c.h.b16 %v895
        %v2245 = vunpack.c.l.b16 %v896
        %v2246 = vunpack.c.h.b16 %v896
        %v2247 = vunpack.c.l.b16 %v897
        %v2248 = vunpack.c.h.b16 %v897
        %v2249 = vunpack.c.l.b16 %v898
        %v2250 = vunpack.c.h.b16 %v898
        %v2251 = vunpack.c.l.b16 %v899
        %v2252 = vunpack.c.h.b16 %v899
        %v2253 = vunpack.c.l.b16 %v900
        %v2254 = vunpack.c.h.b16 %v900
        %v2255 = vunpack.c.l.b16 %v901
        %v2256 = vunpack.c.h.b16 %v901
        %v2257 = vunpack.c.l.b16 %v902
        %v2258 = vunpack.c.h.b16 %v902
        %v2259 = vunpack.c.l.b16 %v903
        %v2260 = vunpack.c.h.b16 %v903
        %v2261 = vunpack.c.l.b16 %v904
        %v2262 = vunpack.c.h.b16 %v904
        %v2263 = vunpack.c.l.b16 %v905
        %v2264 = vunpack.c.h.b16 %v905
        %v2265 = vunpack.c.l.b16 %v906
        %v2266 = vunpack.c.h.b16 %v906
        %v2267 = vunpack.c.l.b16 %v907
        %v2268 = vunpack.c.h.b16 %v907
        %v2269 = vunpack.c.l.b16 %v908
        %v2270 = vunpack.c.h.b16 %v908
        %v2271 = vunpack.c.l.b16 %v909
        %v2272 = vunpack.c.h.b16 %v909
        %v2273 = vunpack.c.l.b16 %v910
        %v2274 = vunpack.c.h.b16 %v910
        %v2275 = vunpack.c.l.b16 %v911
        %v2276 = vunpack.c.h.b16 %v911
        %v2277 = vunpack.c.l.b16 %v912
        %v2278 = vunpack.c.h.b16 %v912
        %v2279 = vunpack.c.l.b16 %v913
        %v2280 = vunpack.c.h.b16 %v913
        %v2281 = vunpack.c.l.b16 %v914
        %v2282 = vunpack.c.h.b16 %v914
        %v2283 = vunpack.c.l.b16 %v915
        %v2284 = vunpack.c.h.b16 %v915
        %v2285 = vunpack.c.l.b16 %v916
        %v2286 = vunpack.c.h.b16 %v916
        %v2287 = vunpack.c.l.b16 %v917
        %v2288 = vunpack.c.h.b16 %v917
        %v2289 = vunpack.c.l.b16 %v918
        %v2290 = vunpack.c.h.b16 %v918
        %v2291 = vunpack.c.l.b16 %v919
        %v2292 = vunpack.c.h.b16 %v919
        %v2293 = vunpack.c.l.b16 %v920
        %v2294 = vunpack.c.h.b16 %v920
        %v2295 = vunpack.c.l.b16 %v921
        %v2296 = vunpack.c.h.b16 %v921
        %v2297 = vunpack.c.l.b16 %v922
        %v2298 = vunpack.c.h.b16 %v922
        %v2299 = vunpack.c.l.b16 %v923
        %v2300 = vunpack.c.h.b16 %v923
        %v2301 = vunpack.c.l.b16 %v924
        %v2302 = vunpack.c.h.b16 %v924
        %v2303 = vunpack.c.l.b16 %v925
        %v2304 = vunpack.c.h.b16 %v925
        %v2305 = vunpack.c.l.b16 %v926
        %v2306 = vunpack.c.h.b16 %v926
        %v2307 = vunpack.c.l.b16 %v927
        %v2308 = vunpack.c.h.b16 %v927
        %v2309 = vunpack.c.l.b16 %v928
        %v2310 = vunpack.c.h.b16 %v928
        %v2311 = vunpack.c.l.b16 %v929
        %v2312 = vunpack.c.h.b16 %v929
        %v2313 = vunpack.c.l.b16 %v930
        %v2314 = vunpack.c.h.b16 %v930
        %v2315 = vunpack.c.l.b16 %v931
        %v2316 = vunpack.c.h.b16 %v931
        %v2317 = vunpack.c.l.b16 %v932
        %v2318 = vunpack.c.h.b16 %v932
        %v2319 = vunpack.c.l.b16 %v933
        %v2320 = vunpack.c.h.b16 %v933
        %v2321 = vunpack.c.l.b16 %v934
        %v2322 = vunpack.c.h.b16 %v934
        %v2323 = vunpack.c.l.b16 %v935
        %v2324 = vunpack.c.h.b16 %v935
        %v2325 = vunpack.c.l.b16 %v936
        %v2326 = vunpack.c.h.b16 %v936
        %v2327 = vunpack.c.l.b16 %v937
        %v2328 = vunpack.c.h.b16 %v937
        %v2329 = vunpack.c.l.b16 %v938
        %v2330 = vunpack.c.h.b16 %v938
        %v2331 = vunpack.c.l.b16 %v939
        %v2332 = vunpack.c.h.b16 %v939
        %v2333 = vunpack.c.l.b16 %v940
        %v2334 = vunpack.c.h.b16 %v940
        %v2335 = vunpack.c.l.b16 %v941
        %v2336 = vunpack.c.h.b16 %v941
        %v2337 = vunpack.c.l.b16 %v942
        %v2338 = vunpack.c.h.b16 %v942
        %v2339 = vunpack.c.l.b16 %v943
        %v2340 = vunpack.c.h.b16 %v943
        %v2341 = vunpack.c.l.b16 %v944
        %v2342 = vunpack.c.h.b16 %v944
        %v2343 = vunpack.c.l.b16 %v945
        %v2344 = vunpack.c.h.b16 %v945
        %v2345 = vunpack.c.l.b16 %v946
        %v2346 = vunpack.c.h.b16 %v946
        %v2347 = vunpack.c.l.b16 %v947
        %v2348 = vunpack.c.h.b16 %v947
        %v2349 = vunpack.c.l.b16 %v948
        %v2350 = vunpack.c.h.b16 %v948
        %v2351 = vunpack.c.l.b16 %v949
        %v2352 = vunpack.c.h.b16 %v949
        %v2353 = vunpack.c.l.b16 %v950
        %v2354 = vunpack.c.h.b16 %v950
        %v2355 = vunpack.c.l.b16 %v951
        %v2356 = vunpack.c.h.b16 %v951
        %v2357 = vunpack.c.l.b16 %v952
        %v2358 = vunpack.c.h.b16 %v952
        %v2359 = vunpack.c.l.b16 %v953
        %v2360 = vunpack.c.h.b16 %v953
        %v2361 = vunpack.c.l.b16 %v954
        %v2362 = vunpack.c.h.b16 %v954
        %v2363 = vunpack.c.l.b16 %v955
        %v2364 = vunpack.c.h.b16 %v955
        %v2365 = vunpack.c.l.b16 %v956
        %v2366 = vunpack.c.h.b16 %v956
        %v2367 = vunpack.c.l.b16 %v957
        %v2368 = vunpack.c.h.b16 %v957
        %v2369 = vunpack.c.l.b16 %v958
        %v2370 = vunpack.c.h.b16 %v958
        %v2371 = vunpack.c.l.b16 %v959
        %v2372 = vunpack.c.h.b16 %v959
        %v2373 = vunpack.c.l.b16 %v960
        %v2374 = vunpack.c.h.b16 %v960
        %v2375 = vunpack.c.l.b16 %v961
        %v2376 = vunpack.c.h.b16 %v961
        %v2377 = vunpack.c.l.b16 %v962
        %v2378 = vunpack.c.h.b16 %v962
        %v2379 = vunpack.c.l.b16 %v963
        %v2380 = vunpack.c.h.b16 %v963
        %v2381 = vunpack.c.l.b16 %v964
        %v2382 = vunpack.c.h.b16 %v964
        %v2383 = vunpack.c.l.b16 %v965
        %v2384 = vunpack.c.h.b16 %v965
        %v2385 = vunpack.c.l.b16 %v966
        %v2386 = vunpack.c.h.b16 %v966
        %v2387 = vunpack.c.l.b16 %v967
        %v2388 = vunpack.c.h.b16 %v967
        %v2389 = vunpack.c.l.b16 %v968
        %v2390 = vunpack.c.h.b16 %v968
        %v2391 = vunpack.c.l.b16 %v969
        %v2392 = vunpack.c.h.b16 %v969
        %v2393 = vunpack.c.l.b16 %v970
        %v2394 = vunpack.c.h.b16 %v970
        %v2395 = vunpack.c.l.b16 %v971
        %v2396 = vunpack.c.h.b16 %v971
        %v2397 = vunpack.c.l.b16 %v972
        %v2398 = vunpack.c.h.b16 %v972
        %v2399 = vunpack.c.l.b16 %v973
        %v2400 = vunpack.c.h.b16 %v973
        %v2401 = vunpack.c.l.b16 %v974
        %v2402 = vunpack.c.h.b16 %v974
        %v2403 = vunpack.c.l.b16 %v975
        %v2404 = vunpack.c.h.b16 %v975
        %v2405 = vunpack.c.l.b16 %v976
        %v2406 = vunpack.c.h.b16 %v976
        %v2407 = vunpack.c.l.b16 %v977
        %v2408 = vunpack.c.h.b16 %v977
        %v2409 = vunpack.c.l.b16 %v978
        %v2410 = vunpack.c.h.b16 %v978
        %v2411 = vunpack.c.l.b16 %v979
        %v2412 = vunpack.c.h.b16 %v979
        %v2413 = vunpack.c.l.b16 %v980
        %v2414 = vunpack.c.h.b16 %v980
        %v2415 = vunpack.c.l.b16 %v981
        %v2416 = vunpack.c.h.b16 %v981
        %v2417 = vunpack.c.l.b16 %v982
        %v2418 = vunpack.c.h.b16 %v982
        %v2419 = vunpack.c.l.b16 %v983
        %v2420 = vunpack.c.h.b16 %v983
        %v2421 = vunpack.c.l.b16 %v984
        %v2422 = vunpack.c.h.b16 %v984
        %v2423 = vunpack.c.l.b16 %v985
        %v2424 = vunpack.c.h.b16 %v985
        %v2425 = vunpack.c.l.b16 %v986
        %v2426 = vunpack.c.h.b16 %v986
        %v2427 = vunpack.c.l.b16 %v987
        %v2428 = vunpack.c.h.b16 %v987
        %v2429 = vunpack.c.l.b16 %v988
        %v2430 = vunpack.c.h.b16 %v988
        %v2431 = vunpack.c.l.b16 %v989
        %v2432 = vunpack.c.h.b16 %v989
        %v2433 = vunpack.c.l.b16 %v990
        %v2434 = vunpack.c.h.b16 %v990
        %v2435 = vpack.c.b16 %v1541, %v1539
        %v2436 = vpack.c.b16 %v1542, %v1540
        %v2437 = vpack.c.b16 %v1545, %v1543
        %v2438 = vpack.c.b16 %v1546, %v1544
        %v2439 = vpack.c.b16 %v1549, %v1547
        %v2440 = vpack.c.b16 %v1550, %v1548
        %v2441 = vpack.c.b16 %v1553, %v1551
        %v2442 = vpack.c.b16 %v1554, %v1552
        %v2443 = vpack.c.b16 %v1557, %v1555
        %v2444 = vpack.c.b16 %v1558, %v1556
        %v2445 = vpack.c.b16 %v1561, %v1559
        %v2446 = vpack.c.b16 %v1562, %v1560
        %v2447 = vpack.c.b16 %v1565, %v1563
        %v2448 = vpack.c.b16 %v1566, %v1564
        %v2449 = vpack.c.b16 %v1569, %v1567
        %v2450 = vpack.c.b16 %v1570, %v1568
        %v2451 = vpack.c.b16 %v1573, %v1571
        %v2452 = vpack.c.b16 %v1574, %v1572
        %v2453 = vpack.c.b16 %v1577, %v1575
        %v2454 = vpack.c.b16 %v1578, %v1576
        %v2455 = vpack.c.b16 %v1581, %v1579
        %v2456 = vpack.c.b16 %v1582, %v1580
        %v2457 = vpack.c.b16 %v1585, %v1583
        %v2458 = vpack.c.b16 %v1586, %v1584
        %v2459 = vpack.c.b16 %v1589, %v1587
        %v2460 = vpack.c.b16 %v1590, %v1588
        %v2461 = vpack.c.b16 %v1593, %v1591
        %v2462 = vpack.c.b16 %v1594, %v1592
        %v2463 = vpack.c.b16 %v1597, %v1595
        %v2464 = vpack.c.b16 %v1598, %v1596
        %v2465 = vpack.c.b16 %v1601, %v1599
        %v2466 = vpack.c.b16 %v1602, %v1600
        %v2467 = vpack.c.b16 %v1605, %v1603
        %v2468 = vpack.c.b16 %v1606, %v1604
        %v2469 = vpack.c.b16 %v1609, %v1607
        %v2470 = vpack.c.b16 %v1610, %v1608
        %v2471 = vpack.c.b16 %v1613, %v1611
        %v2472 = vpack.c.b16 %v1614, %v1612
        %v2473 = vpack.c.b16 %v1617, %v1615
        %v2474 = vpack.c.b16 %v1618, %v1616
        %v2475 = vpack.c.b16 %v1621, %v1619
        %v2476 = vpack.c.b16 %v1622, %v1620
        %v2477 = vpack.c.b16 %v1625, %v1623
        %v2478 = vpack.c.b16 %v1626, %v1624
        %v2479 = vpack.c.b16 %v1629, %v1627
        %v2480 = vpack.c.b16 %v1630, %v1628
        %v2481 = vpack.c.b16 %v1633, %v1631
        %v2482 = vpack.c.b16 %v1634, %v1632
        %v2483 = vpack.c.b16 %v1637, %v1635
        %v2484 = vpack.c.b16 %v1638, %v1636
        %v2485 = vpack.c.b16 %v1641, %v1639
        %v2486 = vpack.c.b16 %v1642, %v1640
        %v2487 = vpack.c.b16 %v1645, %v1643
        %v2488 = vpack.c.b16 %v1646, %v1644
        %v2489 = vpack.c.b16 %v1649, %v1647
        %v2490 = vpack.c.b16 %v1650, %v1648
        %v2491 = vpack.c.b16 %v1653, %v1651
        %v2492 = vpack.c.b16 %v1654, %v1652
        %v2493 = vpack.c.b16 %v1657, %v1655
        %v2494 = vpack.c.b16 %v1658, %v1656
        %v2495 = vpack.c.b16 %v1661, %v1659
        %v2496 = vpack.c.b16 %v1662, %v1660
        %v2497 = vpack.c.b16 %v1665, %v1663
        %v2498 = vpack.c.b16 %v1666, %v1664
        %v2499 = vpack.c.b16 %v1669, %v1667
        %v2500 = vpack.c.b16 %v1670, %v1668
        %v2501 = vpack.c.b16 %v1673, %v1671
        %v2502 = vpack.c.b16 %v1674, %v1672
        %v2503 = vpack.c.b16 %v1677, %v1675
        %v2504 = vpack.c.b16 %v1678, %v1676
        %v2505 = vpack.c.b16 %v1681, %v1679
        %v2506 = vpack.c.b16 %v1682, %v1680
        %v2507 = vpack.c.b16 %v1685, %v1683
        %v2508 = vpack.c.b16 %v1686, %v1684
        %v2509 = vpack.c.b16 %v1689, %v1687
        %v2510 = vpack.c.b16 %v1690, %v1688
        %v2511 = vpack.c.b16 %v1693, %v1691
        %v2512 = vpack.c.b16 %v1694, %v1692
        %v2513 = vpack.c.b16 %v1697, %v1695
        %v2514 = vpack.c.b16 %v1698, %v1696
        %v2515 = vpack.c.b16 %v1701, %v1699
        %v2516 = vpack.c.b16 %v1702, %v1700
        %v2517 = vpack.c.b16 %v1705, %v1703
        %v2518 = vpack.c.b16 %v1706, %v1704
        %v2519 = vpack.c.b16 %v1709, %v1707
        %v2520 = vpack.c.b16 %v1710, %v1708
        %v2521 = vpack.c.b16 %v1713, %v1711
        %v2522 = vpack.c.b16 %v1714, %v1712
        %v2523 = vpack.c.b16 %v1717, %v1715
        %v2524 = vpack.c.b16 %v1718, %v1716
        %v2525 = vpack.c.b16 %v1721, %v1719
        %v2526 = vpack.c.b16 %v1722, %v1720
        %v2527 = vpack.c.b16 %v1725, %v1723
        %v2528 = vpack.c.b16 %v1726, %v1724
        %v2529 = vpack.c.b16 %v1729, %v1727
        %v2530 = vpack.c.b16 %v1730, %v1728
        %v2531 = vpack.c.b16 %v1733, %v1731
        %v2532 = vpack.c.b16 %v1734, %v1732
        %v2533 = vpack.c.b16 %v1737, %v1735
        %v2534 = vpack.c.b16 %v1738, %v1736
        %v2535 = vpack.c.b16 %v1741, %v1739
        %v2536 = vpack.c.b16 %v1742, %v1740
        %v2537 = vpack.c.b16 %v1745, %v1743
        %v2538 = vpack.c.b16 %v1746, %v1744
        %v2539 = vpack.c.b16 %v1749, %v1747
        %v2540 = vpack.c.b16 %v1750, %v1748
        %v2541 = vpack.c.b16 %v1753, %v1751
        %v2542 = vpack.c.b16 %v1754, %v1752
        %v2543 = vpack.c.b16 %v1757, %v1755
        %v2544 = vpack.c.b16 %v1758, %v1756
        %v2545 = vpack.c.b16 %v1761, %v1759
        %v2546 = vpack.c.b16 %v1762, %v1760
        %v2547 = vpack.c.b16 %v1765, %v1763
        %v2548 = vpack.c.b16 %v1766, %v1764
        %v2549 = vpack.c.b16 %v1769, %v1767
        %v2550 = vpack.c.b16 %v1770, %v1768
        %v2551 = vpack.c.b16 %v1773, %v1771
        %v2552 = vpack.c.b16 %v1774, %v1772
        %v2553 = vpack.c.b16 %v1777, %v1775
        %v2554 = vpack.c.b16 %v1778, %v1776
        %v2555 = vpack.c.b16 %v1781, %v1779
        %v2556 = vpack.c.b16 %v1782, %v1780
        %v2557 = vpack.c.b16 %v1785, %v1783
        %v2558 = vpack.c.b16 %v1786, %v1784
        %v2559 = vpack.c.b16 %v1789, %v1787
        %v2560 = vpack.c.b16 %v1790, %v1788
        %v2561 = vpack.c.b16 %v1793, %v1791
        %v2562 = vpack.c.b16 %v1794, %v1792
        %v2563 = vpack.c.b16 %v1797, %v1795
        %v2564 = vpack.c.b16 %v1798, %v1796
        %v2565 = vpack.c.b16 %v1801, %v1799
        %v2566 = vpack.c.b16 %v1802, %v1800
        %v2567 = vpack.c.b16 %v1805, %v1803
        %v2568 = vpack.c.b16 %v1806, %v1804
        %v2569 = vpack.c.b16 %v1809, %v1807
        %v2570 = vpack.c.b16 %v1810, %v1808
        %v2571 = vpack.c.b16 %v1813, %v1811
        %v2572 = vpack.c.b16 %v1814, %v1812
        %v2573 = vpack.c.b16 %v1817, %v1815
        %v2574 = vpack.c.b16 %v1818, %v1816
        %v2575 = vpack.c.b16 %v1821, %v1819
        %v2576 = vpack.c.b16 %v1822, %v1820
        %v2577 = vpack.c.b16 %v1825, %v1823
        %v2578 = vpack.c.b16 %v1826, %v1824
        %v2579 = vpack.c.b16 %v1829, %v1827
        %v2580 = vpack.c.b16 %v1830, %v1828
        %v2581 = vpack.c.b16 %v1833, %v1831
        %v2582 = vpack.c.b16 %v1834, %v1832
        %v2583 = vpack.c.b16 %v1837, %v1835
        %v2584 = vpack.c.b16 %v1838, %v1836
        %v2585 = vpack.c.b16 %v1841, %v1839
        %v2586 = vpack.c.b16 %v1842, %v1840
        %v2587 = vpack.c.b16 %v1845, %v1843
        %v2588 = vpack.c.b16 %v1846, %v1844
        %v2589 = vpack.c.b16 %v1849, %v1847
        %v2590 = vpack.c.b16 %v1850, %v1848
        %v2591 = vpack.c.b16 %v1853, %v1851
        %v2592 = vpack.c.b16 %v1854, %v1852
        %v2593 = vpack.c.b16 %v1857, %v1855
        %v2594 = vpack.c.b16 %v1858, %v1856
        %v2595 = vpack.c.b16 %v1861, %v1859
        %v2596 = vpack.c.b16 %v1862, %v1860
        %v2597 = vpack.c.b16 %v1865, %v1863
        %v2598 = vpack.c.b16 %v1866, %v1864
        %v2599 = vpack.c.b16 %v1869, %v1867
        %v2600 = vpack.c.b16 %v1870, %v1868
        %v2601 = vpack.c.b16 %v1873, %v1871
        %v2602 = vpack.c.b16 %v1874, %v1872
        %v2603 = vpack.c.b16 %v1877, %v1875
        %v2604 = vpack.c.b16 %v1878, %v1876
        %v2605 = vpack.c.b16 %v1881, %v1879
        %v2606 = vpack.c.b16 %v1882, %v1880
        %v2607 = vpack.c.b16 %v1885, %v1883
        %v2608 = vpack.c.b16 %v1886, %v1884
        %v2609 = vpack.c.b16 %v1889, %v1887
        %v2610 = vpack.c.b16 %v1890, %v1888
        %v2611 = vpack.c.b16 %v1893, %v1891
        %v2612 = vpack.c.b16 %v1894, %v1892
        %v2613 = vpack.c.b16 %v1897, %v1895
        %v2614 = vpack.c.b16 %v1898, %v1896
        %v2615 = vpack.c.b16 %v1901, %v1899
        %v2616 = vpack.c.b16 %v1902, %v1900
        %v2617 = vpack.c.b16 %v1905, %v1903
        %v2618 = vpack.c.b16 %v1906, %v1904
        %v2619 = vpack.c.b16 %v1909, %v1907
        %v2620 = vpack.c.b16 %v1910, %v1908
        %v2621 = vpack.c.b16 %v1913, %v1911
        %v2622 = vpack.c.b16 %v1914, %v1912
        %v2623 = vpack.c.b16 %v1917, %v1915
        %v2624 = vpack.c.b16 %v1918, %v1916
        %v2625 = vpack.c.b16 %v1921, %v1919
        %v2626 = vpack.c.b16 %v1922, %v1920
        %v2627 = vpack.c.b16 %v1925, %v1923
        %v2628 = vpack.c.b16 %v1926, %v1924
        %v2629 = vpack.c.b16 %v1929, %v1927
        %v2630 = vpack.c.b16 %v1930, %v1928
        %v2631 = vpack.c.b16 %v1933, %v1931
        %v2632 = vpack.c.b16 %v1934, %v1932
        %v2633 = vpack.c.b16 %v1937, %v1935
        %v2634 = vpack.c.b16 %v1938, %v1936
        %v2635 = vpack.c.b16 %v1941, %v1939
        %v2636 = vpack.c.b16 %v1942, %v1940
        %v2637 = vpack.c.b16 %v1945, %v1943
        %v2638 = vpack.c.b16 %v1946, %v1944
        %v2639 = vpack.c.b16 %v1949, %v1947
        %v2640 = vpack.c.b16 %v1950, %v1948
        %v2641 = vpack.c.b16 %v1953, %v1951
        %v2642 = vpack.c.b16 %v1954, %v1952
        %v2643 = vpack.c.b16 %v1957, %v1955
        %v2644 = vpack.c.b16 %v1958, %v1956
        %v2645 = vpack.c.b16 %v1961, %v1959
        %v2646 = vpack.c.b16 %v1962, %v1960
        %v2647 = vpack.c.b16 %v1965, %v1963
        %v2648 = vpack.c.b16 %v1966, %v1964
        %v2649 = vpack.c.b16 %v1969, %v1967
        %v2650 = vpack.c.b16 %v1970, %v1968
        %v2651 = vpack.c.b16 %v1973, %v1971
        %v2652 = vpack.c.b16 %v1974, %v1972
        %v2653 = vpack.c.b16 %v1977, %v1975
        %v2654 = vpack.c.b16 %v1978, %v1976
        %v2655 = vpack.c.b16 %v1981, %v1979
        %v2656 = vpack.c.b16 %v1982, %v1980
        %v2657 = vpack.c.b16 %v1985, %v1983
        %v2658 = vpack.c.b16 %v1986, %v1984
        %v2659 = vpack.c.b16 %v1989, %v1987
        %v2660 = vpack.c.b16 %v1990, %v1988
        %v2661 = vpack.c.b16 %v1993, %v1991
        %v2662 = vpack.c.b16 %v1994, %v1992
        %v2663 = vpack.c.b16 %v1997, %v1995
        %v2664 = vpack.c.b16 %v1998, %v1996
        %v2665 = vpack.c.b16 %v2001, %v1999
        %v2666 = vpack.c.b16 %v2002, %v2000
        %v2667 = vpack.c.b16 %v2005, %v2003
        %v2668 = vpack.c.b16 %v2006, %v2004
        %v2669 = vpack.c.b16 %v2009, %v2007
        %v2670 = vpack.c.b16 %v2010, %v2008
        %v2671 = vpack.c.b16 %v2013, %v2011
        %v2672 = vpack.c.b16 %v2014, %v2012
        %v2673 = vpack.c.b16 %v2017, %v2015
        %v2674 = vpack.c.b16 %v2018, %v2016
        %v2675 = vpack.c.b16 %v2021, %v2019
        %v2676 = vpack.c.b16 %v2022, %v2020
        %v2677 = vpack.c.b16 %v2025, %v2023
        %v2678 = vpack.c.b16 %v2026, %v2024
        %v2679 = vpack.c.b16 %v2029, %v2027
        %v2680 = vpack.c.b16 %v2030, %v2028
        %v2681 = vpack.c.b16 %v2033, %v2031
        %v2682 = vpack.c.b16 %v2034, %v2032
        %v2683 = vpack.c.b16 %v2037, %v2035
        %v2684 = vpack.c.b16 %v2038, %v2036
        %v2685 = vpack.c.b16 %v2041, %v2039
        %v2686 = vpack.c.b16 %v2042, %v2040
        %v2687 = vpack.c.b16 %v2045, %v2043
        %v2688 = vpack.c.b16 %v2046, %v2044
        %v2689 = vpack.c.b16 %v2049, %v2047
        %v2690 = vpack.c.b16 %v2050, %v2048
        %v2691 = vpack.c.b16 %v2053, %v2051
        %v2692 = vpack.c.b16 %v2054, %v2052
        %v2693 = vpack.c.b16 %v2057, %v2055
        %v2694 = vpack.c.b16 %v2058, %v2056
        %v2695 = vpack.c.b16 %v2061, %v2059
        %v2696 = vpack.c.b16 %v2062, %v2060
        %v2697 = vpack.c.b16 %v2065, %v2063
        %v2698 = vpack.c.b16 %v2066, %v2064
        %v2699 = vpack.c.b16 %v2069, %v2067
        %v2700 = vpack.c.b16 %v2070, %v2068
        %v2701 = vpack.c.b16 %v2073, %v2071
        %v2702 = vpack.c.b16 %v2074, %v2072
        %v2703 = vpack.c.b16 %v2077, %v2075
        %v2704 = vpack.c.b16 %v2078, %v2076
        %v2705 = vpack.c.b16 %v2081, %v2079
        %v2706 = vpack.c.b16 %v2082, %v2080
        %v2707 = vpack.c.b16 %v2085, %v2083
        %v2708 = vpack.c.b16 %v2086, %v2084
        %v2709 = vpack.c.b16 %v2089, %v2087
        %v2710 = vpack.c.b16 %v2090, %v2088
        %v2711 = vpack.c.b16 %v2093, %v2091
        %v2712 = vpack.c.b16 %v2094, %v2092
        %v2713 = vpack.c.b16 %v2097, %v2095
        %v2714 = vpack.c.b16 %v2098, %v2096
        %v2715 = vpack.c.b16 %v2101, %v2099
        %v2716 = vpack.c.b16 %v2102, %v2100
        %v2717 = vpack.c.b16 %v2105, %v2103
        %v2718 = vpack.c.b16 %v2106, %v2104
        %v2719 = vpack.c.b16 %v2109, %v2107
        %v2720 = vpack.c.b16 %v2110, %v2108
        %v2721 = vpack.c.b16 %v2113, %v2111
        %v2722 = vpack.c.b16 %v2114, %v2112
        %v2723 = vpack.c.b16 %v2117, %v2115
        %v2724 = vpack.c.b16 %v2118, %v2116
        %v2725 = vpack.c.b16 %v2121, %v2119
        %v2726 = vpack.c.b16 %v2122, %v2120
        %v2727 = vpack.c.b16 %v2125, %v2123
        %v2728 = vpack.c.b16 %v2126, %v2124
        %v2729 = vpack.c.b16 %v2129, %v2127
        %v2730 = vpack.c.b16 %v2130, %v2128
        %v2731 = vpack.c.b16 %v2133, %v2131
        %v2732 = vpack.c.b16 %v2134, %v2132
        %v2733 = vpack.c.b16 %v2137, %v2135
        %v2734 = vpack.c.b16 %v2138, %v2136
        %v2735 = vpack.c.b16 %v2141, %v2139
        %v2736 = vpack.c.b16 %v2142, %v2140
        %v2737 = vpack.c.b16 %v2145, %v2143
        %v2738 = vpack.c.b16 %v2146, %v2144
        %v2739 = vpack.c.b16 %v2149, %v2147
        %v2740 = vpack.c.b16 %v2150, %v2148
        %v2741 = vpack.c.b16 %v2153, %v2151
        %v2742 = vpack.c.b16 %v2154, %v2152
        %v2743 = vpack.c.b16 %v2157, %v2155
        %v2744 = vpack.c.b16 %v2158, %v2156
        %v2745 = vpack.c.b16 %v2161, %v2159
        %v2746 = vpack.c.b16 %v2162, %v2160
        %v2747 = vpack.c.b16 %v2165, %v2163
        %v2748 = vpack.c.b16 %v2166, %v2164
        %v2749 = vpack.c.b16 %v2169, %v2167
        %v2750 = vpack.c.b16 %v2170, %v2168
        %v2751 = vpack.c.b16 %v2173, %v2171
        %v2752 = vpack.c.b16 %v2174, %v2172
        %v2753 = vpack.c.b16 %v2177, %v2175
        %v2754 = vpack.c.b16 %v2178, %v2176
        %v2755 = vpack.c.b16 %v2181, %v2179
        %v2756 = vpack.c.b16 %v2182, %v2180
        %v2757 = vpack.c.b16 %v2185, %v2183
        %v2758 = vpack.c.b16 %v2186, %v2184
        %v2759 = vpack.c.b16 %v2189, %v2187
        %v2760 = vpack.c.b16 %v2190, %v2188
        %v2761 = vpack.c.b16 %v2193, %v2191
        %v2762 = vpack.c.b16 %v2194, %v2192
        %v2763 = vpack.c.b16 %v2197, %v2195
        %v2764 = vpack.c.b16 %v2198, %v2196
        %v2765 = vpack.c.b16 %v2201, %v2199
        %v2766 = vpack.c.b16 %v2202, %v2200
        %v2767 = vpack.c.b16 %v2205, %v2203
        %v2768 = vpack.c.b16 %v2206, %v2204
        %v2769 = vpack.c.b16 %v2209, %v2207
        %v2770 = vpack.c.b16 %v2210, %v2208
        %v2771 = vpack.c.b16 %v2213, %v2211
        %v2772 = vpack.c.b16 %v2214, %v2212
        %v2773 = vpack.c.b16 %v2217, %v2215
        %v2774 = vpack.c.b16 %v2218, %v2216
        %v2775 = vpack.c.b16 %v2221, %v2219
        %v2776 = vpack.c.b16 %v2222, %v2220
        %v2777 = vpack.c.b16 %v2225, %v2223
        %v2778 = vpack.c.b16 %v2226, %v2224
        %v2779 = vpack.c.b16 %v2229, %v2227
        %v2780 = vpack.c.b16 %v2230, %v2228
        %v2781 = vpack.c.b16 %v2233, %v2231
        %v2782 = vpack.c.b16 %v2234, %v2232
        %v2783 = vpack.c.b16 %v2237, %v2235
        %v2784 = vpack.c.b16 %v2238, %v2236
        %v2785 = vpack.c.b16 %v2241, %v2239
        %v2786 = vpack.c.b16 %v2242, %v2240
        %v2787 = vpack.c.b16 %v2245, %v2243
        %v2788 = vpack.c.b16 %v2246, %v2244
        %v2789 = vpack.c.b16 %v2249, %v2247
        %v2790 = vpack.c.b16 %v2250, %v2248
        %v2791 = vpack.c.b16 %v2253, %v2251
        %v2792 = vpack.c.b16 %v2254, %v2252
        %v2793 = vpack.c.b16 %v2257, %v2255
        %v2794 = vpack.c.b16 %v2258, %v2256
        %v2795 = vpack.c.b16 %v2261, %v2259
        %v2796 = vpack.c.b16 %v2262, %v2260
        %v2797 = vpack.c.b16 %v2265, %v2263
        %v2798 = vpack.c.b16 %v2266, %v2264
        %v2799 = vpack.c.b16 %v2269, %v2267
        %v2800 = vpack.c.b16 %v2270, %v2268
        %v2801 = vpack.c.b16 %v2273, %v2271
        %v2802 = vpack.c.b16 %v2274, %v2272
        %v2803 = vpack.c.b16 %v2277, %v2275
        %v2804 = vpack.c.b16 %v2278, %v2276
        %v2805 = vpack.c.b16 %v2281, %v2279
        %v2806 = vpack.c.b16 %v2282, %v2280
        %v2807 = vpack.c.b16 %v2285, %v2283
        %v2808 = vpack.c.b16 %v2286, %v2284
        %v2809 = vpack.c.b16 %v2289, %v2287
        %v2810 = vpack.c.b16 %v2290, %v2288
        %v2811 = vpack.c.b16 %v2293, %v2291
        %v2812 = vpack.c.b16 %v2294, %v2292
        %v2813 = vpack.c.b16 %v2297, %v2295
        %v2814 = vpack.c.b16 %v2298, %v2296
        %v2815 = vpack.c.b16 %v2301, %v2299
        %v2816 = vpack.c.b16 %v2302, %v2300
        %v2817 = vpack.c.b16 %v2305, %v2303
        %v2818 = vpack.c.b16 %v2306, %v2304
        %v2819 = vpack.c.b16 %v2309, %v2307
        %v2820 = vpack.c.b16 %v2310, %v2308
        %v2821 = vpack.c.b16 %v2313, %v2311
        %v2822 = vpack.c.b16 %v2314, %v2312
        %v2823 = vpack.c.b16 %v2317, %v2315
        %v2824 = vpack.c.b16 %v2318, %v2316
        %v2825 = vpack.c.b16 %v2321, %v2319
        %v2826 = vpack.c.b16 %v2322, %v2320
        %v2827 = vpack.c.b16 %v2325, %v2323
        %v2828 = vpack.c.b16 %v2326, %v2324
        %v2829 = vpack.c.b16 %v2329, %v2327
        %v2830 = vpack.c.b16 %v2330, %v2328
        %v2831 = vpack.c.b16 %v2333, %v2331
        %v2832 = vpack.c.b16 %v2334, %v2332
        %v2833 = vpack.c.b16 %v2337, %v2335
        %v2834 = vpack.c.b16 %v2338, %v2336
        %v2835 = vpack.c.b16 %v2341, %v2339
        %v2836 = vpack.c.b16 %v2342, %v2340
        %v2837 = vpack.c.b16 %v2345, %v2343
        %v2838 = vpack.c.b16 %v2346, %v2344
        %v2839 = vpack.c.b16 %v2349, %v2347
        %v2840 = vpack.c.b16 %v2350, %v2348
        %v2841 = vpack.c.b16 %v2353, %v2351
        %v2842 = vpack.c.b16 %v2354, %v2352
        %v2843 = vpack.c.b16 %v2357, %v2355
        %v2844 = vpack.c.b16 %v2358, %v2356
        %v2845 = vpack.c.b16 %v2361, %v2359
        %v2846 = vpack.c.b16 %v2362, %v2360
        %v2847 = vpack.c.b16 %v2365, %v2363
        %v2848 = vpack.c.b16 %v2366, %v2364
        %v2849 = vpack.c.b16 %v2369, %v2367
        %v2850 = vpack.c.b16 %v2370, %v2368
        %v2851 = vpack.c.b16 %v2373, %v2371
        %v2852 = vpack.c.b16 %v2374, %v2372
        %v2853 = vpack.c.b16 %v2377, %v2375
        %v2854 = vpack.c.b16 %v2378, %v2376
        %v2855 = vpack.c.b16 %v2381, %v2379
        %v2856 = vpack.c.b16 %v2382, %v2380
        %v2857 = vpack.c.b16 %v2385, %v2383
        %v2858 = vpack.c.b16 %v2386, %v2384
        %v2859 = vpack.c.b16 %v2389, %v2387
        %v2860 = vpack.c.b16 %v2390, %v2388
        %v2861 = vpack.c.b16 %v2393, %v2391
        %v2862 = vpack.c.b16 %v2394, %v2392
        %v2863 = vpack.c.b16 %v2397, %v2395
        %v2864 = vpack.c.b16 %v2398, %v2396
        %v2865 = vpack.c.b16 %v2401, %v2399
        %v2866 = vpack.c.b16 %v2402, %v2400
        %v2867 = vpack.c.b16 %v2405, %v2403
        %v2868 = vpack.c.b16 %v2406, %v2404
        %v2869 = vpack.c.b16 %v2409, %v2407
        %v2870 = vpack.c.b16 %v2410, %v2408
        %v2871 = vpack.c.b16 %v2413, %v2411
        %v2872 = vpack.c.b16 %v2414, %v2412
        %v2873 = vpack.c.b16 %v2417, %v2415
        %v2874 = vpack.c.b16 %v2418, %v2416
        %v2875 = vpack.c.b16 %v2421, %v2419
        %v2876 = vpack.c.b16 %v2422, %v2420
        %v2877 = vpack.c.b16 %v2425, %v2423
        %v2878 = vpack.c.b16 %v2426, %v2424
        %v2879 = vpack.c.b16 %v2429, %v2427
        %v2880 = vpack.c.b16 %v2430, %v2428
        %v2881 = vpack.c.b16 %v2433, %v2431
        %v2882 = vpack.c.b16 %v2434, %v2432
        %3331 = vmatpush.bf16.msra.mxu0 %v2449
        %3332 = vmatpush.bf16.msra.mxu0 %v2447
        %3333 = vmatpush.bf16.msra.mxu0 %v2445
        %3334 = vmatpush.bf16.msra.mxu0 %v2443
        %3335 = vmatpush.bf16.msra.mxu0 %v2441
        %3336 = vmatpush.bf16.msra.mxu0 %v2439
        %3337 = vmatpush.bf16.msra.mxu0 %v2437
        %3338 = vmatpush.bf16.msra.mxu0 %v2435
        %3339 = vmatmul.bf16.gmra.mxu0 %v1035
        %v3340 = vpop.f32.mrf.mxu0
        %v3341 = vadd.f32 %v992, %v3340
        %v3342 = vpop.f32.mrf.mxu0
        %3343 = vdwg.mxu0
        %3344 = vmatpush.bf16.msra.mxu0 %v2465
        %3345 = vmatpush.bf16.msra.mxu0 %v2463
        %3346 = vmatpush.bf16.msra.mxu0 %v2461
        %3347 = vmatpush.bf16.msra.mxu0 %v2459
        %3348 = vmatpush.bf16.msra.mxu0 %v2457
        %3349 = vmatpush.bf16.msra.mxu0 %v2455
        %3350 = vmatpush.bf16.msra.mxu0 %v2453
        %3351 = vmatpush.bf16.msra.mxu0 %v2451
        %3352 = vmatmul.bf16.gmra.mxu0 %v1036
        %v3353 = vpop.f32.mrf.mxu0
        %v3354 = vadd.f32 %v3341, %v3353
        %v3355 = vpop.f32.mrf.mxu0
        %3356 = vdwg.mxu0
        %3357 = vmatpush.bf16.msra.mxu0 %v2481
        %3358 = vmatpush.bf16.msra.mxu0 %v2479
        %3359 = vmatpush.bf16.msra.mxu0 %v2477
        %3360 = vmatpush.bf16.msra.mxu0 %v2475
        %3361 = vmatpush.bf16.msra.mxu0 %v2473
        %3362 = vmatpush.bf16.msra.mxu0 %v2471
        %3363 = vmatpush.bf16.msra.mxu0 %v2469
        %3364 = vmatpush.bf16.msra.mxu0 %v2467
        %3365 = vmatmul.bf16.gmra.mxu0 %v1037
        %v3366 = vpop.f32.mrf.mxu0
        %v3367 = vadd.f32 %v3354, %v3366
        %v3368 = vpop.f32.mrf.mxu0
        %3369 = vdwg.mxu0
        %3370 = vmatpush.bf16.msra.mxu0 %v2497
        %3371 = vmatpush.bf16.msra.mxu0 %v2495
        %3372 = vmatpush.bf16.msra.mxu0 %v2493
        %3373 = vmatpush.bf16.msra.mxu0 %v2491
        %3374 = vmatpush.bf16.msra.mxu0 %v2489
        %3375 = vmatpush.bf16.msra.mxu0 %v2487
        %3376 = vmatpush.bf16.msra.mxu0 %v2485
        %3377 = vmatpush.bf16.msra.mxu0 %v2483
        %3378 = vmatmul.bf16.gmra.mxu0 %v1038
        %v3379 = vpop.f32.mrf.mxu0
        %v3380 = vadd.f32 %v3367, %v3379
        %v3381 = vpop.f32.mrf.mxu0
        %3382 = vdwg.mxu0
        %3383 = vmatpush.bf16.msra.mxu0 %v2513
        %3384 = vmatpush.bf16.msra.mxu0 %v2511
        %3385 = vmatpush.bf16.msra.mxu0 %v2509
        %3386 = vmatpush.bf16.msra.mxu0 %v2507
        %3387 = vmatpush.bf16.msra.mxu0 %v2505
        %3388 = vmatpush.bf16.msra.mxu0 %v2503
        %3389 = vmatpush.bf16.msra.mxu0 %v2501
        %3390 = vmatpush.bf16.msra.mxu0 %v2499
        %3391 = vmatmul.bf16.gmra.mxu0 %v1039
        %v3392 = vpop.f32.mrf.mxu0
        %v3393 = vadd.f32 %v3380, %v3392
        %v3394 = vpop.f32.mrf.mxu0
        %3395 = vdwg.mxu0
        %3396 = vmatpush.bf16.msra.mxu0 %v2529
        %3397 = vmatpush.bf16.msra.mxu0 %v2527
        %3398 = vmatpush.bf16.msra.mxu0 %v2525
        %3399 = vmatpush.bf16.msra.mxu0 %v2523
        %3400 = vmatpush.bf16.msra.mxu0 %v2521
        %3401 = vmatpush.bf16.msra.mxu0 %v2519
        %3402 = vmatpush.bf16.msra.mxu0 %v2517
        %3403 = vmatpush.bf16.msra.mxu0 %v2515
        %3404 = vmatmul.bf16.gmra.mxu0 %v1040
        %v3405 = vpop.f32.mrf.mxu0
        %v3406 = vadd.f32 %v3393, %v3405
        %v3407 = vpop.f32.mrf.mxu0
        %3408 = vdwg.mxu0
        %3409 = vmatpush.bf16.msra.mxu0 %v2545
        %3410 = vmatpush.bf16.msra.mxu0 %v2543
        %3411 = vmatpush.bf16.msra.mxu0 %v2541
        %3412 = vmatpush.bf16.msra.mxu0 %v2539
        %3413 = vmatpush.bf16.msra.mxu0 %v2537
        %3414 = vmatpush.bf16.msra.mxu0 %v2535
        %3415 = vmatpush.bf16.msra.mxu0 %v2533
        %3416 = vmatpush.bf16.msra.mxu0 %v2531
        %3417 = vmatmul.bf16.gmra.mxu0 %v1041
        %v3418 = vpop.f32.mrf.mxu0
        %v3419 = vadd.f32 %v3406, %v3418
        %v3420 = vpop.f32.mrf.mxu0
        %3421 = vdwg.mxu0
        %3422 = vmatpush.bf16.msra.mxu0 %v2561
        %3423 = vmatpush.bf16.msra.mxu0 %v2559
        %3424 = vmatpush.bf16.msra.mxu0 %v2557
        %3425 = vmatpush.bf16.msra.mxu0 %v2555
        %3426 = vmatpush.bf16.msra.mxu0 %v2553
        %3427 = vmatpush.bf16.msra.mxu0 %v2551
        %3428 = vmatpush.bf16.msra.mxu0 %v2549
        %3429 = vmatpush.bf16.msra.mxu0 %v2547
        %3430 = vmatmul.bf16.gmra.mxu0 %v1042
        %v3431 = vpop.f32.mrf.mxu0
        %v3432 = vadd.f32 %v3419, %v3431
        %v3433 = vpop.f32.mrf.mxu0
        %3434 = vdwg.mxu0
        %3435 = vmatpush.bf16.msra.mxu0 %v2577
        %3436 = vmatpush.bf16.msra.mxu0 %v2575
        %3437 = vmatpush.bf16.msra.mxu0 %v2573
        %3438 = vmatpush.bf16.msra.mxu0 %v2571
        %3439 = vmatpush.bf16.msra.mxu0 %v2569
        %3440 = vmatpush.bf16.msra.mxu0 %v2567
        %3441 = vmatpush.bf16.msra.mxu0 %v2565
        %3442 = vmatpush.bf16.msra.mxu0 %v2563
        %3443 = vmatmul.bf16.gmra.mxu0 %v1043
        %v3444 = vpop.f32.mrf.mxu0
        %v3445 = vadd.f32 %v3432, %v3444
        %v3446 = vpop.f32.mrf.mxu0
        %3447 = vdwg.mxu0
        %3448 = vmatpush.bf16.msra.mxu0 %v2593
        %3449 = vmatpush.bf16.msra.mxu0 %v2591
        %3450 = vmatpush.bf16.msra.mxu0 %v2589
        %3451 = vmatpush.bf16.msra.mxu0 %v2587
        %3452 = vmatpush.bf16.msra.mxu0 %v2585
        %3453 = vmatpush.bf16.msra.mxu0 %v2583
        %3454 = vmatpush.bf16.msra.mxu0 %v2581
        %3455 = vmatpush.bf16.msra.mxu0 %v2579
        %3456 = vmatmul.bf16.gmra.mxu0 %v1044
        %v3457 = vpop.f32.mrf.mxu0
        %v3458 = vadd.f32 %v3445, %v3457
        %v3459 = vpop.f32.mrf.mxu0
        %3460 = vdwg.mxu0
        %3461 = vmatpush.bf16.msra.mxu0 %v2609
        %3462 = vmatpush.bf16.msra.mxu0 %v2607
        %3463 = vmatpush.bf16.msra.mxu0 %v2605
        %3464 = vmatpush.bf16.msra.mxu0 %v2603
        %3465 = vmatpush.bf16.msra.mxu0 %v2601
        %3466 = vmatpush.bf16.msra.mxu0 %v2599
        %3467 = vmatpush.bf16.msra.mxu0 %v2597
        %3468 = vmatpush.bf16.msra.mxu0 %v2595
        %3469 = vmatmul.bf16.gmra.mxu0 %v1045
        %v3470 = vpop.f32.mrf.mxu0
        %v3471 = vadd.f32 %v3458, %v3470
        %v3472 = vpop.f32.mrf.mxu0
        %3473 = vdwg.mxu0
        %3474 = vmatpush.bf16.msra.mxu0 %v2625
        %3475 = vmatpush.bf16.msra.mxu0 %v2623
        %3476 = vmatpush.bf16.msra.mxu0 %v2621
        %3477 = vmatpush.bf16.msra.mxu0 %v2619
        %3478 = vmatpush.bf16.msra.mxu0 %v2617
        %3479 = vmatpush.bf16.msra.mxu0 %v2615
        %3480 = vmatpush.bf16.msra.mxu0 %v2613
        %3481 = vmatpush.bf16.msra.mxu0 %v2611
        %3482 = vmatmul.bf16.gmra.mxu0 %v1046
        %v3483 = vpop.f32.mrf.mxu0
        %v3484 = vadd.f32 %v3471, %v3483
        %v3485 = vpop.f32.mrf.mxu0
        %3486 = vdwg.mxu0
        %3487 = vmatpush.bf16.msra.mxu0 %v2641
        %3488 = vmatpush.bf16.msra.mxu0 %v2639
        %3489 = vmatpush.bf16.msra.mxu0 %v2637
        %3490 = vmatpush.bf16.msra.mxu0 %v2635
        %3491 = vmatpush.bf16.msra.mxu0 %v2633
        %3492 = vmatpush.bf16.msra.mxu0 %v2631
        %3493 = vmatpush.bf16.msra.mxu0 %v2629
        %3494 = vmatpush.bf16.msra.mxu0 %v2627
        %3495 = vmatmul.bf16.gmra.mxu0 %v1047
        %v3496 = vpop.f32.mrf.mxu0
        %v3497 = vadd.f32 %v3484, %v3496
        %v3498 = vpop.f32.mrf.mxu0
        %3499 = vdwg.mxu0
        %3500 = vmatpush.bf16.msra.mxu0 %v2657
        %3501 = vmatpush.bf16.msra.mxu0 %v2655
        %3502 = vmatpush.bf16.msra.mxu0 %v2653
        %3503 = vmatpush.bf16.msra.mxu0 %v2651
        %3504 = vmatpush.bf16.msra.mxu0 %v2649
        %3505 = vmatpush.bf16.msra.mxu0 %v2647
        %3506 = vmatpush.bf16.msra.mxu0 %v2645
        %3507 = vmatpush.bf16.msra.mxu0 %v2643
        %3508 = vmatmul.bf16.gmra.mxu0 %v1048
        %v3509 = vpop.f32.mrf.mxu0
        %v3510 = vadd.f32 %v3497, %v3509
        %v3511 = vpop.f32.mrf.mxu0
        %3512 = vdwg.mxu0
        %3513 = vmatpush.bf16.msra.mxu0 %v2673
        %3514 = vmatpush.bf16.msra.mxu0 %v2671
        %3515 = vmatpush.bf16.msra.mxu0 %v2669
        %3516 = vmatpush.bf16.msra.mxu0 %v2667
        %3517 = vmatpush.bf16.msra.mxu0 %v2665
        %3518 = vmatpush.bf16.msra.mxu0 %v2663
        %3519 = vmatpush.bf16.msra.mxu0 %v2661
        %3520 = vmatpush.bf16.msra.mxu0 %v2659
        %3521 = vmatmul.bf16.gmra.mxu0 %v1049
        %v3522 = vpop.f32.mrf.mxu0
        %v3523 = vadd.f32 %v3510, %v3522
        %v3524 = vpop.f32.mrf.mxu0
        %3525 = vdwg.mxu0
        %3526 = vmatpush.bf16.msra.mxu0 %v2689
        %3527 = vmatpush.bf16.msra.mxu0 %v2687
        %3528 = vmatpush.bf16.msra.mxu0 %v2685
        %3529 = vmatpush.bf16.msra.mxu0 %v2683
        %3530 = vmatpush.bf16.msra.mxu0 %v2681
        %3531 = vmatpush.bf16.msra.mxu0 %v2679
        %3532 = vmatpush.bf16.msra.mxu0 %v2677
        %3533 = vmatpush.bf16.msra.mxu0 %v2675
        %3534 = vmatmul.bf16.gmra.mxu0 %v1050
        %v3535 = vpop.f32.mrf.mxu0
        %v3536 = vadd.f32 %v3523, %v3535
        %v3537 = vpop.f32.mrf.mxu0
        %3538 = vdwg.mxu0
        %3539 = vmatpush.bf16.msra.mxu0 %v2705
        %3540 = vmatpush.bf16.msra.mxu0 %v2703
        %3541 = vmatpush.bf16.msra.mxu0 %v2701
        %3542 = vmatpush.bf16.msra.mxu0 %v2699
        %3543 = vmatpush.bf16.msra.mxu0 %v2697
        %3544 = vmatpush.bf16.msra.mxu0 %v2695
        %3545 = vmatpush.bf16.msra.mxu0 %v2693
        %3546 = vmatpush.bf16.msra.mxu0 %v2691
        %3547 = vmatmul.bf16.gmra.mxu0 %v1051
        %v3548 = vpop.f32.mrf.mxu0
        %v3549 = vadd.f32 %v3536, %v3548
        %v3550 = vpop.f32.mrf.mxu0
        %3551 = vdwg.mxu0
        %3552 = vmatpush.bf16.msra.mxu0 %v2721
        %3553 = vmatpush.bf16.msra.mxu0 %v2719
        %3554 = vmatpush.bf16.msra.mxu0 %v2717
        %3555 = vmatpush.bf16.msra.mxu0 %v2715
        %3556 = vmatpush.bf16.msra.mxu0 %v2713
        %3557 = vmatpush.bf16.msra.mxu0 %v2711
        %3558 = vmatpush.bf16.msra.mxu0 %v2709
        %3559 = vmatpush.bf16.msra.mxu0 %v2707
        %3560 = vmatmul.bf16.gmra.mxu0 %v1052
        %v3561 = vpop.f32.mrf.mxu0
        %v3562 = vadd.f32 %v3549, %v3561
        %v3563 = vpop.f32.mrf.mxu0
        %3564 = vdwg.mxu0
        %3565 = vmatpush.bf16.msra.mxu0 %v2737
        %3566 = vmatpush.bf16.msra.mxu0 %v2735
        %3567 = vmatpush.bf16.msra.mxu0 %v2733
        %3568 = vmatpush.bf16.msra.mxu0 %v2731
        %3569 = vmatpush.bf16.msra.mxu0 %v2729
        %3570 = vmatpush.bf16.msra.mxu0 %v2727
        %3571 = vmatpush.bf16.msra.mxu0 %v2725
        %3572 = vmatpush.bf16.msra.mxu0 %v2723
        %3573 = vmatmul.bf16.gmra.mxu0 %v1053
        %v3574 = vpop.f32.mrf.mxu0
        %v3575 = vadd.f32 %v3562, %v3574
        %v3576 = vpop.f32.mrf.mxu0
        %3577 = vdwg.mxu0
        %3578 = vmatpush.bf16.msra.mxu0 %v2753
        %3579 = vmatpush.bf16.msra.mxu0 %v2751
        %3580 = vmatpush.bf16.msra.mxu0 %v2749
        %3581 = vmatpush.bf16.msra.mxu0 %v2747
        %3582 = vmatpush.bf16.msra.mxu0 %v2745
        %3583 = vmatpush.bf16.msra.mxu0 %v2743
        %3584 = vmatpush.bf16.msra.mxu0 %v2741
        %3585 = vmatpush.bf16.msra.mxu0 %v2739
        %3586 = vmatmul.bf16.gmra.mxu0 %v1054
        %v3587 = vpop.f32.mrf.mxu0
        %v3588 = vadd.f32 %v3575, %v3587
        %v3589 = vpop.f32.mrf.mxu0
        %3590 = vdwg.mxu0
        %3591 = vmatpush.bf16.msra.mxu0 %v2769
        %3592 = vmatpush.bf16.msra.mxu0 %v2767
        %3593 = vmatpush.bf16.msra.mxu0 %v2765
        %3594 = vmatpush.bf16.msra.mxu0 %v2763
        %3595 = vmatpush.bf16.msra.mxu0 %v2761
        %3596 = vmatpush.bf16.msra.mxu0 %v2759
        %3597 = vmatpush.bf16.msra.mxu0 %v2757
        %3598 = vmatpush.bf16.msra.mxu0 %v2755
        %3599 = vmatmul.bf16.gmra.mxu0 %v1055
        %v3600 = vpop.f32.mrf.mxu0
        %v3601 = vadd.f32 %v3588, %v3600
        %v3602 = vpop.f32.mrf.mxu0
        %3603 = vdwg.mxu0
        %3604 = vmatpush.bf16.msra.mxu0 %v2785
        %3605 = vmatpush.bf16.msra.mxu0 %v2783
        %3606 = vmatpush.bf16.msra.mxu0 %v2781
        %3607 = vmatpush.bf16.msra.mxu0 %v2779
        %3608 = vmatpush.bf16.msra.mxu0 %v2777
        %3609 = vmatpush.bf16.msra.mxu0 %v2775
        %3610 = vmatpush.bf16.msra.mxu0 %v2773
        %3611 = vmatpush.bf16.msra.mxu0 %v2771
        %3612 = vmatmul.bf16.gmra.mxu0 %v1056
        %v3613 = vpop.f32.mrf.mxu0
        %v3614 = vadd.f32 %v3601, %v3613
        %v3615 = vpop.f32.mrf.mxu0
        %3616 = vdwg.mxu0
        %3617 = vmatpush.bf16.msra.mxu0 %v2801
        %3618 = vmatpush.bf16.msra.mxu0 %v2799
        %3619 = vmatpush.bf16.msra.mxu0 %v2797
        %3620 = vmatpush.bf16.msra.mxu0 %v2795
        %3621 = vmatpush.bf16.msra.mxu0 %v2793
        %3622 = vmatpush.bf16.msra.mxu0 %v2791
        %3623 = vmatpush.bf16.msra.mxu0 %v2789
        %3624 = vmatpush.bf16.msra.mxu0 %v2787
        %3625 = vmatmul.bf16.gmra.mxu0 %v1057
        %v3626 = vpop.f32.mrf.mxu0
        %v3627 = vadd.f32 %v3614, %v3626
        %v3628 = vpop.f32.mrf.mxu0
        %3629 = vdwg.mxu0
        %3630 = vmatpush.bf16.msra.mxu0 %v2817
        %3631 = vmatpush.bf16.msra.mxu0 %v2815
        %3632 = vmatpush.bf16.msra.mxu0 %v2813
        %3633 = vmatpush.bf16.msra.mxu0 %v2811
        %3634 = vmatpush.bf16.msra.mxu0 %v2809
        %3635 = vmatpush.bf16.msra.mxu0 %v2807
        %3636 = vmatpush.bf16.msra.mxu0 %v2805
        %3637 = vmatpush.bf16.msra.mxu0 %v2803
        %3638 = vmatmul.bf16.gmra.mxu0 %v1058
        %v3639 = vpop.f32.mrf.mxu0
        %v3640 = vadd.f32 %v3627, %v3639
        %v3641 = vpop.f32.mrf.mxu0
        %3642 = vdwg.mxu0
        %3643 = vmatpush.bf16.msra.mxu0 %v2833
        %3644 = vmatpush.bf16.msra.mxu0 %v2831
        %3645 = vmatpush.bf16.msra.mxu0 %v2829
        %3646 = vmatpush.bf16.msra.mxu0 %v2827
        %3647 = vmatpush.bf16.msra.mxu0 %v2825
        %3648 = vmatpush.bf16.msra.mxu0 %v2823
        %3649 = vmatpush.bf16.msra.mxu0 %v2821
        %3650 = vmatpush.bf16.msra.mxu0 %v2819
        %3651 = vmatmul.bf16.gmra.mxu0 %v1059
        %v3652 = vpop.f32.mrf.mxu0
        %v3653 = vadd.f32 %v3640, %v3652
        %v3654 = vpop.f32.mrf.mxu0
        %3655 = vdwg.mxu0
        %3656 = vmatpush.bf16.msra.mxu0 %v2849
        %3657 = vmatpush.bf16.msra.mxu0 %v2847
        %3658 = vmatpush.bf16.msra.mxu0 %v2845
        %3659 = vmatpush.bf16.msra.mxu0 %v2843
        %3660 = vmatpush.bf16.msra.mxu0 %v2841
        %3661 = vmatpush.bf16.msra.mxu0 %v2839
        %3662 = vmatpush.bf16.msra.mxu0 %v2837
        %3663 = vmatpush.bf16.msra.mxu0 %v2835
        %3664 = vmatmul.bf16.gmra.mxu0 %v1060
        %v3665 = vpop.f32.mrf.mxu0
        %v3666 = vadd.f32 %v3653, %v3665
        %v3667 = vpop.f32.mrf.mxu0
        %3668 = vdwg.mxu0
        %3669 = vmatpush.bf16.msra.mxu0 %v2865
        %3670 = vmatpush.bf16.msra.mxu0 %v2863
        %3671 = vmatpush.bf16.msra.mxu0 %v2861
        %3672 = vmatpush.bf16.msra.mxu0 %v2859
        %3673 = vmatpush.bf16.msra.mxu0 %v2857
        %3674 = vmatpush.bf16.msra.mxu0 %v2855
        %3675 = vmatpush.bf16.msra.mxu0 %v2853
        %3676 = vmatpush.bf16.msra.mxu0 %v2851
        %3677 = vmatmul.bf16.gmra.mxu0 %v1061
        %v3678 = vpop.f32.mrf.mxu0
        %v3679 = vadd.f32 %v3666, %v3678
        %v3680 = vpop.f32.mrf.mxu0
        %3681 = vdwg.mxu0
        %3682 = vmatpush.bf16.msra.mxu0 %v2881
        %3683 = vmatpush.bf16.msra.mxu0 %v2879
        %3684 = vmatpush.bf16.msra.mxu0 %v2877
        %3685 = vmatpush.bf16.msra.mxu0 %v2875
        %3686 = vmatpush.bf16.msra.mxu0 %v2873
        %3687 = vmatpush.bf16.msra.mxu0 %v2871
        %3688 = vmatpush.bf16.msra.mxu0 %v2869
        %3689 = vmatpush.bf16.msra.mxu0 %v2867
        %3690 = vmatmul.bf16.gmra.mxu0 %v1062
        %v3691 = vpop.f32.mrf.mxu0
        %v3692 = vadd.f32 %v3679, %v3691
        %v3693 = vpop.f32.mrf.mxu0
        %3694 = vdwg.mxu0
        %3695 = vmatpush.bf16.msra.mxu0 %v2450
        %3696 = vmatpush.bf16.msra.mxu0 %v2448
        %3697 = vmatpush.bf16.msra.mxu0 %v2446
        %3698 = vmatpush.bf16.msra.mxu0 %v2444
        %3699 = vmatpush.bf16.msra.mxu0 %v2442
        %3700 = vmatpush.bf16.msra.mxu0 %v2440
        %3701 = vmatpush.bf16.msra.mxu0 %v2438
        %3702 = vmatpush.bf16.msra.mxu0 %v2436
        %3703 = vmatmul.bf16.gmra.mxu0 %v1035
        %v3704 = vpop.f32.mrf.mxu0
        %v3705 = vadd.f32 %v992, %v3704
        %v3706 = vpop.f32.mrf.mxu0
        %3707 = vdwg.mxu0
        %3708 = vmatpush.bf16.msra.mxu0 %v2466
        %3709 = vmatpush.bf16.msra.mxu0 %v2464
        %3710 = vmatpush.bf16.msra.mxu0 %v2462
        %3711 = vmatpush.bf16.msra.mxu0 %v2460
        %3712 = vmatpush.bf16.msra.mxu0 %v2458
        %3713 = vmatpush.bf16.msra.mxu0 %v2456
        %3714 = vmatpush.bf16.msra.mxu0 %v2454
        %3715 = vmatpush.bf16.msra.mxu0 %v2452
        %3716 = vmatmul.bf16.gmra.mxu0 %v1036
        %v3717 = vpop.f32.mrf.mxu0
        %v3718 = vadd.f32 %v3705, %v3717
        %v3719 = vpop.f32.mrf.mxu0
        %3720 = vdwg.mxu0
        %3721 = vmatpush.bf16.msra.mxu0 %v2482
        %3722 = vmatpush.bf16.msra.mxu0 %v2480
        %3723 = vmatpush.bf16.msra.mxu0 %v2478
        %3724 = vmatpush.bf16.msra.mxu0 %v2476
        %3725 = vmatpush.bf16.msra.mxu0 %v2474
        %3726 = vmatpush.bf16.msra.mxu0 %v2472
        %3727 = vmatpush.bf16.msra.mxu0 %v2470
        %3728 = vmatpush.bf16.msra.mxu0 %v2468
        %3729 = vmatmul.bf16.gmra.mxu0 %v1037
        %v3730 = vpop.f32.mrf.mxu0
        %v3731 = vadd.f32 %v3718, %v3730
        %v3732 = vpop.f32.mrf.mxu0
        %3733 = vdwg.mxu0
        %3734 = vmatpush.bf16.msra.mxu0 %v2498
        %3735 = vmatpush.bf16.msra.mxu0 %v2496
        %3736 = vmatpush.bf16.msra.mxu0 %v2494
        %3737 = vmatpush.bf16.msra.mxu0 %v2492
        %3738 = vmatpush.bf16.msra.mxu0 %v2490
        %3739 = vmatpush.bf16.msra.mxu0 %v2488
        %3740 = vmatpush.bf16.msra.mxu0 %v2486
        %3741 = vmatpush.bf16.msra.mxu0 %v2484
        %3742 = vmatmul.bf16.gmra.mxu0 %v1038
        %v3743 = vpop.f32.mrf.mxu0
        %v3744 = vadd.f32 %v3731, %v3743
        %v3745 = vpop.f32.mrf.mxu0
        %3746 = vdwg.mxu0
        %3747 = vmatpush.bf16.msra.mxu0 %v2514
        %3748 = vmatpush.bf16.msra.mxu0 %v2512
        %3749 = vmatpush.bf16.msra.mxu0 %v2510
        %3750 = vmatpush.bf16.msra.mxu0 %v2508
        %3751 = vmatpush.bf16.msra.mxu0 %v2506
        %3752 = vmatpush.bf16.msra.mxu0 %v2504
        %3753 = vmatpush.bf16.msra.mxu0 %v2502
        %3754 = vmatpush.bf16.msra.mxu0 %v2500
        %3755 = vmatmul.bf16.gmra.mxu0 %v1039
        %v3756 = vpop.f32.mrf.mxu0
        %v3757 = vadd.f32 %v3744, %v3756
        %v3758 = vpop.f32.mrf.mxu0
        %3759 = vdwg.mxu0
        %3760 = vmatpush.bf16.msra.mxu0 %v2530
        %3761 = vmatpush.bf16.msra.mxu0 %v2528
        %3762 = vmatpush.bf16.msra.mxu0 %v2526
        %3763 = vmatpush.bf16.msra.mxu0 %v2524
        %3764 = vmatpush.bf16.msra.mxu0 %v2522
        %3765 = vmatpush.bf16.msra.mxu0 %v2520
        %3766 = vmatpush.bf16.msra.mxu0 %v2518
        %3767 = vmatpush.bf16.msra.mxu0 %v2516
        %3768 = vmatmul.bf16.gmra.mxu0 %v1040
        %v3769 = vpop.f32.mrf.mxu0
        %v3770 = vadd.f32 %v3757, %v3769
        %v3771 = vpop.f32.mrf.mxu0
        %3772 = vdwg.mxu0
        %3773 = vmatpush.bf16.msra.mxu0 %v2546
        %3774 = vmatpush.bf16.msra.mxu0 %v2544
        %3775 = vmatpush.bf16.msra.mxu0 %v2542
        %3776 = vmatpush.bf16.msra.mxu0 %v2540
        %3777 = vmatpush.bf16.msra.mxu0 %v2538
        %3778 = vmatpush.bf16.msra.mxu0 %v2536
        %3779 = vmatpush.bf16.msra.mxu0 %v2534
        %3780 = vmatpush.bf16.msra.mxu0 %v2532
        %3781 = vmatmul.bf16.gmra.mxu0 %v1041
        %v3782 = vpop.f32.mrf.mxu0
        %v3783 = vadd.f32 %v3770, %v3782
        %v3784 = vpop.f32.mrf.mxu0
        %3785 = vdwg.mxu0
        %3786 = vmatpush.bf16.msra.mxu0 %v2562
        %3787 = vmatpush.bf16.msra.mxu0 %v2560
        %3788 = vmatpush.bf16.msra.mxu0 %v2558
        %3789 = vmatpush.bf16.msra.mxu0 %v2556
        %3790 = vmatpush.bf16.msra.mxu0 %v2554
        %3791 = vmatpush.bf16.msra.mxu0 %v2552
        %3792 = vmatpush.bf16.msra.mxu0 %v2550
        %3793 = vmatpush.bf16.msra.mxu0 %v2548
        %3794 = vmatmul.bf16.gmra.mxu0 %v1042
        %v3795 = vpop.f32.mrf.mxu0
        %v3796 = vadd.f32 %v3783, %v3795
        %v3797 = vpop.f32.mrf.mxu0
        %3798 = vdwg.mxu0
        %3799 = vmatpush.bf16.msra.mxu0 %v2578
        %3800 = vmatpush.bf16.msra.mxu0 %v2576
        %3801 = vmatpush.bf16.msra.mxu0 %v2574
        %3802 = vmatpush.bf16.msra.mxu0 %v2572
        %3803 = vmatpush.bf16.msra.mxu0 %v2570
        %3804 = vmatpush.bf16.msra.mxu0 %v2568
        %3805 = vmatpush.bf16.msra.mxu0 %v2566
        %3806 = vmatpush.bf16.msra.mxu0 %v2564
        %3807 = vmatmul.bf16.gmra.mxu0 %v1043
        %v3808 = vpop.f32.mrf.mxu0
        %v3809 = vadd.f32 %v3796, %v3808
        %v3810 = vpop.f32.mrf.mxu0
        %3811 = vdwg.mxu0
        %3812 = vmatpush.bf16.msra.mxu0 %v2594
        %3813 = vmatpush.bf16.msra.mxu0 %v2592
        %3814 = vmatpush.bf16.msra.mxu0 %v2590
        %3815 = vmatpush.bf16.msra.mxu0 %v2588
        %3816 = vmatpush.bf16.msra.mxu0 %v2586
        %3817 = vmatpush.bf16.msra.mxu0 %v2584
        %3818 = vmatpush.bf16.msra.mxu0 %v2582
        %3819 = vmatpush.bf16.msra.mxu0 %v2580
        %3820 = vmatmul.bf16.gmra.mxu0 %v1044
        %v3821 = vpop.f32.mrf.mxu0
        %v3822 = vadd.f32 %v3809, %v3821
        %v3823 = vpop.f32.mrf.mxu0
        %3824 = vdwg.mxu0
        %3825 = vmatpush.bf16.msra.mxu0 %v2610
        %3826 = vmatpush.bf16.msra.mxu0 %v2608
        %3827 = vmatpush.bf16.msra.mxu0 %v2606
        %3828 = vmatpush.bf16.msra.mxu0 %v2604
        %3829 = vmatpush.bf16.msra.mxu0 %v2602
        %3830 = vmatpush.bf16.msra.mxu0 %v2600
        %3831 = vmatpush.bf16.msra.mxu0 %v2598
        %3832 = vmatpush.bf16.msra.mxu0 %v2596
        %3833 = vmatmul.bf16.gmra.mxu0 %v1045
        %v3834 = vpop.f32.mrf.mxu0
        %v3835 = vadd.f32 %v3822, %v3834
        %v3836 = vpop.f32.mrf.mxu0
        %3837 = vdwg.mxu0
        %3838 = vmatpush.bf16.msra.mxu0 %v2626
        %3839 = vmatpush.bf16.msra.mxu0 %v2624
        %3840 = vmatpush.bf16.msra.mxu0 %v2622
        %3841 = vmatpush.bf16.msra.mxu0 %v2620
        %3842 = vmatpush.bf16.msra.mxu0 %v2618
        %3843 = vmatpush.bf16.msra.mxu0 %v2616
        %3844 = vmatpush.bf16.msra.mxu0 %v2614
        %3845 = vmatpush.bf16.msra.mxu0 %v2612
        %3846 = vmatmul.bf16.gmra.mxu0 %v1046
        %v3847 = vpop.f32.mrf.mxu0
        %v3848 = vadd.f32 %v3835, %v3847
        %v3849 = vpop.f32.mrf.mxu0
        %3850 = vdwg.mxu0
        %3851 = vmatpush.bf16.msra.mxu0 %v2642
        %3852 = vmatpush.bf16.msra.mxu0 %v2640
        %3853 = vmatpush.bf16.msra.mxu0 %v2638
        %3854 = vmatpush.bf16.msra.mxu0 %v2636
        %3855 = vmatpush.bf16.msra.mxu0 %v2634
        %3856 = vmatpush.bf16.msra.mxu0 %v2632
        %3857 = vmatpush.bf16.msra.mxu0 %v2630
        %3858 = vmatpush.bf16.msra.mxu0 %v2628
        %3859 = vmatmul.bf16.gmra.mxu0 %v1047
        %v3860 = vpop.f32.mrf.mxu0
        %v3861 = vadd.f32 %v3848, %v3860
        %v3862 = vpop.f32.mrf.mxu0
        %3863 = vdwg.mxu0
        %3864 = vmatpush.bf16.msra.mxu0 %v2658
        %3865 = vmatpush.bf16.msra.mxu0 %v2656
        %3866 = vmatpush.bf16.msra.mxu0 %v2654
        %3867 = vmatpush.bf16.msra.mxu0 %v2652
        %3868 = vmatpush.bf16.msra.mxu0 %v2650
        %3869 = vmatpush.bf16.msra.mxu0 %v2648
        %3870 = vmatpush.bf16.msra.mxu0 %v2646
        %3871 = vmatpush.bf16.msra.mxu0 %v2644
        %3872 = vmatmul.bf16.gmra.mxu0 %v1048
        %v3873 = vpop.f32.mrf.mxu0
        %v3874 = vadd.f32 %v3861, %v3873
        %v3875 = vpop.f32.mrf.mxu0
        %3876 = vdwg.mxu0
        %3877 = vmatpush.bf16.msra.mxu0 %v2674
        %3878 = vmatpush.bf16.msra.mxu0 %v2672
        %3879 = vmatpush.bf16.msra.mxu0 %v2670
        %3880 = vmatpush.bf16.msra.mxu0 %v2668
        %3881 = vmatpush.bf16.msra.mxu0 %v2666
        %3882 = vmatpush.bf16.msra.mxu0 %v2664
        %3883 = vmatpush.bf16.msra.mxu0 %v2662
        %3884 = vmatpush.bf16.msra.mxu0 %v2660
        %3885 = vmatmul.bf16.gmra.mxu0 %v1049
        %v3886 = vpop.f32.mrf.mxu0
        %v3887 = vadd.f32 %v3874, %v3886
        %v3888 = vpop.f32.mrf.mxu0
        %3889 = vdwg.mxu0
        %3890 = vmatpush.bf16.msra.mxu0 %v2690
        %3891 = vmatpush.bf16.msra.mxu0 %v2688
        %3892 = vmatpush.bf16.msra.mxu0 %v2686
        %3893 = vmatpush.bf16.msra.mxu0 %v2684
        %3894 = vmatpush.bf16.msra.mxu0 %v2682
        %3895 = vmatpush.bf16.msra.mxu0 %v2680
        %3896 = vmatpush.bf16.msra.mxu0 %v2678
        %3897 = vmatpush.bf16.msra.mxu0 %v2676
        %3898 = vmatmul.bf16.gmra.mxu0 %v1050
        %v3899 = vpop.f32.mrf.mxu0
        %v3900 = vadd.f32 %v3887, %v3899
        %v3901 = vpop.f32.mrf.mxu0
        %3902 = vdwg.mxu0
        %3903 = vmatpush.bf16.msra.mxu0 %v2706
        %3904 = vmatpush.bf16.msra.mxu0 %v2704
        %3905 = vmatpush.bf16.msra.mxu0 %v2702
        %3906 = vmatpush.bf16.msra.mxu0 %v2700
        %3907 = vmatpush.bf16.msra.mxu0 %v2698
        %3908 = vmatpush.bf16.msra.mxu0 %v2696
        %3909 = vmatpush.bf16.msra.mxu0 %v2694
        %3910 = vmatpush.bf16.msra.mxu0 %v2692
        %3911 = vmatmul.bf16.gmra.mxu0 %v1051
        %v3912 = vpop.f32.mrf.mxu0
        %v3913 = vadd.f32 %v3900, %v3912
        %v3914 = vpop.f32.mrf.mxu0
        %3915 = vdwg.mxu0
        %3916 = vmatpush.bf16.msra.mxu0 %v2722
        %3917 = vmatpush.bf16.msra.mxu0 %v2720
        %3918 = vmatpush.bf16.msra.mxu0 %v2718
        %3919 = vmatpush.bf16.msra.mxu0 %v2716
        %3920 = vmatpush.bf16.msra.mxu0 %v2714
        %3921 = vmatpush.bf16.msra.mxu0 %v2712
        %3922 = vmatpush.bf16.msra.mxu0 %v2710
        %3923 = vmatpush.bf16.msra.mxu0 %v2708
        %3924 = vmatmul.bf16.gmra.mxu0 %v1052
        %v3925 = vpop.f32.mrf.mxu0
        %v3926 = vadd.f32 %v3913, %v3925
        %v3927 = vpop.f32.mrf.mxu0
        %3928 = vdwg.mxu0
        %3929 = vmatpush.bf16.msra.mxu0 %v2738
        %3930 = vmatpush.bf16.msra.mxu0 %v2736
        %3931 = vmatpush.bf16.msra.mxu0 %v2734
        %3932 = vmatpush.bf16.msra.mxu0 %v2732
        %3933 = vmatpush.bf16.msra.mxu0 %v2730
        %3934 = vmatpush.bf16.msra.mxu0 %v2728
        %3935 = vmatpush.bf16.msra.mxu0 %v2726
        %3936 = vmatpush.bf16.msra.mxu0 %v2724
        %3937 = vmatmul.bf16.gmra.mxu0 %v1053
        %v3938 = vpop.f32.mrf.mxu0
        %v3939 = vadd.f32 %v3926, %v3938
        %v3940 = vpop.f32.mrf.mxu0
        %3941 = vdwg.mxu0
        %3942 = vmatpush.bf16.msra.mxu0 %v2754
        %3943 = vmatpush.bf16.msra.mxu0 %v2752
        %3944 = vmatpush.bf16.msra.mxu0 %v2750
        %3945 = vmatpush.bf16.msra.mxu0 %v2748
        %3946 = vmatpush.bf16.msra.mxu0 %v2746
        %3947 = vmatpush.bf16.msra.mxu0 %v2744
        %3948 = vmatpush.bf16.msra.mxu0 %v2742
        %3949 = vmatpush.bf16.msra.mxu0 %v2740
        %3950 = vmatmul.bf16.gmra.mxu0 %v1054
        %v3951 = vpop.f32.mrf.mxu0
        %v3952 = vadd.f32 %v3939, %v3951
        %v3953 = vpop.f32.mrf.mxu0
        %3954 = vdwg.mxu0
        %3955 = vmatpush.bf16.msra.mxu0 %v2770
        %3956 = vmatpush.bf16.msra.mxu0 %v2768
        %3957 = vmatpush.bf16.msra.mxu0 %v2766
        %3958 = vmatpush.bf16.msra.mxu0 %v2764
        %3959 = vmatpush.bf16.msra.mxu0 %v2762
        %3960 = vmatpush.bf16.msra.mxu0 %v2760
        %3961 = vmatpush.bf16.msra.mxu0 %v2758
        %3962 = vmatpush.bf16.msra.mxu0 %v2756
        %3963 = vmatmul.bf16.gmra.mxu0 %v1055
        %v3964 = vpop.f32.mrf.mxu0
        %v3965 = vadd.f32 %v3952, %v3964
        %v3966 = vpop.f32.mrf.mxu0
        %3967 = vdwg.mxu0
        %3968 = vmatpush.bf16.msra.mxu0 %v2786
        %3969 = vmatpush.bf16.msra.mxu0 %v2784
        %3970 = vmatpush.bf16.msra.mxu0 %v2782
        %3971 = vmatpush.bf16.msra.mxu0 %v2780
        %3972 = vmatpush.bf16.msra.mxu0 %v2778
        %3973 = vmatpush.bf16.msra.mxu0 %v2776
        %3974 = vmatpush.bf16.msra.mxu0 %v2774
        %3975 = vmatpush.bf16.msra.mxu0 %v2772
        %3976 = vmatmul.bf16.gmra.mxu0 %v1056
        %v3977 = vpop.f32.mrf.mxu0
        %v3978 = vadd.f32 %v3965, %v3977
        %v3979 = vpop.f32.mrf.mxu0
        %3980 = vdwg.mxu0
        %3981 = vmatpush.bf16.msra.mxu0 %v2802
        %3982 = vmatpush.bf16.msra.mxu0 %v2800
        %3983 = vmatpush.bf16.msra.mxu0 %v2798
        %3984 = vmatpush.bf16.msra.mxu0 %v2796
        %3985 = vmatpush.bf16.msra.mxu0 %v2794
        %3986 = vmatpush.bf16.msra.mxu0 %v2792
        %3987 = vmatpush.bf16.msra.mxu0 %v2790
        %3988 = vmatpush.bf16.msra.mxu0 %v2788
        %3989 = vmatmul.bf16.gmra.mxu0 %v1057
        %v3990 = vpop.f32.mrf.mxu0
        %v3991 = vadd.f32 %v3978, %v3990
        %v3992 = vpop.f32.mrf.mxu0
        %3993 = vdwg.mxu0
        %3994 = vmatpush.bf16.msra.mxu0 %v2818
        %3995 = vmatpush.bf16.msra.mxu0 %v2816
        %3996 = vmatpush.bf16.msra.mxu0 %v2814
        %3997 = vmatpush.bf16.msra.mxu0 %v2812
        %3998 = vmatpush.bf16.msra.mxu0 %v2810
        %3999 = vmatpush.bf16.msra.mxu0 %v2808
        %4000 = vmatpush.bf16.msra.mxu0 %v2806
        %4001 = vmatpush.bf16.msra.mxu0 %v2804
        %4002 = vmatmul.bf16.gmra.mxu0 %v1058
        %v4003 = vpop.f32.mrf.mxu0
        %v4004 = vadd.f32 %v3991, %v4003
        %v4005 = vpop.f32.mrf.mxu0
        %4006 = vdwg.mxu0
        %4007 = vmatpush.bf16.msra.mxu0 %v2834
        %4008 = vmatpush.bf16.msra.mxu0 %v2832
        %4009 = vmatpush.bf16.msra.mxu0 %v2830
        %4010 = vmatpush.bf16.msra.mxu0 %v2828
        %4011 = vmatpush.bf16.msra.mxu0 %v2826
        %4012 = vmatpush.bf16.msra.mxu0 %v2824
        %4013 = vmatpush.bf16.msra.mxu0 %v2822
        %4014 = vmatpush.bf16.msra.mxu0 %v2820
        %4015 = vmatmul.bf16.gmra.mxu0 %v1059
        %v4016 = vpop.f32.mrf.mxu0
        %v4017 = vadd.f32 %v4004, %v4016
        %v4018 = vpop.f32.mrf.mxu0
        %4019 = vdwg.mxu0
        %4020 = vmatpush.bf16.msra.mxu0 %v2850
        %4021 = vmatpush.bf16.msra.mxu0 %v2848
        %4022 = vmatpush.bf16.msra.mxu0 %v2846
        %4023 = vmatpush.bf16.msra.mxu0 %v2844
        %4024 = vmatpush.bf16.msra.mxu0 %v2842
        %4025 = vmatpush.bf16.msra.mxu0 %v2840
        %4026 = vmatpush.bf16.msra.mxu0 %v2838
        %4027 = vmatpush.bf16.msra.mxu0 %v2836
        %4028 = vmatmul.bf16.gmra.mxu0 %v1060
        %v4029 = vpop.f32.mrf.mxu0
        %v4030 = vadd.f32 %v4017, %v4029
        %v4031 = vpop.f32.mrf.mxu0
        %4032 = vdwg.mxu0
        %4033 = vmatpush.bf16.msra.mxu0 %v2866
        %4034 = vmatpush.bf16.msra.mxu0 %v2864
        %4035 = vmatpush.bf16.msra.mxu0 %v2862
        %4036 = vmatpush.bf16.msra.mxu0 %v2860
        %4037 = vmatpush.bf16.msra.mxu0 %v2858
        %4038 = vmatpush.bf16.msra.mxu0 %v2856
        %4039 = vmatpush.bf16.msra.mxu0 %v2854
        %4040 = vmatpush.bf16.msra.mxu0 %v2852
        %4041 = vmatmul.bf16.gmra.mxu0 %v1061
        %v4042 = vpop.f32.mrf.mxu0
        %v4043 = vadd.f32 %v4030, %v4042
        %v4044 = vpop.f32.mrf.mxu0
        %4045 = vdwg.mxu0
        %4046 = vmatpush.bf16.msra.mxu0 %v2882
        %4047 = vmatpush.bf16.msra.mxu0 %v2880
        %4048 = vmatpush.bf16.msra.mxu0 %v2878
        %4049 = vmatpush.bf16.msra.mxu0 %v2876
        %4050 = vmatpush.bf16.msra.mxu0 %v2874
        %4051 = vmatpush.bf16.msra.mxu0 %v2872
        %4052 = vmatpush.bf16.msra.mxu0 %v2870
        %4053 = vmatpush.bf16.msra.mxu0 %v2868
        %4054 = vmatmul.bf16.gmra.mxu0 %v1062
        %v4055 = vpop.f32.mrf.mxu0
        %v4056 = vadd.f32 %v4043, %v4055
        %v4057 = vpop.f32.mrf.mxu0
        %4058 = vdwg.mxu0
        %v4059 = vsub.f32 0.0, %v3692
        %v4060 = vsub.f32 0.0, %v4056
        %v4061 = vmul.f32 %v4059, 1.442695
        %v4062 = vpow.pop %v4061
        %v4063 = vmul.f32 %v4060, 1.442695
        %v4064 = vpow.pop %v4063
        %v4065 = vadd.f32 %v4062, 1.0
        %v4066 = vadd.f32 %v4064, 1.0
        %v4067 = vrcp.pop %v4065
        %v4068 = vrcp.pop %v4066
        %s4069 = sshra.s32 %s234, 7
        %s4070 = sand.u32 %s234, 127
        %s4071 = smul.addr %s4069, 8
        %s4072 = scalar_lea.vmem %s202, %s4071 [#allocation5]
        %v4073 = vld [vmem:[%s4072] sm:$0xff]
        %v4074 = vld [vmem:[%s4072 + $0x8] sm:$0xff]
        %v4075 = vld [vmem:[%s4072 + $0x10] sm:$0xff]
        %v4076 = vld [vmem:[%s4072 + $0x18] sm:$0xff]
        %v4077 = vld [vmem:[%s4072 + $0x20] sm:$0xff]
        %v4078 = vld [vmem:[%s4072 + $0x28] sm:$0xff]
        %v4079 = vld [vmem:[%s4072 + $0x30] sm:$0xff]
        %v4080 = vld [vmem:[%s4072 + $0x38] sm:$0xff]
        %v4081 = vmul.f32 %v4073, %v4067
        %v4082 = vmul.f32 %v4074, %v4068
        %v4083 = vmul.f32 %v4075, %v4067
        %v4084 = vmul.f32 %v4076, %v4068
        %v4085 = vmul.f32 %v4077, %v4067
        %v4086 = vmul.f32 %v4078, %v4068
        %v4087 = vmul.f32 %v4079, %v4067
        %v4088 = vmul.f32 %v4080, %v4068
        %4089 = vst [vmem:[%s230] sm:$0xff] %v4081
        %4090 = vst [vmem:[%s230 + $0x8] sm:$0xff] %v4082
        %4091 = vst [vmem:[%s230 + $0x10] sm:$0xff] %v4083
        %4092 = vst [vmem:[%s230 + $0x18] sm:$0xff] %v4084
        %4093 = vst [vmem:[%s230 + $0x20] sm:$0xff] %v4085
        %4094 = vst [vmem:[%s230 + $0x28] sm:$0xff] %v4086
        %4095 = vst [vmem:[%s230 + $0x30] sm:$0xff] %v4087
        %4096 = vst [vmem:[%s230 + $0x38] sm:$0xff] %v4088
        %s4097 = sand.u32 %s117, 1
        %s4098 = scalar_lea.sflag [#allocation7], %s4097
        %s4099 = sand.u32 %s117, 1
        %s4100 = smul.addr %s4099, 64
        %s4101 = scalar_lea.vmem [#allocation10], %s4100
        // Predicated region
        $region45: #{tpu_custom_call.1} parent=31 // pred_check
          %p4102 = pneg %p127
        $region46: #{tpu_custom_call.1} parent=31 // pred_check_branch
          %4104 = sbr.rel (%p4102) target = $region48
        $region47: #{tpu_custom_call.1} parent=31 // pred_region
          %s4105 = smul.u32 2, %s27
          %4107 = vsyncadd %s4098, 0
          %s4108 = smul.addr %s26, 8
          %s4109 = sadd.s32 %s4105, %s4108
          %s4110 = smul.addr %s4109, 8
          %s4111 = scalar_lea.hbm %s3, %s4110
          %s4112 = sshll.u32 %s4101, 4
          %s4113 = int_to_ptr.vmem [resolvable:$true] %s4112
          %s4114 = sshll.u32 %s4111, 4
          %s4115 = int_to_ptr.hbm [resolvable:$true] %s4114
          %4120 = dma.vmem_to_hbm [thread:$0]  %s4113, 1024, %s4115, %s4098, 256, 256, 16
        $region48: #{tpu_custom_call.1} parent=31 // pred_fallthru
          _
      $region32: #{tpu_custom_call.1} parent=5 // pred_fallthru
        _
      %p4121 = scmp.le.s32.totalorder 2, %s17
      // Predicated region
      $region49: #{tpu_custom_call.1} parent=5 // pred_check
        %p4122 = pneg %p4121
      $region50: #{tpu_custom_call.1} parent=5 // pred_check_branch
        %4124 = sbr.rel (%p4122) target = $region52
      $region51: #{tpu_custom_call.1} parent=5 // pred_region
        %s4125 = ssub.s32 %s17, 2
        // Predicated region
        $region53: #{tpu_custom_call.1} parent=51 // pred_check
          %p4126 = pneg %p133
        $region54: #{tpu_custom_call.1} parent=51 // pred_check_branch
          %4128 = sbr.rel (%p4126) target = $region56
        $region55: #{tpu_custom_call.1} parent=51 // pred_region
          %s4129 = sand.u32 %s118, 1
          %s4130 = scalar_lea.sflag [#allocation7], %s4129
          %s4131 = sand.u32 %s118, 1
          %s4132 = smul.addr %s4131, 64
          %s4133 = scalar_lea.vmem [#allocation10], %s4132
          %4135 = dma.done %s4130, 1024
        $region56: #{tpu_custom_call.1} parent=51 // pred_fallthru
          _
      $region52: #{tpu_custom_call.1} parent=5 // pred_fallthru
        _
    $region6: #{tpu_custom_call.1} parent=1 // loop_footer
      %s21 = sadd.s32 1, %s17
    $region7: #{tpu_custom_call.1} parent=1 // loop_footer_branch
      %16 = sbr.rel target = $region3
    $region8: #{tpu_custom_call.1} parent=1 // loop_exit
      _
    %4136 = vsyncpa [#allocation6], 1
    %s4137 = scalar_lea.sflag [#allocation6], 1
    %4138 = vsyncpa %s4137, 1
    %4139 = vsyncpa [#allocation9], 1
    %4140 = vsyncpa [#allocation7], 1
    %s4141 = scalar_lea.sflag [#allocation7], 1
    %4142 = vsyncpa %s4141, 1

</llo_original>
